<compile_context>
chip_gen: v6e
topology: v6e:2x2x1
jax: 0.10.0
libtpu: 0.0.40
codegen_flags: <defaults>
</compile_context>

<pallas_src>
import jax
import jax.numpy as jnp
import numpy as np
from jax.experimental import pallas as pl
from jax.experimental.pallas import tpu as pltpu


def _rnd(v, m):
    return (v + m - 1) // m * m


def _vmem_capacity_bytes():
    """Best-effort VMEM capacity query; conservative (v7x) fallback."""
    try:
        return int(pltpu.get_tpu_info().vmem_capacity_bytes)
    except Exception:
        return 64 * 1024 * 1024


def _num_tensorcores():
    """Best-effort TensorCores-per-chip query; fallback 1 (v5e/v6e)."""
    try:
        info = pltpu.get_tpu_info()
        for name in ("num_cores", "cores_per_chip", "num_tensorcores"):
            v = getattr(info, name, None)
            if v:
                return max(1, int(v))
    except Exception:
        pass
    try:
        return max(1, int(getattr(jax.devices()[0], "num_cores", 1)))
    except Exception:
        return 1


def encoder_lstm_kernel(gx_ref,    # (Bb, Tm1, 4*Hp) f32: w_in @ W_ih^T + b (gate-padded)
                        whh_ref,   # (Hp, 4*Hp)      W_hh^T, rows + gate cols padded
                        oe_ref):   # (Bb, Tm1, H)    out: input_encoded
    Bb, Tm1, _ = gx_ref.shape
    Hp = whh_ref.shape[0]
    H = oe_ref.shape[2]
    mm_dtype = whh_ref.dtype

    # init_hidden(): zero hidden/cell state (loop-carried values, stay in vregs)
    h0 = jnp.zeros((Bb, Hp), jnp.float32)
    c0 = jnp.zeros((Bb, Hp), jnp.float32)

    def step(t, carry):
        h, c = carry
        gx_t = gx_ref[:, pl.ds(t, 1), :][:, 0, :]                     # (Bb, 4Hp)
        # Single recurrent matmul per step (input contribution precomputed).
        gates = gx_t + jnp.dot(h.astype(mm_dtype), whh_ref[...],
                               preferred_element_type=jnp.float32)    # (Bb, 4Hp)
        # PyTorch gate order i, f, g, o — 128-lane-aligned slices.
        i_g = jax.nn.sigmoid(gates[:, 0 * Hp:1 * Hp])
        f_g = jax.nn.sigmoid(gates[:, 1 * Hp:2 * Hp])
        g_g = jnp.tanh(gates[:, 2 * Hp:3 * Hp])
        o_g = jax.nn.sigmoid(gates[:, 3 * Hp:4 * Hp])
        c_new = f_g * c + i_g * g_g
        h_new = o_g * jnp.tanh(c_new)
        oe_ref[:, pl.ds(t, 1), :] = h_new[:, :H][:, None, :]
        return h_new, c_new

    jax.lax.fori_loop(0, Tm1, step, (h0, c0), unroll=(Tm1 <= 32))


def encoder_forward(input_data, params, hidden_size, *,
                    matmul_dtype=jnp.float32, batch_block=None):
    """input_data: (batch, T-1, input_size) f32; returns (input_weighted, input_encoded)."""
    B, Tm1, I = input_data.shape
    H = hidden_size
    Hp = _rnd(H, 128)                      # pad each gate to a full 128-lane tile

    x = input_data.astype(jnp.float32)

    # ---- LSTM weight prep (gate columns padded to 128-lane tiles) -----------
    wih_t = params["w_ih"].T.astype(jnp.float32)                  # (I, 4H)
    whh_t = params["w_hh"].T.astype(jnp.float32)                  # (H, 4H)
    bias = (params["b_ih"] + params["b_hh"]).astype(jnp.float32)  # (4H,)

    def pad_gate_cols(w):                                         # (K, 4H) -> (K, 4Hp)
        return jnp.concatenate(
            [jnp.pad(w[:, k * H:(k + 1) * H], ((0, 0), (0, Hp - H))) for k in range(4)],
            axis=1)

    wih_p = pad_gate_cols(wih_t)                                                  # (I, 4Hp)
    whh_p = jnp.pad(pad_gate_cols(whh_t), ((0, Hp - H), (0, 0))).astype(matmul_dtype)  # (Hp, 4Hp)
    bias_p = jnp.pad(bias.reshape(4, H), ((0, 0), (0, Hp - H))).reshape(1, 1, 4 * Hp)

    # ---- input attention: state- and time-independent -> fully hoisted ------
    # score_i = wa_h·h + wa_c·c + wa_x·x[:, :, i] + ba.  The h/c/ba terms are
    # constant across the input_size axis, so they cancel under softmax.
    wa = params["attn_w"].astype(jnp.float32)                     # (1, 2H + Tm1)
    wa_x = wa[0, 2 * H:]                                          # (Tm1,)
    attn = jax.nn.softmax(jnp.einsum('btf,t->bf', x, wa_x), axis=1)   # (B, I), exact
    input_weighted = attn[:, None, :] * x                         # (B, Tm1, I)

    # ---- precompute input gate contributions for all t (bulk parallel matmul)
    gx = (jnp.einsum('bti,ig->btg', input_weighted, wih_p) + bias_p).astype(jnp.float32)

    # ---- batch tiling: tile-rounded VMEM accounting, TensorCore-aware -------
    wdt = jnp.dtype(matmul_dtype).itemsize

    def tile_bytes(bb):
        gx_b = bb * _rnd(Tm1, 8) * _rnd(4 * Hp, 128) * 4
        oe_b = bb * _rnd(Tm1, 8) * _rnd(H, 128) * 4
        whh_b = _rnd(Hp, 8) * _rnd(4 * Hp, 128) * wdt
        return 2 * (gx_b + oe_b + whh_b)          # double-buffered BlockSpecs

    vmem_cap = _vmem_capacity_bytes()
    if batch_block is None:
        batch_block = B
        ncores = _num_tensorcores()
        if ncores >= 2 and B % ncores == 0 and (B // ncores) % 8 == 0:
            batch_block = B // ncores             # shard "parallel" axis across TCs (v7x)
        budget = vmem_cap // 4
        while (tile_bytes(batch_block) > budget and batch_block % 16 == 0
               and B % (batch_block // 2) == 0):
            batch_block //= 2
    assert B % batch_block == 0
    assert batch_block == B or batch_block % 8 == 0
    nb = B // batch_block

    vmem_limit = int(min(vmem_cap // 2,
                         max(8 * 1024 * 1024, 2 * tile_bytes(batch_block))))

    cost = pl.CostEstimate(
        flops=int(B * Tm1 * (2 * Hp * 4 * Hp + 12 * Hp)),
        transcendentals=int(B * Tm1 * 5 * Hp),
        bytes_accessed=int(4 * (B * Tm1 * 4 * Hp + B * Tm1 * H) + wdt * Hp * 4 * Hp),
    )

    oe = pl.pallas_call(
        encoder_lstm_kernel,
        out_shape=jax.ShapeDtypeStruct((B, Tm1, H), jnp.float32),
        grid=(nb,),
        in_specs=[
            pl.BlockSpec((batch_block, Tm1, 4 * Hp), lambda b: (b, 0, 0)),  # gx
            pl.BlockSpec((Hp, 4 * Hp), lambda b: (0, 0)),                   # W_hh^T
        ],
        out_specs=pl.BlockSpec((batch_block, Tm1, H), lambda b: (b, 0, 0)),
        compiler_params=pltpu.CompilerParams(
            dimension_semantics=("parallel",),
            vmem_limit_bytes=vmem_limit),
        cost_estimate=cost,
    )(gx, whh_p)

    return input_weighted, oe


def encoder_reference(input_data, params, hidden_size):
    """Pure-JAX mirror of the PyTorch forward pass (for verification)."""
    B, Tm1, I = input_data.shape
    H = hidden_size
    wih, whh = params["w_ih"], params["w_hh"]
    bih, bhh = params["b_ih"], params["b_hh"]
    wa, ba = params["attn_w"], params["attn_b"]

    h = jnp.zeros((B, H), jnp.float32)
    c = jnp.zeros((B, H), jnp.float32)
    ow, oe = [], []
    x_perm = jnp.transpose(input_data, (0, 2, 1))                 # (B, I, Tm1)
    for t in range(Tm1):
        cat = jnp.concatenate([
            jnp.broadcast_to(h[:, None, :], (B, I, H)),
            jnp.broadcast_to(c[:, None, :], (B, I, H)),
            x_perm], axis=2)                                      # (B, I, 2H+Tm1)
        score = cat.reshape(-1, 2 * H + Tm1) @ wa.T + ba          # (B*I, 1)
        attn = jax.nn.softmax(score.reshape(B, I), axis=1)
        w_in = attn * input_data[:, t, :]
        gates = w_in @ wih.T + bih + h @ whh.T + bhh
        i_g = jax.nn.sigmoid(gates[:, :H])
        f_g = jax.nn.sigmoid(gates[:, H:2 * H])
        g_g = jnp.tanh(gates[:, 2 * H:3 * H])
        o_g = jax.nn.sigmoid(gates[:, 3 * H:])
        c = f_g * c + i_g * g_g
        h = o_g * jnp.tanh(c)
        ow.append(w_in)
        oe.append(h)
    return jnp.stack(ow, axis=1), jnp.stack(oe, axis=1)


if __name__ == "__main__":
    key = jax.random.PRNGKey(0)
    B, I, H, T = 4, 8, 16, 9          # batch, input_size, hidden_size, T
    Tm1 = T - 1
    ks = jax.random.split(key, 7)

    params = {
        "w_ih":   0.1 * jax.random.normal(ks[0], (4 * H, I), jnp.float32),
        "w_hh":   0.1 * jax.random.normal(ks[1], (4 * H, H), jnp.float32),
        "b_ih":   0.1 * jax.random.normal(ks[2], (4 * H,), jnp.float32),
        "b_hh":   0.1 * jax.random.normal(ks[3], (4 * H,), jnp.float32),
        "attn_w": 0.1 * jax.random.normal(ks[4], (1, 2 * H + Tm1), jnp.float32),
        "attn_b": 0.1 * jax.random.normal(ks[5], (1,), jnp.float32),
    }
    input_data = jax.random.normal(ks[6], (B, Tm1, I), jnp.float32)

    ow_ref, oe_ref = encoder_reference(input_data, params, H)

    # f32 path (exact attention / gate math)
    ow, oe = encoder_forward(input_data, params, H)
    jax.block_until_ready((ow, oe))
    np.testing.assert_allclose(np.asarray(ow), np.asarray(ow_ref), rtol=2e-3, atol=2e-3)
    np.testing.assert_allclose(np.asarray(oe), np.asarray(oe_ref), rtol=2e-3, atol=2e-3)

    # bf16 recurrent-matmul weights (production dtype on v6e/v7x); gate math stays f32
    ow_b, oe_b = encoder_forward(input_data, params, H, matmul_dtype=jnp.bfloat16)
    jax.block_until_ready((ow_b, oe_b))
    np.testing.assert_allclose(np.asarray(ow_b), np.asarray(ow_ref), rtol=2e-2, atol=2e-2)
    np.testing.assert_allclose(np.asarray(oe_b), np.asarray(oe_ref), rtol=2e-2, atol=2e-2)

    # multi-tile batch grid (nb = 2) exercising the "parallel" batch axis
    B2 = 16
    x2 = jax.random.normal(jax.random.PRNGKey(1), (B2, Tm1, I), jnp.float32)
    ow2_ref, oe2_ref = encoder_reference(x2, params, H)
    ow2, oe2 = encoder_forward(x2, params, H, batch_block=8)
    jax.block_until_ready((ow2, oe2))
    np.testing.assert_allclose(np.asarray(ow2), np.asarray(ow2_ref), rtol=2e-3, atol=2e-3)
    np.testing.assert_allclose(np.asarray(oe2), np.asarray(oe2_ref), rtol=2e-3, atol=2e-3)

    print("KERNEL_OK")
</pallas_src>

<mosaic_0001>
module attributes {stable_mosaic.version = 11 : i64} {
  func.func @encoder_lstm_kernel(%arg0: i32, %arg1: memref<4x8x512xf32, #tpu.memory_space<vmem>>, %arg2: memref<128x512xf32, #tpu.memory_space<vmem>>, %arg3: memref<4x8x16xf32, #tpu.memory_space<vmem>>) attributes {dimension_semantics = [#tpu.dimension_semantics<parallel>], iteration_bounds = array<i64: 1>, scalar_prefetch = 0 : i64, scratch_operands = 0 : i64, tpu.core_type = #tpu.core_type<tc>, window_params = [{transform_indices = @transform_0, window_bounds = array<i64: 4, 8, 512>}, {pipeline_mode = #tpu.pipeline_mode<synchronous>, transform_indices = @transform_1, window_bounds = array<i64: 128, 512>}, {transform_indices = @transform_2, window_bounds = array<i64: 4, 8, 16>}]} {
    %cst = arith.constant 0.000000e+00 : f32
    %0 = vector.broadcast %cst : f32 to vector<4x128xf32>
    %cst_0 = arith.constant 0.000000e+00 : f32
    %1 = vector.broadcast %cst_0 : f32 to vector<4x128xf32>
    %c0_i32 = arith.constant 0 : i32
    %c0 = arith.constant 0 : index
    %2 = arith.index_cast %c0_i32 : i32 to index
    %c0_1 = arith.constant 0 : index
    %3 = vector.load %arg1[%c0, %2, %c0_1] : memref<4x8x512xf32, #tpu.memory_space<vmem>>, vector<4x1x512xf32>
    %4 = vector.shape_cast %3 : vector<4x1x512xf32> to vector<4x512xf32>
    %c0_2 = arith.constant 0 : index
    %c0_3 = arith.constant 0 : index
    %5 = vector.load %arg2[%c0_2, %c0_3] : memref<128x512xf32, #tpu.memory_space<vmem>>, vector<128x512xf32>
    %cst_4 = arith.constant dense<0.000000e+00> : vector<4x512xf32>
    %6 = tpu.matmul %0, %5, %cst_4 {dimension_numbers = #tpu.dot_dimension_numbers<[1], [0], [0], [1], [0, 0, 1, 1], [], []>} : vector<4x128xf32>, vector<128x512xf32>, vector<4x512xf32> -> vector<4x512xf32>
    %7 = arith.addf %4, %6 : vector<4x512xf32>
    %8 = vector.extract_strided_slice %7 {offsets = [0, 0], sizes = [4, 128], strides = [1, 1]} : vector<4x512xf32> to vector<4x128xf32>
    %9 = arith.negf %8 : vector<4x128xf32>
    %10 = math.exp %9 : vector<4x128xf32>
    %cst_5 = arith.constant 1.000000e+00 : f32
    %11 = vector.broadcast %cst_5 : f32 to vector<4x128xf32>
    %12 = arith.addf %11, %10 : vector<4x128xf32>
    %13 = arith.divf %11, %12 : vector<4x128xf32>
    %14 = vector.extract_strided_slice %7 {offsets = [0, 128], sizes = [4, 128], strides = [1, 1]} : vector<4x512xf32> to vector<4x128xf32>
    %15 = arith.negf %14 : vector<4x128xf32>
    %16 = math.exp %15 : vector<4x128xf32>
    %cst_6 = arith.constant 1.000000e+00 : f32
    %17 = vector.broadcast %cst_6 : f32 to vector<4x128xf32>
    %18 = arith.addf %17, %16 : vector<4x128xf32>
    %19 = arith.divf %17, %18 : vector<4x128xf32>
    %20 = vector.extract_strided_slice %7 {offsets = [0, 256], sizes = [4, 128], strides = [1, 1]} : vector<4x512xf32> to vector<4x128xf32>
    %21 = math.tanh %20 : vector<4x128xf32>
    %22 = vector.extract_strided_slice %7 {offsets = [0, 384], sizes = [4, 128], strides = [1, 1]} : vector<4x512xf32> to vector<4x128xf32>
    %23 = arith.negf %22 : vector<4x128xf32>
    %24 = math.exp %23 : vector<4x128xf32>
    %cst_7 = arith.constant 1.000000e+00 : f32
    %25 = vector.broadcast %cst_7 : f32 to vector<4x128xf32>
    %26 = arith.addf %25, %24 : vector<4x128xf32>
    %27 = arith.divf %25, %26 : vector<4x128xf32>
    %28 = arith.mulf %19, %1 : vector<4x128xf32>
    %29 = arith.mulf %13, %21 : vector<4x128xf32>
    %30 = arith.addf %28, %29 : vector<4x128xf32>
    %31 = math.tanh %30 : vector<4x128xf32>
    %32 = arith.mulf %27, %31 : vector<4x128xf32>
    %33 = vector.extract_strided_slice %32 {offsets = [0, 0], sizes = [4, 16], strides = [1, 1]} : vector<4x128xf32> to vector<4x16xf32>
    %34 = vector.shape_cast %33 : vector<4x16xf32> to vector<4x1x16xf32>
    %c0_8 = arith.constant 0 : index
    %35 = arith.index_cast %c0_i32 : i32 to index
    %c0_9 = arith.constant 0 : index
    %36 = vector.load %arg3[%c0_8, %35, %c0_9] : memref<4x8x16xf32, #tpu.memory_space<vmem>>, vector<4x1x16xf32>
    tpu.vector_store %arg3[%c0_8, %35, %c0_9], %34 {strides = array<i32>} : memref<4x8x16xf32, #tpu.memory_space<vmem>>, vector<4x1x16xf32>,
    %c1_i32 = arith.constant 1 : i32
    %c0_10 = arith.constant 0 : index
    %37 = arith.index_cast %c1_i32 : i32 to index
    %c0_11 = arith.constant 0 : index
    %38 = vector.load %arg1[%c0_10, %37, %c0_11] : memref<4x8x512xf32, #tpu.memory_space<vmem>>, vector<4x1x512xf32>
    %39 = vector.shape_cast %38 : vector<4x1x512xf32> to vector<4x512xf32>
    %c0_12 = arith.constant 0 : index
    %c0_13 = arith.constant 0 : index
    %40 = vector.load %arg2[%c0_12, %c0_13] : memref<128x512xf32, #tpu.memory_space<vmem>>, vector<128x512xf32>
    %cst_14 = arith.constant dense<0.000000e+00> : vector<4x512xf32>
    %41 = tpu.matmul %32, %40, %cst_14 {dimension_numbers = #tpu.dot_dimension_numbers<[1], [0], [0], [1], [0, 0, 1, 1], [], []>} : vector<4x128xf32>, vector<128x512xf32>, vector<4x512xf32> -> vector<4x512xf32>
    %42 = arith.addf %39, %41 : vector<4x512xf32>
    %43 = vector.extract_strided_slice %42 {offsets = [0, 0], sizes = [4, 128], strides = [1, 1]} : vector<4x512xf32> to vector<4x128xf32>
    %44 = arith.negf %43 : vector<4x128xf32>
    %45 = math.exp %44 : vector<4x128xf32>
    %cst_15 = arith.constant 1.000000e+00 : f32
    %46 = vector.broadcast %cst_15 : f32 to vector<4x128xf32>
    %47 = arith.addf %46, %45 : vector<4x128xf32>
    %48 = arith.divf %46, %47 : vector<4x128xf32>
    %49 = vector.extract_strided_slice %42 {offsets = [0, 128], sizes = [4, 128], strides = [1, 1]} : vector<4x512xf32> to vector<4x128xf32>
    %50 = arith.negf %49 : vector<4x128xf32>
    %51 = math.exp %50 : vector<4x128xf32>
    %cst_16 = arith.constant 1.000000e+00 : f32
    %52 = vector.broadcast %cst_16 : f32 to vector<4x128xf32>
    %53 = arith.addf %52, %51 : vector<4x128xf32>
    %54 = arith.divf %52, %53 : vector<4x128xf32>
    %55 = vector.extract_strided_slice %42 {offsets = [0, 256], sizes = [4, 128], strides = [1, 1]} : vector<4x512xf32> to vector<4x128xf32>
    %56 = math.tanh %55 : vector<4x128xf32>
    %57 = vector.extract_strided_slice %42 {offsets = [0, 384], sizes = [4, 128], strides = [1, 1]} : vector<4x512xf32> to vector<4x128xf32>
    %58 = arith.negf %57 : vector<4x128xf32>
    %59 = math.exp %58 : vector<4x128xf32>
    %cst_17 = arith.constant 1.000000e+00 : f32
    %60 = vector.broadcast %cst_17 : f32 to vector<4x128xf32>
    %61 = arith.addf %60, %59 : vector<4x128xf32>
    %62 = arith.divf %60, %61 : vector<4x128xf32>
    %63 = arith.mulf %54, %30 : vector<4x128xf32>
    %64 = arith.mulf %48, %56 : vector<4x128xf32>
    %65 = arith.addf %63, %64 : vector<4x128xf32>
    %66 = math.tanh %65 : vector<4x128xf32>
    %67 = arith.mulf %62, %66 : vector<4x128xf32>
    %68 = vector.extract_strided_slice %67 {offsets = [0, 0], sizes = [4, 16], strides = [1, 1]} : vector<4x128xf32> to vector<4x16xf32>
    %69 = vector.shape_cast %68 : vector<4x16xf32> to vector<4x1x16xf32>
    %c0_18 = arith.constant 0 : index
    %70 = arith.index_cast %c1_i32 : i32 to index
    %c0_19 = arith.constant 0 : index
    %71 = vector.load %arg3[%c0_18, %70, %c0_19] : memref<4x8x16xf32, #tpu.memory_space<vmem>>, vector<4x1x16xf32>
    tpu.vector_store %arg3[%c0_18, %70, %c0_19], %69 {strides = array<i32>} : memref<4x8x16xf32, #tpu.memory_space<vmem>>, vector<4x1x16xf32>,
    %c2_i32 = arith.constant 2 : i32
    %c0_20 = arith.constant 0 : index
    %72 = arith.index_cast %c2_i32 : i32 to index
    %c0_21 = arith.constant 0 : index
    %73 = vector.load %arg1[%c0_20, %72, %c0_21] : memref<4x8x512xf32, #tpu.memory_space<vmem>>, vector<4x1x512xf32>
    %74 = vector.shape_cast %73 : vector<4x1x512xf32> to vector<4x512xf32>
    %c0_22 = arith.constant 0 : index
    %c0_23 = arith.constant 0 : index
    %75 = vector.load %arg2[%c0_22, %c0_23] : memref<128x512xf32, #tpu.memory_space<vmem>>, vector<128x512xf32>
    %cst_24 = arith.constant dense<0.000000e+00> : vector<4x512xf32>
    %76 = tpu.matmul %67, %75, %cst_24 {dimension_numbers = #tpu.dot_dimension_numbers<[1], [0], [0], [1], [0, 0, 1, 1], [], []>} : vector<4x128xf32>, vector<128x512xf32>, vector<4x512xf32> -> vector<4x512xf32>
    %77 = arith.addf %74, %76 : vector<4x512xf32>
    %78 = vector.extract_strided_slice %77 {offsets = [0, 0], sizes = [4, 128], strides = [1, 1]} : vector<4x512xf32> to vector<4x128xf32>
    %79 = arith.negf %78 : vector<4x128xf32>
    %80 = math.exp %79 : vector<4x128xf32>
    %cst_25 = arith.constant 1.000000e+00 : f32
    %81 = vector.broadcast %cst_25 : f32 to vector<4x128xf32>
    %82 = arith.addf %81, %80 : vector<4x128xf32>
    %83 = arith.divf %81, %82 : vector<4x128xf32>
    %84 = vector.extract_strided_slice %77 {offsets = [0, 128], sizes = [4, 128], strides = [1, 1]} : vector<4x512xf32> to vector<4x128xf32>
    %85 = arith.negf %84 : vector<4x128xf32>
    %86 = math.exp %85 : vector<4x128xf32>
    %cst_26 = arith.constant 1.000000e+00 : f32
    %87 = vector.broadcast %cst_26 : f32 to vector<4x128xf32>
    %88 = arith.addf %87, %86 : vector<4x128xf32>
    %89 = arith.divf %87, %88 : vector<4x128xf32>
    %90 = vector.extract_strided_slice %77 {offsets = [0, 256], sizes = [4, 128], strides = [1, 1]} : vector<4x512xf32> to vector<4x128xf32>
    %91 = math.tanh %90 : vector<4x128xf32>
    %92 = vector.extract_strided_slice %77 {offsets = [0, 384], sizes = [4, 128], strides = [1, 1]} : vector<4x512xf32> to vector<4x128xf32>
    %93 = arith.negf %92 : vector<4x128xf32>
    %94 = math.exp %93 : vector<4x128xf32>
    %cst_27 = arith.constant 1.000000e+00 : f32
    %95 = vector.broadcast %cst_27 : f32 to vector<4x128xf32>
    %96 = arith.addf %95, %94 : vector<4x128xf32>
    %97 = arith.divf %95, %96 : vector<4x128xf32>
    %98 = arith.mulf %89, %65 : vector<4x128xf32>
    %99 = arith.mulf %83, %91 : vector<4x128xf32>
    %100 = arith.addf %98, %99 : vector<4x128xf32>
    %101 = math.tanh %100 : vector<4x128xf32>
    %102 = arith.mulf %97, %101 : vector<4x128xf32>
    %103 = vector.extract_strided_slice %102 {offsets = [0, 0], sizes = [4, 16], strides = [1, 1]} : vector<4x128xf32> to vector<4x16xf32>
    %104 = vector.shape_cast %103 : vector<4x16xf32> to vector<4x1x16xf32>
    %c0_28 = arith.constant 0 : index
    %105 = arith.index_cast %c2_i32 : i32 to index
    %c0_29 = arith.constant 0 : index
    %106 = vector.load %arg3[%c0_28, %105, %c0_29] : memref<4x8x16xf32, #tpu.memory_space<vmem>>, vector<4x1x16xf32>
    tpu.vector_store %arg3[%c0_28, %105, %c0_29], %104 {strides = array<i32>} : memref<4x8x16xf32, #tpu.memory_space<vmem>>, vector<4x1x16xf32>,
    %c3_i32 = arith.constant 3 : i32
    %c0_30 = arith.constant 0 : index
    %107 = arith.index_cast %c3_i32 : i32 to index
    %c0_31 = arith.constant 0 : index
    %108 = vector.load %arg1[%c0_30, %107, %c0_31] : memref<4x8x512xf32, #tpu.memory_space<vmem>>, vector<4x1x512xf32>
    %109 = vector.shape_cast %108 : vector<4x1x512xf32> to vector<4x512xf32>
    %c0_32 = arith.constant 0 : index
    %c0_33 = arith.constant 0 : index
    %110 = vector.load %arg2[%c0_32, %c0_33] : memref<128x512xf32, #tpu.memory_space<vmem>>, vector<128x512xf32>
    %cst_34 = arith.constant dense<0.000000e+00> : vector<4x512xf32>
    %111 = tpu.matmul %102, %110, %cst_34 {dimension_numbers = #tpu.dot_dimension_numbers<[1], [0], [0], [1], [0, 0, 1, 1], [], []>} : vector<4x128xf32>, vector<128x512xf32>, vector<4x512xf32> -> vector<4x512xf32>
    %112 = arith.addf %109, %111 : vector<4x512xf32>
    %113 = vector.extract_strided_slice %112 {offsets = [0, 0], sizes = [4, 128], strides = [1, 1]} : vector<4x512xf32> to vector<4x128xf32>
    %114 = arith.negf %113 : vector<4x128xf32>
    %115 = math.exp %114 : vector<4x128xf32>
    %cst_35 = arith.constant 1.000000e+00 : f32
    %116 = vector.broadcast %cst_35 : f32 to vector<4x128xf32>
    %117 = arith.addf %116, %115 : vector<4x128xf32>
    %118 = arith.divf %116, %117 : vector<4x128xf32>
    %119 = vector.extract_strided_slice %112 {offsets = [0, 128], sizes = [4, 128], strides = [1, 1]} : vector<4x512xf32> to vector<4x128xf32>
    %120 = arith.negf %119 : vector<4x128xf32>
    %121 = math.exp %120 : vector<4x128xf32>
    %cst_36 = arith.constant 1.000000e+00 : f32
    %122 = vector.broadcast %cst_36 : f32 to vector<4x128xf32>
    %123 = arith.addf %122, %121 : vector<4x128xf32>
    %124 = arith.divf %122, %123 : vector<4x128xf32>
    %125 = vector.extract_strided_slice %112 {offsets = [0, 256], sizes = [4, 128], strides = [1, 1]} : vector<4x512xf32> to vector<4x128xf32>
    %126 = math.tanh %125 : vector<4x128xf32>
    %127 = vector.extract_strided_slice %112 {offsets = [0, 384], sizes = [4, 128], strides = [1, 1]} : vector<4x512xf32> to vector<4x128xf32>
    %128 = arith.negf %127 : vector<4x128xf32>
    %129 = math.exp %128 : vector<4x128xf32>
    %cst_37 = arith.constant 1.000000e+00 : f32
    %130 = vector.broadcast %cst_37 : f32 to vector<4x128xf32>
    %131 = arith.addf %130, %129 : vector<4x128xf32>
    %132 = arith.divf %130, %131 : vector<4x128xf32>
    %133 = arith.mulf %124, %100 : vector<4x128xf32>
    %134 = arith.mulf %118, %126 : vector<4x128xf32>
    %135 = arith.addf %133, %134 : vector<4x128xf32>
    %136 = math.tanh %135 : vector<4x128xf32>
    %137 = arith.mulf %132, %136 : vector<4x128xf32>
    %138 = vector.extract_strided_slice %137 {offsets = [0, 0], sizes = [4, 16], strides = [1, 1]} : vector<4x128xf32> to vector<4x16xf32>
    %139 = vector.shape_cast %138 : vector<4x16xf32> to vector<4x1x16xf32>
    %c0_38 = arith.constant 0 : index
    %140 = arith.index_cast %c3_i32 : i32 to index
    %c0_39 = arith.constant 0 : index
    %141 = vector.load %arg3[%c0_38, %140, %c0_39] : memref<4x8x16xf32, #tpu.memory_space<vmem>>, vector<4x1x16xf32>
    tpu.vector_store %arg3[%c0_38, %140, %c0_39], %139 {strides = array<i32>} : memref<4x8x16xf32, #tpu.memory_space<vmem>>, vector<4x1x16xf32>,
    %c4_i32 = arith.constant 4 : i32
    %c0_40 = arith.constant 0 : index
    %142 = arith.index_cast %c4_i32 : i32 to index
    %c0_41 = arith.constant 0 : index
    %143 = vector.load %arg1[%c0_40, %142, %c0_41] : memref<4x8x512xf32, #tpu.memory_space<vmem>>, vector<4x1x512xf32>
    %144 = vector.shape_cast %143 : vector<4x1x512xf32> to vector<4x512xf32>
    %c0_42 = arith.constant 0 : index
    %c0_43 = arith.constant 0 : index
    %145 = vector.load %arg2[%c0_42, %c0_43] : memref<128x512xf32, #tpu.memory_space<vmem>>, vector<128x512xf32>
    %cst_44 = arith.constant dense<0.000000e+00> : vector<4x512xf32>
    %146 = tpu.matmul %137, %145, %cst_44 {dimension_numbers = #tpu.dot_dimension_numbers<[1], [0], [0], [1], [0, 0, 1, 1], [], []>} : vector<4x128xf32>, vector<128x512xf32>, vector<4x512xf32> -> vector<4x512xf32>
    %147 = arith.addf %144, %146 : vector<4x512xf32>
    %148 = vector.extract_strided_slice %147 {offsets = [0, 0], sizes = [4, 128], strides = [1, 1]} : vector<4x512xf32> to vector<4x128xf32>
    %149 = arith.negf %148 : vector<4x128xf32>
    %150 = math.exp %149 : vector<4x128xf32>
    %cst_45 = arith.constant 1.000000e+00 : f32
    %151 = vector.broadcast %cst_45 : f32 to vector<4x128xf32>
    %152 = arith.addf %151, %150 : vector<4x128xf32>
    %153 = arith.divf %151, %152 : vector<4x128xf32>
    %154 = vector.extract_strided_slice %147 {offsets = [0, 128], sizes = [4, 128], strides = [1, 1]} : vector<4x512xf32> to vector<4x128xf32>
    %155 = arith.negf %154 : vector<4x128xf32>
    %156 = math.exp %155 : vector<4x128xf32>
    %cst_46 = arith.constant 1.000000e+00 : f32
    %157 = vector.broadcast %cst_46 : f32 to vector<4x128xf32>
    %158 = arith.addf %157, %156 : vector<4x128xf32>
    %159 = arith.divf %157, %158 : vector<4x128xf32>
    %160 = vector.extract_strided_slice %147 {offsets = [0, 256], sizes = [4, 128], strides = [1, 1]} : vector<4x512xf32> to vector<4x128xf32>
    %161 = math.tanh %160 : vector<4x128xf32>
    %162 = vector.extract_strided_slice %147 {offsets = [0, 384], sizes = [4, 128], strides = [1, 1]} : vector<4x512xf32> to vector<4x128xf32>
    %163 = arith.negf %162 : vector<4x128xf32>
    %164 = math.exp %163 : vector<4x128xf32>
    %cst_47 = arith.constant 1.000000e+00 : f32
    %165 = vector.broadcast %cst_47 : f32 to vector<4x128xf32>
    %166 = arith.addf %165, %164 : vector<4x128xf32>
    %167 = arith.divf %165, %166 : vector<4x128xf32>
    %168 = arith.mulf %159, %135 : vector<4x128xf32>
    %169 = arith.mulf %153, %161 : vector<4x128xf32>
    %170 = arith.addf %168, %169 : vector<4x128xf32>
    %171 = math.tanh %170 : vector<4x128xf32>
    %172 = arith.mulf %167, %171 : vector<4x128xf32>
    %173 = vector.extract_strided_slice %172 {offsets = [0, 0], sizes = [4, 16], strides = [1, 1]} : vector<4x128xf32> to vector<4x16xf32>
    %174 = vector.shape_cast %173 : vector<4x16xf32> to vector<4x1x16xf32>
    %c0_48 = arith.constant 0 : index
    %175 = arith.index_cast %c4_i32 : i32 to index
    %c0_49 = arith.constant 0 : index
    %176 = vector.load %arg3[%c0_48, %175, %c0_49] : memref<4x8x16xf32, #tpu.memory_space<vmem>>, vector<4x1x16xf32>
    tpu.vector_store %arg3[%c0_48, %175, %c0_49], %174 {strides = array<i32>} : memref<4x8x16xf32, #tpu.memory_space<vmem>>, vector<4x1x16xf32>,
    %c5_i32 = arith.constant 5 : i32
    %c0_50 = arith.constant 0 : index
    %177 = arith.index_cast %c5_i32 : i32 to index
    %c0_51 = arith.constant 0 : index
    %178 = vector.load %arg1[%c0_50, %177, %c0_51] : memref<4x8x512xf32, #tpu.memory_space<vmem>>, vector<4x1x512xf32>
    %179 = vector.shape_cast %178 : vector<4x1x512xf32> to vector<4x512xf32>
    %c0_52 = arith.constant 0 : index
    %c0_53 = arith.constant 0 : index
    %180 = vector.load %arg2[%c0_52, %c0_53] : memref<128x512xf32, #tpu.memory_space<vmem>>, vector<128x512xf32>
    %cst_54 = arith.constant dense<0.000000e+00> : vector<4x512xf32>
    %181 = tpu.matmul %172, %180, %cst_54 {dimension_numbers = #tpu.dot_dimension_numbers<[1], [0], [0], [1], [0, 0, 1, 1], [], []>} : vector<4x128xf32>, vector<128x512xf32>, vector<4x512xf32> -> vector<4x512xf32>
    %182 = arith.addf %179, %181 : vector<4x512xf32>
    %183 = vector.extract_strided_slice %182 {offsets = [0, 0], sizes = [4, 128], strides = [1, 1]} : vector<4x512xf32> to vector<4x128xf32>
    %184 = arith.negf %183 : vector<4x128xf32>
    %185 = math.exp %184 : vector<4x128xf32>
    %cst_55 = arith.constant 1.000000e+00 : f32
    %186 = vector.broadcast %cst_55 : f32 to vector<4x128xf32>
    %187 = arith.addf %186, %185 : vector<4x128xf32>
    %188 = arith.divf %186, %187 : vector<4x128xf32>
    %189 = vector.extract_strided_slice %182 {offsets = [0, 128], sizes = [4, 128], strides = [1, 1]} : vector<4x512xf32> to vector<4x128xf32>
    %190 = arith.negf %189 : vector<4x128xf32>
    %191 = math.exp %190 : vector<4x128xf32>
    %cst_56 = arith.constant 1.000000e+00 : f32
    %192 = vector.broadcast %cst_56 : f32 to vector<4x128xf32>
    %193 = arith.addf %192, %191 : vector<4x128xf32>
    %194 = arith.divf %192, %193 : vector<4x128xf32>
    %195 = vector.extract_strided_slice %182 {offsets = [0, 256], sizes = [4, 128], strides = [1, 1]} : vector<4x512xf32> to vector<4x128xf32>
    %196 = math.tanh %195 : vector<4x128xf32>
    %197 = vector.extract_strided_slice %182 {offsets = [0, 384], sizes = [4, 128], strides = [1, 1]} : vector<4x512xf32> to vector<4x128xf32>
    %198 = arith.negf %197 : vector<4x128xf32>
    %199 = math.exp %198 : vector<4x128xf32>
    %cst_57 = arith.constant 1.000000e+00 : f32
    %200 = vector.broadcast %cst_57 : f32 to vector<4x128xf32>
    %201 = arith.addf %200, %199 : vector<4x128xf32>
    %202 = arith.divf %200, %201 : vector<4x128xf32>
    %203 = arith.mulf %194, %170 : vector<4x128xf32>
    %204 = arith.mulf %188, %196 : vector<4x128xf32>
    %205 = arith.addf %203, %204 : vector<4x128xf32>
    %206 = math.tanh %205 : vector<4x128xf32>
    %207 = arith.mulf %202, %206 : vector<4x128xf32>
    %208 = vector.extract_strided_slice %207 {offsets = [0, 0], sizes = [4, 16], strides = [1, 1]} : vector<4x128xf32> to vector<4x16xf32>
    %209 = vector.shape_cast %208 : vector<4x16xf32> to vector<4x1x16xf32>
    %c0_58 = arith.constant 0 : index
    %210 = arith.index_cast %c5_i32 : i32 to index
    %c0_59 = arith.constant 0 : index
    %211 = vector.load %arg3[%c0_58, %210, %c0_59] : memref<4x8x16xf32, #tpu.memory_space<vmem>>, vector<4x1x16xf32>
    tpu.vector_store %arg3[%c0_58, %210, %c0_59], %209 {strides = array<i32>} : memref<4x8x16xf32, #tpu.memory_space<vmem>>, vector<4x1x16xf32>,
    %c6_i32 = arith.constant 6 : i32
    %c0_60 = arith.constant 0 : index
    %212 = arith.index_cast %c6_i32 : i32 to index
    %c0_61 = arith.constant 0 : index
    %213 = vector.load %arg1[%c0_60, %212, %c0_61] : memref<4x8x512xf32, #tpu.memory_space<vmem>>, vector<4x1x512xf32>
    %214 = vector.shape_cast %213 : vector<4x1x512xf32> to vector<4x512xf32>
    %c0_62 = arith.constant 0 : index
    %c0_63 = arith.constant 0 : index
    %215 = vector.load %arg2[%c0_62, %c0_63] : memref<128x512xf32, #tpu.memory_space<vmem>>, vector<128x512xf32>
    %cst_64 = arith.constant dense<0.000000e+00> : vector<4x512xf32>
    %216 = tpu.matmul %207, %215, %cst_64 {dimension_numbers = #tpu.dot_dimension_numbers<[1], [0], [0], [1], [0, 0, 1, 1], [], []>} : vector<4x128xf32>, vector<128x512xf32>, vector<4x512xf32> -> vector<4x512xf32>
    %217 = arith.addf %214, %216 : vector<4x512xf32>
    %218 = vector.extract_strided_slice %217 {offsets = [0, 0], sizes = [4, 128], strides = [1, 1]} : vector<4x512xf32> to vector<4x128xf32>
    %219 = arith.negf %218 : vector<4x128xf32>
    %220 = math.exp %219 : vector<4x128xf32>
    %cst_65 = arith.constant 1.000000e+00 : f32
    %221 = vector.broadcast %cst_65 : f32 to vector<4x128xf32>
    %222 = arith.addf %221, %220 : vector<4x128xf32>
    %223 = arith.divf %221, %222 : vector<4x128xf32>
    %224 = vector.extract_strided_slice %217 {offsets = [0, 128], sizes = [4, 128], strides = [1, 1]} : vector<4x512xf32> to vector<4x128xf32>
    %225 = arith.negf %224 : vector<4x128xf32>
    %226 = math.exp %225 : vector<4x128xf32>
    %cst_66 = arith.constant 1.000000e+00 : f32
    %227 = vector.broadcast %cst_66 : f32 to vector<4x128xf32>
    %228 = arith.addf %227, %226 : vector<4x128xf32>
    %229 = arith.divf %227, %228 : vector<4x128xf32>
    %230 = vector.extract_strided_slice %217 {offsets = [0, 256], sizes = [4, 128], strides = [1, 1]} : vector<4x512xf32> to vector<4x128xf32>
    %231 = math.tanh %230 : vector<4x128xf32>
    %232 = vector.extract_strided_slice %217 {offsets = [0, 384], sizes = [4, 128], strides = [1, 1]} : vector<4x512xf32> to vector<4x128xf32>
    %233 = arith.negf %232 : vector<4x128xf32>
    %234 = math.exp %233 : vector<4x128xf32>
    %cst_67 = arith.constant 1.000000e+00 : f32
    %235 = vector.broadcast %cst_67 : f32 to vector<4x128xf32>
    %236 = arith.addf %235, %234 : vector<4x128xf32>
    %237 = arith.divf %235, %236 : vector<4x128xf32>
    %238 = arith.mulf %229, %205 : vector<4x128xf32>
    %239 = arith.mulf %223, %231 : vector<4x128xf32>
    %240 = arith.addf %238, %239 : vector<4x128xf32>
    %241 = math.tanh %240 : vector<4x128xf32>
    %242 = arith.mulf %237, %241 : vector<4x128xf32>
    %243 = vector.extract_strided_slice %242 {offsets = [0, 0], sizes = [4, 16], strides = [1, 1]} : vector<4x128xf32> to vector<4x16xf32>
    %244 = vector.shape_cast %243 : vector<4x16xf32> to vector<4x1x16xf32>
    %c0_68 = arith.constant 0 : index
    %245 = arith.index_cast %c6_i32 : i32 to index
    %c0_69 = arith.constant 0 : index
    %246 = vector.load %arg3[%c0_68, %245, %c0_69] : memref<4x8x16xf32, #tpu.memory_space<vmem>>, vector<4x1x16xf32>
    tpu.vector_store %arg3[%c0_68, %245, %c0_69], %244 {strides = array<i32>} : memref<4x8x16xf32, #tpu.memory_space<vmem>>, vector<4x1x16xf32>,
    %c7_i32 = arith.constant 7 : i32
    %c0_70 = arith.constant 0 : index
    %247 = arith.index_cast %c7_i32 : i32 to index
    %c0_71 = arith.constant 0 : index
    %248 = vector.load %arg1[%c0_70, %247, %c0_71] : memref<4x8x512xf32, #tpu.memory_space<vmem>>, vector<4x1x512xf32>
    %249 = vector.shape_cast %248 : vector<4x1x512xf32> to vector<4x512xf32>
    %c0_72 = arith.constant 0 : index
    %c0_73 = arith.constant 0 : index
    %250 = vector.load %arg2[%c0_72, %c0_73] : memref<128x512xf32, #tpu.memory_space<vmem>>, vector<128x512xf32>
    %cst_74 = arith.constant dense<0.000000e+00> : vector<4x512xf32>
    %251 = tpu.matmul %242, %250, %cst_74 {dimension_numbers = #tpu.dot_dimension_numbers<[1], [0], [0], [1], [0, 0, 1, 1], [], []>} : vector<4x128xf32>, vector<128x512xf32>, vector<4x512xf32> -> vector<4x512xf32>
    %252 = arith.addf %249, %251 : vector<4x512xf32>
    %253 = vector.extract_strided_slice %252 {offsets = [0, 0], sizes = [4, 128], strides = [1, 1]} : vector<4x512xf32> to vector<4x128xf32>
    %254 = arith.negf %253 : vector<4x128xf32>
    %255 = math.exp %254 : vector<4x128xf32>
    %cst_75 = arith.constant 1.000000e+00 : f32
    %256 = vector.broadcast %cst_75 : f32 to vector<4x128xf32>
    %257 = arith.addf %256, %255 : vector<4x128xf32>
    %258 = arith.divf %256, %257 : vector<4x128xf32>
    %259 = vector.extract_strided_slice %252 {offsets = [0, 128], sizes = [4, 128], strides = [1, 1]} : vector<4x512xf32> to vector<4x128xf32>
    %260 = arith.negf %259 : vector<4x128xf32>
    %261 = math.exp %260 : vector<4x128xf32>
    %cst_76 = arith.constant 1.000000e+00 : f32
    %262 = vector.broadcast %cst_76 : f32 to vector<4x128xf32>
    %263 = arith.addf %262, %261 : vector<4x128xf32>
    %264 = arith.divf %262, %263 : vector<4x128xf32>
    %265 = vector.extract_strided_slice %252 {offsets = [0, 256], sizes = [4, 128], strides = [1, 1]} : vector<4x512xf32> to vector<4x128xf32>
    %266 = math.tanh %265 : vector<4x128xf32>
    %267 = vector.extract_strided_slice %252 {offsets = [0, 384], sizes = [4, 128], strides = [1, 1]} : vector<4x512xf32> to vector<4x128xf32>
    %268 = arith.negf %267 : vector<4x128xf32>
    %269 = math.exp %268 : vector<4x128xf32>
    %cst_77 = arith.constant 1.000000e+00 : f32
    %270 = vector.broadcast %cst_77 : f32 to vector<4x128xf32>
    %271 = arith.addf %270, %269 : vector<4x128xf32>
    %272 = arith.divf %270, %271 : vector<4x128xf32>
    %273 = arith.mulf %264, %240 : vector<4x128xf32>
    %274 = arith.mulf %258, %266 : vector<4x128xf32>
    %275 = arith.addf %273, %274 : vector<4x128xf32>
    %276 = math.tanh %275 : vector<4x128xf32>
    %277 = arith.mulf %272, %276 : vector<4x128xf32>
    %278 = vector.extract_strided_slice %277 {offsets = [0, 0], sizes = [4, 16], strides = [1, 1]} : vector<4x128xf32> to vector<4x16xf32>
    %279 = vector.shape_cast %278 : vector<4x16xf32> to vector<4x1x16xf32>
    %c0_78 = arith.constant 0 : index
    %280 = arith.index_cast %c7_i32 : i32 to index
    %c0_79 = arith.constant 0 : index
    %281 = vector.load %arg3[%c0_78, %280, %c0_79] : memref<4x8x16xf32, #tpu.memory_space<vmem>>, vector<4x1x16xf32>
    tpu.vector_store %arg3[%c0_78, %280, %c0_79], %279 {strides = array<i32>} : memref<4x8x16xf32, #tpu.memory_space<vmem>>, vector<4x1x16xf32>,
    %c8_i32 = arith.constant 8 : i32
    return
  }
  func.func @transform_0(%arg0: i32) -> (i32, i32, i32) {
    %c0_i32 = arith.constant 0 : i32
    %c0_i32_0 = arith.constant 0 : i32
    %c0_i32_1 = arith.constant 0 : i32
    return %arg0, %c0_i32, %c0_i32_0 : i32, i32, i32
  }
  func.func @transform_1(%arg0: i32) -> (i32, i32) {
    %c0_i32 = arith.constant 0 : i32
    %c0_i32_0 = arith.constant 0 : i32
    %c0_i32_1 = arith.constant 0 : i32
    return %c0_i32, %c0_i32_0 : i32, i32
  }
  func.func @transform_2(%arg0: i32) -> (i32, i32, i32) {
    %c0_i32 = arith.constant 0 : i32
    %c0_i32_0 = arith.constant 0 : i32
    %c0_i32_1 = arith.constant 0 : i32
    return %arg0, %c0_i32, %c0_i32_0 : i32, i32, i32
  }
}

</mosaic_0001>

<llo_original>
// kernel: tpu_custom_call.1
$region0: #{tpu_custom_call.1}
  #allocation0 [shape = 'u32[]', space=smem, size = 0x4, offset = 0x4, fixed_abs, tag = 'smem constant byte address 0x4 - core index']
  #allocation1 [shape = 'u32[144,128]{1,0:T(1,128)}', space=vmem, size = 0x12000, scoped, tag = 'internal scratch']
  %s0 = inlined_call_operand.hbm [shape: f32[4,8,512], index: 0, kind: input, shape index: {}]
  %s1 = inlined_call_operand.hbm [shape: f32[128,512], index: 1, kind: input, shape index: {}]
  %s2 = inlined_call_operand.hbm [shape: f32[4,8,16], index: 2, kind: output, shape index: {}]
  %s3 = sld [smem:[#allocation0]]
  $region26: #{tpu_custom_call.1} parent=0
    _
  %s5 = ssub.s32 1, %s3
  %s6 = scalar_select 0, %s5, %s3
  $region1: #{tpu_custom_call.1} parent=0
    #allocation2 [shape = 'u8[65536]{0}', space=vmem, size = 0x10000, scoped, tag = 'input window, operand 0, single buffered']
    #allocation3 [shape = 's32[1]{0}', space=sflag, size = 0x4, scoped, tag = 'scoped memory for tpu_custom_call.1']
    #allocation4 [shape = 's32[1]{0}', space=sflag, size = 0x4, scoped, tag = 'scoped memory for tpu_custom_call.1']
    #allocation5 [shape = 'u8[262144]{0}', space=vmem, size = 0x40000, scoped, tag = 'input window, operand 1, single buffered']
    #allocation6 [shape = 's32[1]{0}', space=sflag, size = 0x4, scoped, tag = 'scoped memory for tpu_custom_call.1']
    #allocation7 [shape = 'u8[16384]{0}', space=vmem, size = 0x4000, scoped, tag = 'output window, operand 0, single buffered']
    %7 = vsyncpa [#allocation3], 0
    %8 = vsyncpa [#allocation6], 0
    %9 = vsyncpa [#allocation4], 0
    // Predicated region
    $region2: #{tpu_custom_call.1} parent=1 // pred_check
      _
    $region3: #{tpu_custom_call.1} parent=1 // pred_check_branch
      %11 = sbr.rel (0) target = $region5
    $region4: #{tpu_custom_call.1} parent=1 // pred_region
      %s13 = ssub.s32 2048, 2048
      %14 = vsyncadd [#allocation3], %s13
      %s15 = sshll.u32 [#allocation2], 4
      %s16 = int_to_ptr.vmem [resolvable:$true] %s15
      %21 = dma.hbm_to_vmem [thread:$0]  %s0, 2048, %s16, [#allocation3], 512, 512, 32
    $region5: #{tpu_custom_call.1} parent=1 // pred_fallthru
      _
    // Predicated region
    $region6: #{tpu_custom_call.1} parent=1 // pred_check
      _
    $region7: #{tpu_custom_call.1} parent=1 // pred_check_branch
      %23 = sbr.rel (0) target = $region9
    $region8: #{tpu_custom_call.1} parent=1 // pred_region
      %s25 = ssub.s32 8192, 8192
      %26 = vsyncadd [#allocation6], %s25
      %s27 = sshll.u32 [#allocation5], 4
      %s28 = int_to_ptr.vmem [resolvable:$true] %s27
      %33 = dma.hbm_to_vmem [thread:$0]  %s1, 8192, %s28, [#allocation6], 512, 512, 32
    $region9: #{tpu_custom_call.1} parent=1 // pred_fallthru
      _
    // Predicated region
    $region10: #{tpu_custom_call.1} parent=1 // pred_check
      _
    $region11: #{tpu_custom_call.1} parent=1 // pred_check_branch
      %35 = sbr.rel (0) target = $region13
    $region12: #{tpu_custom_call.1} parent=1 // pred_region
      %36 = dma.done [#allocation3], 2048
    $region13: #{tpu_custom_call.1} parent=1 // pred_fallthru
      _
    // Predicated region
    $region14: #{tpu_custom_call.1} parent=1 // pred_check
      _
    $region15: #{tpu_custom_call.1} parent=1 // pred_check_branch
      %38 = sbr.rel (0) target = $region17
    $region16: #{tpu_custom_call.1} parent=1 // pred_region
      %39 = dma.done [#allocation6], 8192
    $region17: #{tpu_custom_call.1} parent=1 // pred_fallthru
      _
    %v40 = vld [vmem:[#allocation2] ss:$8 sm:$0xf]
    %s41 = scalar_lea.vmem [#allocation2], 32
    %v42 = vld [vmem:[%s41] ss:$8 sm:$0xf]
    %s43 = scalar_lea.vmem [#allocation2], 64
    %v44 = vld [vmem:[%s43] ss:$8 sm:$0xf]
    %s45 = scalar_lea.vmem [#allocation2], 96
    %v46 = vld [vmem:[%s45] ss:$8 sm:$0xf]
    %v47 = vld [vmem:[#allocation5] sm:$0xff]
    %v48 = vld [vmem:[#allocation5 + $0x8] sm:$0xff]
    %v49 = vld [vmem:[#allocation5 + $0x10] sm:$0xff]
    %v50 = vld [vmem:[#allocation5 + $0x18] sm:$0xff]
    %v51 = vld [vmem:[#allocation5 + $0x20] sm:$0xff]
    %v52 = vld [vmem:[#allocation5 + $0x28] sm:$0xff]
    %v53 = vld [vmem:[#allocation5 + $0x30] sm:$0xff]
    %v54 = vld [vmem:[#allocation5 + $0x38] sm:$0xff]
    %v55 = vld [vmem:[#allocation5 + $0x40] sm:$0xff]
    %v56 = vld [vmem:[#allocation5 + $0x48] sm:$0xff]
    %v57 = vld [vmem:[#allocation5 + $0x50] sm:$0xff]
    %v58 = vld [vmem:[#allocation5 + $0x58] sm:$0xff]
    %v59 = vld [vmem:[#allocation5 + $0x60] sm:$0xff]
    %v60 = vld [vmem:[#allocation5 + $0x68] sm:$0xff]
    %v61 = vld [vmem:[#allocation5 + $0x70] sm:$0xff]
    %v62 = vld [vmem:[#allocation5 + $0x78] sm:$0xff]
    %v63 = vld [vmem:[#allocation5 + $0x80] sm:$0xff]
    %v64 = vld [vmem:[#allocation5 + $0x88] sm:$0xff]
    %v65 = vld [vmem:[#allocation5 + $0x90] sm:$0xff]
    %v66 = vld [vmem:[#allocation5 + $0x98] sm:$0xff]
    %v67 = vld [vmem:[#allocation5 + $0xa0] sm:$0xff]
    %v68 = vld [vmem:[#allocation5 + $0xa8] sm:$0xff]
    %v69 = vld [vmem:[#allocation5 + $0xb0] sm:$0xff]
    %v70 = vld [vmem:[#allocation5 + $0xb8] sm:$0xff]
    %v71 = vld [vmem:[#allocation5 + $0xc0] sm:$0xff]
    %v72 = vld [vmem:[#allocation5 + $0xc8] sm:$0xff]
    %v73 = vld [vmem:[#allocation5 + $0xd0] sm:$0xff]
    %v74 = vld [vmem:[#allocation5 + $0xd8] sm:$0xff]
    %v75 = vld [vmem:[#allocation5 + $0xe0] sm:$0xff]
    %v76 = vld [vmem:[#allocation5 + $0xe8] sm:$0xff]
    %v77 = vld [vmem:[#allocation5 + $0xf0] sm:$0xff]
    %v78 = vld [vmem:[#allocation5 + $0xf8] sm:$0xff]
    %v79 = vld [vmem:[#allocation5 + $0x100] sm:$0xff]
    %v80 = vld [vmem:[#allocation5 + $0x108] sm:$0xff]
    %v81 = vld [vmem:[#allocation5 + $0x110] sm:$0xff]
    %v82 = vld [vmem:[#allocation5 + $0x118] sm:$0xff]
    %v83 = vld [vmem:[#allocation5 + $0x120] sm:$0xff]
    %v84 = vld [vmem:[#allocation5 + $0x128] sm:$0xff]
    %v85 = vld [vmem:[#allocation5 + $0x130] sm:$0xff]
    %v86 = vld [vmem:[#allocation5 + $0x138] sm:$0xff]
    %v87 = vld [vmem:[#allocation5 + $0x140] sm:$0xff]
    %v88 = vld [vmem:[#allocation5 + $0x148] sm:$0xff]
    %v89 = vld [vmem:[#allocation5 + $0x150] sm:$0xff]
    %v90 = vld [vmem:[#allocation5 + $0x158] sm:$0xff]
    %v91 = vld [vmem:[#allocation5 + $0x160] sm:$0xff]
    %v92 = vld [vmem:[#allocation5 + $0x168] sm:$0xff]
    %v93 = vld [vmem:[#allocation5 + $0x170] sm:$0xff]
    %v94 = vld [vmem:[#allocation5 + $0x178] sm:$0xff]
    %v95 = vld [vmem:[#allocation5 + $0x180] sm:$0xff]
    %v96 = vld [vmem:[#allocation5 + $0x188] sm:$0xff]
    %v97 = vld [vmem:[#allocation5 + $0x190] sm:$0xff]
    %v98 = vld [vmem:[#allocation5 + $0x198] sm:$0xff]
    %v99 = vld [vmem:[#allocation5 + $0x1a0] sm:$0xff]
    %v100 = vld [vmem:[#allocation5 + $0x1a8] sm:$0xff]
    %v101 = vld [vmem:[#allocation5 + $0x1b0] sm:$0xff]
    %v102 = vld [vmem:[#allocation5 + $0x1b8] sm:$0xff]
    %v103 = vld [vmem:[#allocation5 + $0x1c0] sm:$0xff]
    %v104 = vld [vmem:[#allocation5 + $0x1c8] sm:$0xff]
    %v105 = vld [vmem:[#allocation5 + $0x1d0] sm:$0xff]
    %v106 = vld [vmem:[#allocation5 + $0x1d8] sm:$0xff]
    %v107 = vld [vmem:[#allocation5 + $0x1e0] sm:$0xff]
    %v108 = vld [vmem:[#allocation5 + $0x1e8] sm:$0xff]
    %v109 = vld [vmem:[#allocation5 + $0x1f0] sm:$0xff]
    %v110 = vld [vmem:[#allocation5 + $0x1f8] sm:$0xff]
    %111 = vmatprep.subr.mxu0 %v108
    %112 = vmatpush1.msra.mxu0 %v107
    %113 = vmatprep.subr.mxu0 %v104
    %114 = vmatpush1.msra.mxu0 %v103
    %115 = vmatprep.subr.mxu0 %v100
    %116 = vmatpush1.msra.mxu0 %v99
    %117 = vmatprep.subr.mxu0 %v96
    %118 = vmatpush1.msra.mxu0 %v95
    %119 = vmatprep.subr.mxu0 %v92
    %120 = vmatpush1.msra.mxu0 %v91
    %121 = vmatprep.subr.mxu0 %v88
    %122 = vmatpush1.msra.mxu0 %v87
    %123 = vmatprep.subr.mxu0 %v84
    %124 = vmatpush1.msra.mxu0 %v83
    %125 = vmatprep.subr.mxu0 %v80
    %126 = vmatpush1.msra.mxu0 %v79
    %127 = vmatprep.subr.mxu0 %v76
    %128 = vmatpush1.msra.mxu0 %v75
    %129 = vmatprep.subr.mxu0 %v72
    %130 = vmatpush1.msra.mxu0 %v71
    %131 = vmatprep.subr.mxu0 %v68
    %132 = vmatpush1.msra.mxu0 %v67
    %133 = vmatprep.subr.mxu0 %v64
    %134 = vmatpush1.msra.mxu0 %v63
    %135 = vmatprep.subr.mxu0 %v60
    %136 = vmatpush1.msra.mxu0 %v59
    %137 = vmatprep.subr.mxu0 %v56
    %138 = vmatpush1.msra.mxu0 %v55
    %139 = vmatprep.subr.mxu0 %v52
    %140 = vmatpush1.msra.mxu0 %v51
    %141 = vmatprep.subr.mxu0 %v48
    %142 = vmatpush1.msra.mxu0 %v47
    %143 = vmatprep.subr.mxu0 0.0
    %144 = vmatpush2.msra.mxu0 0.0
    %145 = vmatprep.subr.mxu0 0.0
    %146 = vmatpush2.msra.mxu0 0.0
    %147 = vmatprep.subr.mxu0 0.0
    %148 = vmatpush2.msra.mxu0 0.0
    %149 = vmatprep.subr.mxu0 0.0
    %150 = vmatpush2.msra.mxu0 0.0
    %151 = vmatprep.subr.mxu0 0.0
    %152 = vmatpush2.msra.mxu0 0.0
    %153 = vmatprep.subr.mxu0 0.0
    %154 = vmatpush2.msra.mxu0 0.0
    %155 = vmatprep.subr.mxu0 0.0
    %156 = vmatpush2.msra.mxu0 0.0
    %157 = vmatprep.subr.mxu0 0.0
    %158 = vmatpush2.msra.mxu0 0.0
    %159 = vmatprep.subr.mxu0 0.0
    %160 = vmatpush2.msra.mxu0 0.0
    %161 = vmatprep.subr.mxu0 0.0
    %162 = vmatpush2.msra.mxu0 0.0
    %163 = vmatprep.subr.mxu0 0.0
    %164 = vmatpush2.msra.mxu0 0.0
    %165 = vmatprep.subr.mxu0 0.0
    %166 = vmatpush2.msra.mxu0 0.0
    %167 = vmatprep.subr.mxu0 0.0
    %168 = vmatpush2.msra.mxu0 0.0
    %169 = vmatprep.subr.mxu0 0.0
    %170 = vmatpush2.msra.mxu0 0.0
    %171 = vmatprep.subr.mxu0 0.0
    %172 = vmatpush2.msra.mxu0 0.0
    %173 = vmatprep.subr.mxu0 0.0
    %174 = vmatpush2.msra.mxu0 0.0
    %175 = vmatprep.mubr.f32.mxu0 0.0
    %176 = vmatmul.mubr.f32.gmra.mxu0 0.0
    %v177 = vpop.f32.mrf.mxu0
    %v178 = vadd.f32 0.0, %v177
    %v179 = vpop.f32.mrf.mxu0
    %v180 = vadd.f32 0.0, %v179
    %181 = vdwg.mxu0
    %182 = vmatprep.subr.mxu0 %v110
    %183 = vmatpush1.msra.mxu0 %v109
    %184 = vmatprep.subr.mxu0 %v106
    %185 = vmatpush1.msra.mxu0 %v105
    %186 = vmatprep.subr.mxu0 %v102
    %187 = vmatpush1.msra.mxu0 %v101
    %188 = vmatprep.subr.mxu0 %v98
    %189 = vmatpush1.msra.mxu0 %v97
    %190 = vmatprep.subr.mxu0 %v94
    %191 = vmatpush1.msra.mxu0 %v93
    %192 = vmatprep.subr.mxu0 %v90
    %193 = vmatpush1.msra.mxu0 %v89
    %194 = vmatprep.subr.mxu0 %v86
    %195 = vmatpush1.msra.mxu0 %v85
    %196 = vmatprep.subr.mxu0 %v82
    %197 = vmatpush1.msra.mxu0 %v81
    %198 = vmatprep.subr.mxu0 %v78
    %199 = vmatpush1.msra.mxu0 %v77
    %200 = vmatprep.subr.mxu0 %v74
    %201 = vmatpush1.msra.mxu0 %v73
    %202 = vmatprep.subr.mxu0 %v70
    %203 = vmatpush1.msra.mxu0 %v69
    %204 = vmatprep.subr.mxu0 %v66
    %205 = vmatpush1.msra.mxu0 %v65
    %206 = vmatprep.subr.mxu0 %v62
    %207 = vmatpush1.msra.mxu0 %v61
    %208 = vmatprep.subr.mxu0 %v58
    %209 = vmatpush1.msra.mxu0 %v57
    %210 = vmatprep.subr.mxu0 %v54
    %211 = vmatpush1.msra.mxu0 %v53
    %212 = vmatprep.subr.mxu0 %v50
    %213 = vmatpush1.msra.mxu0 %v49
    %214 = vmatprep.subr.mxu0 0.0
    %215 = vmatpush2.msra.mxu0 0.0
    %216 = vmatprep.subr.mxu0 0.0
    %217 = vmatpush2.msra.mxu0 0.0
    %218 = vmatprep.subr.mxu0 0.0
    %219 = vmatpush2.msra.mxu0 0.0
    %220 = vmatprep.subr.mxu0 0.0
    %221 = vmatpush2.msra.mxu0 0.0
    %222 = vmatprep.subr.mxu0 0.0
    %223 = vmatpush2.msra.mxu0 0.0
    %224 = vmatprep.subr.mxu0 0.0
    %225 = vmatpush2.msra.mxu0 0.0
    %226 = vmatprep.subr.mxu0 0.0
    %227 = vmatpush2.msra.mxu0 0.0
    %228 = vmatprep.subr.mxu0 0.0
    %229 = vmatpush2.msra.mxu0 0.0
    %230 = vmatprep.subr.mxu0 0.0
    %231 = vmatpush2.msra.mxu0 0.0
    %232 = vmatprep.subr.mxu0 0.0
    %233 = vmatpush2.msra.mxu0 0.0
    %234 = vmatprep.subr.mxu0 0.0
    %235 = vmatpush2.msra.mxu0 0.0
    %236 = vmatprep.subr.mxu0 0.0
    %237 = vmatpush2.msra.mxu0 0.0
    %238 = vmatprep.subr.mxu0 0.0
    %239 = vmatpush2.msra.mxu0 0.0
    %240 = vmatprep.subr.mxu0 0.0
    %241 = vmatpush2.msra.mxu0 0.0
    %242 = vmatprep.subr.mxu0 0.0
    %243 = vmatpush2.msra.mxu0 0.0
    %244 = vmatprep.subr.mxu0 0.0
    %245 = vmatpush2.msra.mxu0 0.0
    %246 = vmatprep.mubr.f32.mxu0 0.0
    %247 = vmatmul.mubr.f32.gmra.mxu0 0.0
    %v248 = vpop.f32.mrf.mxu0
    %v249 = vadd.f32 0.0, %v248
    %v250 = vpop.f32.mrf.mxu0
    %v251 = vadd.f32 0.0, %v250
    %252 = vdwg.mxu0
    %v257 = vcombine.low %v178, %v180
    %v258 = vcombine.low %v249, %v251
    %v260 = vunpack.c.l.s4 1966171168
    %v261 = vunpack.c.0.s8 %v260
    %v262 = vlaneseq
    %v263 = vshrl.u32 %v262, 7
    %v264 = vsub.s32 %v261, %v263
    %v265 = vrot.slane %v257, %v264
    %v267 = vunpack.c.l.s4 1966171168
    %v268 = vunpack.c.0.s8 %v267
    %v269 = vlaneseq
    %v270 = vshrl.u32 %v269, 7
    %v271 = vsub.s32 %v268, %v270
    %v272 = vrot.slane %v258, %v271
    %v273 = vcombine.low %v265, %v272
    %v274 = vcombine.high %v265, %v272
    %v276 = vunpack.c.l.s4 1966171168
    %v277 = vunpack.c.0.s8 %v276
    %v278 = vlaneseq
    %v279 = vshrl.u32 %v278, 7
    %v280 = vsub.s32 %v277, %v279
    %v281 = vrot.slane %v273, %v280
    %v283 = vunpack.c.l.s4 1966171168
    %v284 = vunpack.c.0.s8 %v283
    %v285 = vlaneseq
    %v286 = vshrl.u32 %v285, 7
    %v287 = vsub.s32 %v284, %v286
    %v288 = vrot.slane %v274, %v287
    %v289 = vcombine.high %v281, %v281
    %v290 = vcombine.high %v288, %v288
    %v295 = vadd.f32 %v40, %v281
    %v296 = vadd.f32 %v42, %v288
    %v297 = vadd.f32 %v44, %v289
    %v298 = vadd.f32 %v46, %v290
    %v299 = vxor.u32 %v295, 2147483648
    %v300 = vxor.u32 %v296, 2147483648
    %v301 = vxor.u32 %v297, 2147483648
    %v302 = vxor.u32 %v298, 2147483648
    %v303 = vmul.f32 %v299, 1.442695
    %v304 = vpow.pop %v303
    %v305 = vmul.f32 %v300, 1.442695
    %v306 = vpow.pop %v305
    %v307 = vmul.f32 %v301, 1.442695
    %v308 = vpow.pop %v307
    %v309 = vmul.f32 %v302, 1.442695
    %v310 = vpow.pop %v309
    %v311 = vadd.f32 %v304, 1.0
    %v312 = vadd.f32 %v306, 1.0
    %v313 = vadd.f32 %v308, 1.0
    %v314 = vadd.f32 %v310, 1.0
    %v315 = vrcp.pop %v311
    %v316 = vmul.f32 1.0, %v315
    %v317 = vrcp.pop %v312
    %v318 = vmul.f32 1.0, %v317
    %v319 = vrcp.pop %v313
    %v320 = vmul.f32 1.0, %v319
    %v321 = vrcp.pop %v314
    %v322 = vmul.f32 1.0, %v321
    %v327 = vrot.slane %v295, 1
    %v328 = vrot.slane %v296, 1
    %v329 = vrot.slane %v297, 1
    %v330 = vrot.slane %v298, 1
    %v335 = vxor.u32 %v327, 2147483648
    %v336 = vxor.u32 %v328, 2147483648
    %v337 = vxor.u32 %v329, 2147483648
    %v338 = vxor.u32 %v330, 2147483648
    %v339 = vmul.f32 %v335, 1.442695
    %v340 = vpow.pop %v339
    %v341 = vmul.f32 %v336, 1.442695
    %v342 = vpow.pop %v341
    %v343 = vmul.f32 %v337, 1.442695
    %v344 = vpow.pop %v343
    %v345 = vmul.f32 %v338, 1.442695
    %v346 = vpow.pop %v345
    %v347 = vadd.f32 %v340, 1.0
    %v348 = vadd.f32 %v342, 1.0
    %v349 = vadd.f32 %v344, 1.0
    %v350 = vadd.f32 %v346, 1.0
    %v351 = vrcp.pop %v347
    %v352 = vmul.f32 1.0, %v351
    %v353 = vrcp.pop %v348
    %v354 = vmul.f32 1.0, %v353
    %v355 = vrcp.pop %v349
    %v356 = vmul.f32 1.0, %v355
    %v357 = vrcp.pop %v350
    %v358 = vmul.f32 1.0, %v357
    %v359 = vrot.slane %v295, 2
    %v360 = vrot.slane %v296, 2
    %v361 = vrot.slane %v297, 2
    %v362 = vrot.slane %v298, 2
    %v367 = vtanh.pop %v359
    %v368 = vtanh.pop %v360
    %v369 = vtanh.pop %v361
    %v370 = vtanh.pop %v362
    %v371 = vrot.slane %v295, 3
    %v372 = vrot.slane %v296, 3
    %v373 = vrot.slane %v297, 3
    %v374 = vrot.slane %v298, 3
    %v379 = vxor.u32 %v371, 2147483648
    %v380 = vxor.u32 %v372, 2147483648
    %v381 = vxor.u32 %v373, 2147483648
    %v382 = vxor.u32 %v374, 2147483648
    %v383 = vmul.f32 %v379, 1.442695
    %v384 = vpow.pop %v383
    %v385 = vmul.f32 %v380, 1.442695
    %v386 = vpow.pop %v385
    %v387 = vmul.f32 %v381, 1.442695
    %v388 = vpow.pop %v387
    %v389 = vmul.f32 %v382, 1.442695
    %v390 = vpow.pop %v389
    %v391 = vadd.f32 %v384, 1.0
    %v392 = vadd.f32 %v386, 1.0
    %v393 = vadd.f32 %v388, 1.0
    %v394 = vadd.f32 %v390, 1.0
    %v395 = vrcp.pop %v391
    %v396 = vmul.f32 1.0, %v395
    %v397 = vrcp.pop %v392
    %v398 = vmul.f32 1.0, %v397
    %v399 = vrcp.pop %v393
    %v400 = vmul.f32 1.0, %v399
    %v401 = vrcp.pop %v394
    %v402 = vmul.f32 1.0, %v401
    %v403 = vmul.f32 %v352, 0.0
    %v404 = vmul.f32 %v354, 0.0
    %v405 = vmul.f32 %v356, 0.0
    %v406 = vmul.f32 %v358, 0.0
    %v407 = vmul.f32 %v316, %v367
    %v408 = vmul.f32 %v318, %v368
    %v409 = vmul.f32 %v320, %v369
    %v410 = vmul.f32 %v322, %v370
    %v411 = vadd.f32 %v403, %v407
    %v412 = vadd.f32 %v404, %v408
    %v413 = vadd.f32 %v405, %v409
    %v414 = vadd.f32 %v406, %v410
    %v415 = vtanh.pop %v411
    %v416 = vtanh.pop %v412
    %v417 = vtanh.pop %v413
    %v418 = vtanh.pop %v414
    %v419 = vmul.f32 %v396, %v415
    %v420 = vmul.f32 %v398, %v416
    %v421 = vmul.f32 %v400, %v417
    %v422 = vmul.f32 %v402, %v418
    %vm423 = vcmask 122880
    %424 = vst.msk [vmem:[#allocation7] sm:$0x1] %vm423, %v419
    %425 = vst.msk [vmem:[#allocation7 + $0x8] sm:$0x1] %vm423, %v420
    %426 = vst.msk [vmem:[#allocation7 + $0x10] sm:$0x1] %vm423, %v421
    %427 = vst.msk [vmem:[#allocation7 + $0x18] sm:$0x1] %vm423, %v422
    %s428 = scalar_lea.vmem [#allocation2], 1
    %v429 = vld [vmem:[%s428] ss:$8 sm:$0xf]
    %s430 = scalar_lea.vmem [#allocation2], 33
    %v431 = vld [vmem:[%s430] ss:$8 sm:$0xf]
    %s432 = scalar_lea.vmem [#allocation2], 65
    %v433 = vld [vmem:[%s432] ss:$8 sm:$0xf]
    %s434 = scalar_lea.vmem [#allocation2], 97
    %v435 = vld [vmem:[%s434] ss:$8 sm:$0xf]
    %v436 = vld [vmem:[#allocation5] sm:$0xff]
    %v437 = vld [vmem:[#allocation5 + $0x8] sm:$0xff]
    %v438 = vld [vmem:[#allocation5 + $0x10] sm:$0xff]
    %v439 = vld [vmem:[#allocation5 + $0x18] sm:$0xff]
    %v440 = vld [vmem:[#allocation5 + $0x20] sm:$0xff]
    %v441 = vld [vmem:[#allocation5 + $0x28] sm:$0xff]
    %v442 = vld [vmem:[#allocation5 + $0x30] sm:$0xff]
    %v443 = vld [vmem:[#allocation5 + $0x38] sm:$0xff]
    %v444 = vld [vmem:[#allocation5 + $0x40] sm:$0xff]
    %v445 = vld [vmem:[#allocation5 + $0x48] sm:$0xff]
    %v446 = vld [vmem:[#allocation5 + $0x50] sm:$0xff]
    %v447 = vld [vmem:[#allocation5 + $0x58] sm:$0xff]
    %v448 = vld [vmem:[#allocation5 + $0x60] sm:$0xff]
    %v449 = vld [vmem:[#allocation5 + $0x68] sm:$0xff]
    %v450 = vld [vmem:[#allocation5 + $0x70] sm:$0xff]
    %v451 = vld [vmem:[#allocation5 + $0x78] sm:$0xff]
    %v452 = vld [vmem:[#allocation5 + $0x80] sm:$0xff]
    %v453 = vld [vmem:[#allocation5 + $0x88] sm:$0xff]
    %v454 = vld [vmem:[#allocation5 + $0x90] sm:$0xff]
    %v455 = vld [vmem:[#allocation5 + $0x98] sm:$0xff]
    %v456 = vld [vmem:[#allocation5 + $0xa0] sm:$0xff]
    %v457 = vld [vmem:[#allocation5 + $0xa8] sm:$0xff]
    %v458 = vld [vmem:[#allocation5 + $0xb0] sm:$0xff]
    %v459 = vld [vmem:[#allocation5 + $0xb8] sm:$0xff]
    %v460 = vld [vmem:[#allocation5 + $0xc0] sm:$0xff]
    %v461 = vld [vmem:[#allocation5 + $0xc8] sm:$0xff]
    %v462 = vld [vmem:[#allocation5 + $0xd0] sm:$0xff]
    %v463 = vld [vmem:[#allocation5 + $0xd8] sm:$0xff]
    %v464 = vld [vmem:[#allocation5 + $0xe0] sm:$0xff]
    %v465 = vld [vmem:[#allocation5 + $0xe8] sm:$0xff]
    %v466 = vld [vmem:[#allocation5 + $0xf0] sm:$0xff]
    %v467 = vld [vmem:[#allocation5 + $0xf8] sm:$0xff]
    %v468 = vld [vmem:[#allocation5 + $0x100] sm:$0xff]
    %v469 = vld [vmem:[#allocation5 + $0x108] sm:$0xff]
    %v470 = vld [vmem:[#allocation5 + $0x110] sm:$0xff]
    %v471 = vld [vmem:[#allocation5 + $0x118] sm:$0xff]
    %v472 = vld [vmem:[#allocation5 + $0x120] sm:$0xff]
    %v473 = vld [vmem:[#allocation5 + $0x128] sm:$0xff]
    %v474 = vld [vmem:[#allocation5 + $0x130] sm:$0xff]
    %v475 = vld [vmem:[#allocation5 + $0x138] sm:$0xff]
    %v476 = vld [vmem:[#allocation5 + $0x140] sm:$0xff]
    %v477 = vld [vmem:[#allocation5 + $0x148] sm:$0xff]
    %v478 = vld [vmem:[#allocation5 + $0x150] sm:$0xff]
    %v479 = vld [vmem:[#allocation5 + $0x158] sm:$0xff]
    %v480 = vld [vmem:[#allocation5 + $0x160] sm:$0xff]
    %v481 = vld [vmem:[#allocation5 + $0x168] sm:$0xff]
    %v482 = vld [vmem:[#allocation5 + $0x170] sm:$0xff]
    %v483 = vld [vmem:[#allocation5 + $0x178] sm:$0xff]
    %v484 = vld [vmem:[#allocation5 + $0x180] sm:$0xff]
    %v485 = vld [vmem:[#allocation5 + $0x188] sm:$0xff]
    %v486 = vld [vmem:[#allocation5 + $0x190] sm:$0xff]
    %v487 = vld [vmem:[#allocation5 + $0x198] sm:$0xff]
    %v488 = vld [vmem:[#allocation5 + $0x1a0] sm:$0xff]
    %v489 = vld [vmem:[#allocation5 + $0x1a8] sm:$0xff]
    %v490 = vld [vmem:[#allocation5 + $0x1b0] sm:$0xff]
    %v491 = vld [vmem:[#allocation5 + $0x1b8] sm:$0xff]
    %v492 = vld [vmem:[#allocation5 + $0x1c0] sm:$0xff]
    %v493 = vld [vmem:[#allocation5 + $0x1c8] sm:$0xff]
    %v494 = vld [vmem:[#allocation5 + $0x1d0] sm:$0xff]
    %v495 = vld [vmem:[#allocation5 + $0x1d8] sm:$0xff]
    %v496 = vld [vmem:[#allocation5 + $0x1e0] sm:$0xff]
    %v497 = vld [vmem:[#allocation5 + $0x1e8] sm:$0xff]
    %v498 = vld [vmem:[#allocation5 + $0x1f0] sm:$0xff]
    %v499 = vld [vmem:[#allocation5 + $0x1f8] sm:$0xff]
    %v504 = vcombine.low %v419, %v420
    %v505 = vcombine.low %v421, %v422
    %v507 = vunpack.c.l.s4 1966171168
    %v508 = vunpack.c.0.s8 %v507
    %v509 = vlaneseq
    %v510 = vshrl.u32 %v509, 7
    %v511 = vsub.s32 %v508, %v510
    %v512 = vrot.slane %v504, %v511
    %v514 = vunpack.c.l.s4 1966171168
    %v515 = vunpack.c.0.s8 %v514
    %v516 = vlaneseq
    %v517 = vshrl.u32 %v516, 7
    %v518 = vsub.s32 %v515, %v517
    %v519 = vrot.slane %v505, %v518
    %v520 = vcombine.low %v512, %v519
    %v522 = vunpack.c.l.s4 1966171168
    %v523 = vunpack.c.0.s8 %v522
    %v524 = vlaneseq
    %v525 = vshrl.u32 %v524, 7
    %v526 = vsub.s32 %v523, %v525
    %v527 = vrot.slane %v520, %v526
    %529 = vmatprep.subr.mxu0 %v497
    %530 = vmatpush1.msra.mxu0 %v496
    %531 = vmatprep.subr.mxu0 %v493
    %532 = vmatpush1.msra.mxu0 %v492
    %533 = vmatprep.subr.mxu0 %v489
    %534 = vmatpush1.msra.mxu0 %v488
    %535 = vmatprep.subr.mxu0 %v485
    %536 = vmatpush1.msra.mxu0 %v484
    %537 = vmatprep.subr.mxu0 %v481
    %538 = vmatpush1.msra.mxu0 %v480
    %539 = vmatprep.subr.mxu0 %v477
    %540 = vmatpush1.msra.mxu0 %v476
    %541 = vmatprep.subr.mxu0 %v473
    %542 = vmatpush1.msra.mxu0 %v472
    %543 = vmatprep.subr.mxu0 %v469
    %544 = vmatpush1.msra.mxu0 %v468
    %545 = vmatprep.subr.mxu0 %v465
    %546 = vmatpush1.msra.mxu0 %v464
    %547 = vmatprep.subr.mxu0 %v461
    %548 = vmatpush1.msra.mxu0 %v460
    %549 = vmatprep.subr.mxu0 %v457
    %550 = vmatpush1.msra.mxu0 %v456
    %551 = vmatprep.subr.mxu0 %v453
    %552 = vmatpush1.msra.mxu0 %v452
    %553 = vmatprep.subr.mxu0 %v449
    %554 = vmatpush1.msra.mxu0 %v448
    %555 = vmatprep.subr.mxu0 %v445
    %556 = vmatpush1.msra.mxu0 %v444
    %557 = vmatprep.subr.mxu0 %v441
    %558 = vmatpush1.msra.mxu0 %v440
    %559 = vmatprep.subr.mxu0 %v437
    %560 = vmatpush1.msra.mxu0 %v436
    %561 = vmatprep.subr.mxu0 0.0
    %562 = vmatpush2.msra.mxu0 0.0
    %563 = vmatprep.subr.mxu0 0.0
    %564 = vmatpush2.msra.mxu0 0.0
    %565 = vmatprep.subr.mxu0 0.0
    %566 = vmatpush2.msra.mxu0 0.0
    %567 = vmatprep.subr.mxu0 0.0
    %568 = vmatpush2.msra.mxu0 0.0
    %569 = vmatprep.subr.mxu0 0.0
    %570 = vmatpush2.msra.mxu0 0.0
    %571 = vmatprep.subr.mxu0 0.0
    %572 = vmatpush2.msra.mxu0 0.0
    %573 = vmatprep.subr.mxu0 0.0
    %574 = vmatpush2.msra.mxu0 0.0
    %575 = vmatprep.subr.mxu0 0.0
    %576 = vmatpush2.msra.mxu0 0.0
    %577 = vmatprep.subr.mxu0 0.0
    %578 = vmatpush2.msra.mxu0 0.0
    %579 = vmatprep.subr.mxu0 0.0
    %580 = vmatpush2.msra.mxu0 0.0
    %581 = vmatprep.subr.mxu0 0.0
    %582 = vmatpush2.msra.mxu0 0.0
    %583 = vmatprep.subr.mxu0 0.0
    %584 = vmatpush2.msra.mxu0 0.0
    %585 = vmatprep.subr.mxu0 0.0
    %586 = vmatpush2.msra.mxu0 0.0
    %587 = vmatprep.subr.mxu0 0.0
    %588 = vmatpush2.msra.mxu0 0.0
    %589 = vmatprep.subr.mxu0 0.0
    %590 = vmatpush2.msra.mxu0 0.0
    %591 = vmatprep.subr.mxu0 0.0
    %592 = vmatpush2.msra.mxu0 0.0
    %593 = vmatprep.mubr.f32.mxu0 0.0
    %594 = vmatmul.mubr.f32.gmra.mxu0 %v527
    %v595 = vpop.f32.mrf.mxu0
    %v596 = vadd.f32 0.0, %v595
    %v597 = vpop.f32.mrf.mxu0
    %v598 = vadd.f32 0.0, %v597
    %599 = vdwg.mxu0
    %600 = vmatprep.subr.mxu0 %v499
    %601 = vmatpush1.msra.mxu0 %v498
    %602 = vmatprep.subr.mxu0 %v495
    %603 = vmatpush1.msra.mxu0 %v494
    %604 = vmatprep.subr.mxu0 %v491
    %605 = vmatpush1.msra.mxu0 %v490
    %606 = vmatprep.subr.mxu0 %v487
    %607 = vmatpush1.msra.mxu0 %v486
    %608 = vmatprep.subr.mxu0 %v483
    %609 = vmatpush1.msra.mxu0 %v482
    %610 = vmatprep.subr.mxu0 %v479
    %611 = vmatpush1.msra.mxu0 %v478
    %612 = vmatprep.subr.mxu0 %v475
    %613 = vmatpush1.msra.mxu0 %v474
    %614 = vmatprep.subr.mxu0 %v471
    %615 = vmatpush1.msra.mxu0 %v470
    %616 = vmatprep.subr.mxu0 %v467
    %617 = vmatpush1.msra.mxu0 %v466
    %618 = vmatprep.subr.mxu0 %v463
    %619 = vmatpush1.msra.mxu0 %v462
    %620 = vmatprep.subr.mxu0 %v459
    %621 = vmatpush1.msra.mxu0 %v458
    %622 = vmatprep.subr.mxu0 %v455
    %623 = vmatpush1.msra.mxu0 %v454
    %624 = vmatprep.subr.mxu0 %v451
    %625 = vmatpush1.msra.mxu0 %v450
    %626 = vmatprep.subr.mxu0 %v447
    %627 = vmatpush1.msra.mxu0 %v446
    %628 = vmatprep.subr.mxu0 %v443
    %629 = vmatpush1.msra.mxu0 %v442
    %630 = vmatprep.subr.mxu0 %v439
    %631 = vmatpush1.msra.mxu0 %v438
    %632 = vmatprep.subr.mxu0 0.0
    %633 = vmatpush2.msra.mxu0 0.0
    %634 = vmatprep.subr.mxu0 0.0
    %635 = vmatpush2.msra.mxu0 0.0
    %636 = vmatprep.subr.mxu0 0.0
    %637 = vmatpush2.msra.mxu0 0.0
    %638 = vmatprep.subr.mxu0 0.0
    %639 = vmatpush2.msra.mxu0 0.0
    %640 = vmatprep.subr.mxu0 0.0
    %641 = vmatpush2.msra.mxu0 0.0
    %642 = vmatprep.subr.mxu0 0.0
    %643 = vmatpush2.msra.mxu0 0.0
    %644 = vmatprep.subr.mxu0 0.0
    %645 = vmatpush2.msra.mxu0 0.0
    %646 = vmatprep.subr.mxu0 0.0
    %647 = vmatpush2.msra.mxu0 0.0
    %648 = vmatprep.subr.mxu0 0.0
    %649 = vmatpush2.msra.mxu0 0.0
    %650 = vmatprep.subr.mxu0 0.0
    %651 = vmatpush2.msra.mxu0 0.0
    %652 = vmatprep.subr.mxu0 0.0
    %653 = vmatpush2.msra.mxu0 0.0
    %654 = vmatprep.subr.mxu0 0.0
    %655 = vmatpush2.msra.mxu0 0.0
    %656 = vmatprep.subr.mxu0 0.0
    %657 = vmatpush2.msra.mxu0 0.0
    %658 = vmatprep.subr.mxu0 0.0
    %659 = vmatpush2.msra.mxu0 0.0
    %660 = vmatprep.subr.mxu0 0.0
    %661 = vmatpush2.msra.mxu0 0.0
    %662 = vmatprep.subr.mxu0 0.0
    %663 = vmatpush2.msra.mxu0 0.0
    %664 = vmatprep.mubr.f32.mxu0 0.0
    %665 = vmatmul.mubr.f32.gmra.mxu0 %v527
    %v666 = vpop.f32.mrf.mxu0
    %v667 = vadd.f32 0.0, %v666
    %v668 = vpop.f32.mrf.mxu0
    %v669 = vadd.f32 0.0, %v668
    %670 = vdwg.mxu0
    %v675 = vcombine.low %v596, %v598
    %v676 = vcombine.low %v667, %v669
    %v678 = vunpack.c.l.s4 1966171168
    %v679 = vunpack.c.0.s8 %v678
    %v680 = vlaneseq
    %v681 = vshrl.u32 %v680, 7
    %v682 = vsub.s32 %v679, %v681
    %v683 = vrot.slane %v675, %v682
    %v685 = vunpack.c.l.s4 1966171168
    %v686 = vunpack.c.0.s8 %v685
    %v687 = vlaneseq
    %v688 = vshrl.u32 %v687, 7
    %v689 = vsub.s32 %v686, %v688
    %v690 = vrot.slane %v676, %v689
    %v691 = vcombine.low %v683, %v690
    %v692 = vcombine.high %v683, %v690
    %v694 = vunpack.c.l.s4 1966171168
    %v695 = vunpack.c.0.s8 %v694
    %v696 = vlaneseq
    %v697 = vshrl.u32 %v696, 7
    %v698 = vsub.s32 %v695, %v697
    %v699 = vrot.slane %v691, %v698
    %v701 = vunpack.c.l.s4 1966171168
    %v702 = vunpack.c.0.s8 %v701
    %v703 = vlaneseq
    %v704 = vshrl.u32 %v703, 7
    %v705 = vsub.s32 %v702, %v704
    %v706 = vrot.slane %v692, %v705
    %v707 = vcombine.high %v699, %v699
    %v708 = vcombine.high %v706, %v706
    %v713 = vadd.f32 %v429, %v699
    %v714 = vadd.f32 %v431, %v706
    %v715 = vadd.f32 %v433, %v707
    %v716 = vadd.f32 %v435, %v708
    %v717 = vxor.u32 %v713, 2147483648
    %v718 = vxor.u32 %v714, 2147483648
    %v719 = vxor.u32 %v715, 2147483648
    %v720 = vxor.u32 %v716, 2147483648
    %v721 = vmul.f32 %v717, 1.442695
    %v722 = vpow.pop %v721
    %v723 = vmul.f32 %v718, 1.442695
    %v724 = vpow.pop %v723
    %v725 = vmul.f32 %v719, 1.442695
    %v726 = vpow.pop %v725
    %v727 = vmul.f32 %v720, 1.442695
    %v728 = vpow.pop %v727
    %v729 = vadd.f32 %v722, 1.0
    %v730 = vadd.f32 %v724, 1.0
    %v731 = vadd.f32 %v726, 1.0
    %v732 = vadd.f32 %v728, 1.0
    %v733 = vrcp.pop %v729
    %v734 = vmul.f32 1.0, %v733
    %v735 = vrcp.pop %v730
    %v736 = vmul.f32 1.0, %v735
    %v737 = vrcp.pop %v731
    %v738 = vmul.f32 1.0, %v737
    %v739 = vrcp.pop %v732
    %v740 = vmul.f32 1.0, %v739
    %v745 = vrot.slane %v713, 1
    %v746 = vrot.slane %v714, 1
    %v747 = vrot.slane %v715, 1
    %v748 = vrot.slane %v716, 1
    %v753 = vxor.u32 %v745, 2147483648
    %v754 = vxor.u32 %v746, 2147483648
    %v755 = vxor.u32 %v747, 2147483648
    %v756 = vxor.u32 %v748, 2147483648
    %v757 = vmul.f32 %v753, 1.442695
    %v758 = vpow.pop %v757
    %v759 = vmul.f32 %v754, 1.442695
    %v760 = vpow.pop %v759
    %v761 = vmul.f32 %v755, 1.442695
    %v762 = vpow.pop %v761
    %v763 = vmul.f32 %v756, 1.442695
    %v764 = vpow.pop %v763
    %v765 = vadd.f32 %v758, 1.0
    %v766 = vadd.f32 %v760, 1.0
    %v767 = vadd.f32 %v762, 1.0
    %v768 = vadd.f32 %v764, 1.0
    %v769 = vrcp.pop %v765
    %v770 = vmul.f32 1.0, %v769
    %v771 = vrcp.pop %v766
    %v772 = vmul.f32 1.0, %v771
    %v773 = vrcp.pop %v767
    %v774 = vmul.f32 1.0, %v773
    %v775 = vrcp.pop %v768
    %v776 = vmul.f32 1.0, %v775
    %v777 = vrot.slane %v713, 2
    %v778 = vrot.slane %v714, 2
    %v779 = vrot.slane %v715, 2
    %v780 = vrot.slane %v716, 2
    %v785 = vtanh.pop %v777
    %v786 = vtanh.pop %v778
    %v787 = vtanh.pop %v779
    %v788 = vtanh.pop %v780
    %v789 = vrot.slane %v713, 3
    %v790 = vrot.slane %v714, 3
    %v791 = vrot.slane %v715, 3
    %v792 = vrot.slane %v716, 3
    %v797 = vxor.u32 %v789, 2147483648
    %v798 = vxor.u32 %v790, 2147483648
    %v799 = vxor.u32 %v791, 2147483648
    %v800 = vxor.u32 %v792, 2147483648
    %v801 = vmul.f32 %v797, 1.442695
    %v802 = vpow.pop %v801
    %v803 = vmul.f32 %v798, 1.442695
    %v804 = vpow.pop %v803
    %v805 = vmul.f32 %v799, 1.442695
    %v806 = vpow.pop %v805
    %v807 = vmul.f32 %v800, 1.442695
    %v808 = vpow.pop %v807
    %v809 = vadd.f32 %v802, 1.0
    %v810 = vadd.f32 %v804, 1.0
    %v811 = vadd.f32 %v806, 1.0
    %v812 = vadd.f32 %v808, 1.0
    %v813 = vrcp.pop %v809
    %v814 = vmul.f32 1.0, %v813
    %v815 = vrcp.pop %v810
    %v816 = vmul.f32 1.0, %v815
    %v817 = vrcp.pop %v811
    %v818 = vmul.f32 1.0, %v817
    %v819 = vrcp.pop %v812
    %v820 = vmul.f32 1.0, %v819
    %v821 = vmul.f32 %v770, %v411
    %v822 = vmul.f32 %v772, %v412
    %v823 = vmul.f32 %v774, %v413
    %v824 = vmul.f32 %v776, %v414
    %v825 = vmul.f32 %v734, %v785
    %v826 = vmul.f32 %v736, %v786
    %v827 = vmul.f32 %v738, %v787
    %v828 = vmul.f32 %v740, %v788
    %v829 = vadd.f32 %v821, %v825
    %v830 = vadd.f32 %v822, %v826
    %v831 = vadd.f32 %v823, %v827
    %v832 = vadd.f32 %v824, %v828
    %v833 = vtanh.pop %v829
    %v834 = vtanh.pop %v830
    %v835 = vtanh.pop %v831
    %v836 = vtanh.pop %v832
    %v837 = vmul.f32 %v814, %v833
    %v838 = vmul.f32 %v816, %v834
    %v839 = vmul.f32 %v818, %v835
    %v840 = vmul.f32 %v820, %v836
    %841 = vst.msk [vmem:[#allocation7 + $0x1] sm:$0x1] %vm423, %v837
    %842 = vst.msk [vmem:[#allocation7 + $0x9] sm:$0x1] %vm423, %v838
    %843 = vst.msk [vmem:[#allocation7 + $0x11] sm:$0x1] %vm423, %v839
    %844 = vst.msk [vmem:[#allocation7 + $0x19] sm:$0x1] %vm423, %v840
    %s845 = scalar_lea.vmem [#allocation2], 2
    %v846 = vld [vmem:[%s845] ss:$8 sm:$0xf]
    %s847 = scalar_lea.vmem [#allocation2], 34
    %v848 = vld [vmem:[%s847] ss:$8 sm:$0xf]
    %s849 = scalar_lea.vmem [#allocation2], 66
    %v850 = vld [vmem:[%s849] ss:$8 sm:$0xf]
    %s851 = scalar_lea.vmem [#allocation2], 98
    %v852 = vld [vmem:[%s851] ss:$8 sm:$0xf]
    %v853 = vld [vmem:[#allocation5] sm:$0xff]
    %v854 = vld [vmem:[#allocation5 + $0x8] sm:$0xff]
    %v855 = vld [vmem:[#allocation5 + $0x10] sm:$0xff]
    %v856 = vld [vmem:[#allocation5 + $0x18] sm:$0xff]
    %v857 = vld [vmem:[#allocation5 + $0x20] sm:$0xff]
    %v858 = vld [vmem:[#allocation5 + $0x28] sm:$0xff]
    %v859 = vld [vmem:[#allocation5 + $0x30] sm:$0xff]
    %v860 = vld [vmem:[#allocation5 + $0x38] sm:$0xff]
    %v861 = vld [vmem:[#allocation5 + $0x40] sm:$0xff]
    %v862 = vld [vmem:[#allocation5 + $0x48] sm:$0xff]
    %v863 = vld [vmem:[#allocation5 + $0x50] sm:$0xff]
    %v864 = vld [vmem:[#allocation5 + $0x58] sm:$0xff]
    %v865 = vld [vmem:[#allocation5 + $0x60] sm:$0xff]
    %v866 = vld [vmem:[#allocation5 + $0x68] sm:$0xff]
    %v867 = vld [vmem:[#allocation5 + $0x70] sm:$0xff]
    %v868 = vld [vmem:[#allocation5 + $0x78] sm:$0xff]
    %v869 = vld [vmem:[#allocation5 + $0x80] sm:$0xff]
    %v870 = vld [vmem:[#allocation5 + $0x88] sm:$0xff]
    %v871 = vld [vmem:[#allocation5 + $0x90] sm:$0xff]
    %v872 = vld [vmem:[#allocation5 + $0x98] sm:$0xff]
    %v873 = vld [vmem:[#allocation5 + $0xa0] sm:$0xff]
    %v874 = vld [vmem:[#allocation5 + $0xa8] sm:$0xff]
    %v875 = vld [vmem:[#allocation5 + $0xb0] sm:$0xff]
    %v876 = vld [vmem:[#allocation5 + $0xb8] sm:$0xff]
    %v877 = vld [vmem:[#allocation5 + $0xc0] sm:$0xff]
    %v878 = vld [vmem:[#allocation5 + $0xc8] sm:$0xff]
    %v879 = vld [vmem:[#allocation5 + $0xd0] sm:$0xff]
    %v880 = vld [vmem:[#allocation5 + $0xd8] sm:$0xff]
    %v881 = vld [vmem:[#allocation5 + $0xe0] sm:$0xff]
    %v882 = vld [vmem:[#allocation5 + $0xe8] sm:$0xff]
    %v883 = vld [vmem:[#allocation5 + $0xf0] sm:$0xff]
    %v884 = vld [vmem:[#allocation5 + $0xf8] sm:$0xff]
    %v885 = vld [vmem:[#allocation5 + $0x100] sm:$0xff]
    %v886 = vld [vmem:[#allocation5 + $0x108] sm:$0xff]
    %v887 = vld [vmem:[#allocation5 + $0x110] sm:$0xff]
    %v888 = vld [vmem:[#allocation5 + $0x118] sm:$0xff]
    %v889 = vld [vmem:[#allocation5 + $0x120] sm:$0xff]
    %v890 = vld [vmem:[#allocation5 + $0x128] sm:$0xff]
    %v891 = vld [vmem:[#allocation5 + $0x130] sm:$0xff]
    %v892 = vld [vmem:[#allocation5 + $0x138] sm:$0xff]
    %v893 = vld [vmem:[#allocation5 + $0x140] sm:$0xff]
    %v894 = vld [vmem:[#allocation5 + $0x148] sm:$0xff]
    %v895 = vld [vmem:[#allocation5 + $0x150] sm:$0xff]
    %v896 = vld [vmem:[#allocation5 + $0x158] sm:$0xff]
    %v897 = vld [vmem:[#allocation5 + $0x160] sm:$0xff]
    %v898 = vld [vmem:[#allocation5 + $0x168] sm:$0xff]
    %v899 = vld [vmem:[#allocation5 + $0x170] sm:$0xff]
    %v900 = vld [vmem:[#allocation5 + $0x178] sm:$0xff]
    %v901 = vld [vmem:[#allocation5 + $0x180] sm:$0xff]
    %v902 = vld [vmem:[#allocation5 + $0x188] sm:$0xff]
    %v903 = vld [vmem:[#allocation5 + $0x190] sm:$0xff]
    %v904 = vld [vmem:[#allocation5 + $0x198] sm:$0xff]
    %v905 = vld [vmem:[#allocation5 + $0x1a0] sm:$0xff]
    %v906 = vld [vmem:[#allocation5 + $0x1a8] sm:$0xff]
    %v907 = vld [vmem:[#allocation5 + $0x1b0] sm:$0xff]
    %v908 = vld [vmem:[#allocation5 + $0x1b8] sm:$0xff]
    %v909 = vld [vmem:[#allocation5 + $0x1c0] sm:$0xff]
    %v910 = vld [vmem:[#allocation5 + $0x1c8] sm:$0xff]
    %v911 = vld [vmem:[#allocation5 + $0x1d0] sm:$0xff]
    %v912 = vld [vmem:[#allocation5 + $0x1d8] sm:$0xff]
    %v913 = vld [vmem:[#allocation5 + $0x1e0] sm:$0xff]
    %v914 = vld [vmem:[#allocation5 + $0x1e8] sm:$0xff]
    %v915 = vld [vmem:[#allocation5 + $0x1f0] sm:$0xff]
    %v916 = vld [vmem:[#allocation5 + $0x1f8] sm:$0xff]
    %v921 = vcombine.low %v837, %v838
    %v922 = vcombine.low %v839, %v840
    %v924 = vunpack.c.l.s4 1966171168
    %v925 = vunpack.c.0.s8 %v924
    %v926 = vlaneseq
    %v927 = vshrl.u32 %v926, 7
    %v928 = vsub.s32 %v925, %v927
    %v929 = vrot.slane %v921, %v928
    %v931 = vunpack.c.l.s4 1966171168
    %v932 = vunpack.c.0.s8 %v931
    %v933 = vlaneseq
    %v934 = vshrl.u32 %v933, 7
    %v935 = vsub.s32 %v932, %v934
    %v936 = vrot.slane %v922, %v935
    %v937 = vcombine.low %v929, %v936
    %v939 = vunpack.c.l.s4 1966171168
    %v940 = vunpack.c.0.s8 %v939
    %v941 = vlaneseq
    %v942 = vshrl.u32 %v941, 7
    %v943 = vsub.s32 %v940, %v942
    %v944 = vrot.slane %v937, %v943
    %946 = vmatprep.subr.mxu0 %v914
    %947 = vmatpush1.msra.mxu0 %v913
    %948 = vmatprep.subr.mxu0 %v910
    %949 = vmatpush1.msra.mxu0 %v909
    %950 = vmatprep.subr.mxu0 %v906
    %951 = vmatpush1.msra.mxu0 %v905
    %952 = vmatprep.subr.mxu0 %v902
    %953 = vmatpush1.msra.mxu0 %v901
    %954 = vmatprep.subr.mxu0 %v898
    %955 = vmatpush1.msra.mxu0 %v897
    %956 = vmatprep.subr.mxu0 %v894
    %957 = vmatpush1.msra.mxu0 %v893
    %958 = vmatprep.subr.mxu0 %v890
    %959 = vmatpush1.msra.mxu0 %v889
    %960 = vmatprep.subr.mxu0 %v886
    %961 = vmatpush1.msra.mxu0 %v885
    %962 = vmatprep.subr.mxu0 %v882
    %963 = vmatpush1.msra.mxu0 %v881
    %964 = vmatprep.subr.mxu0 %v878
    %965 = vmatpush1.msra.mxu0 %v877
    %966 = vmatprep.subr.mxu0 %v874
    %967 = vmatpush1.msra.mxu0 %v873
    %968 = vmatprep.subr.mxu0 %v870
    %969 = vmatpush1.msra.mxu0 %v869
    %970 = vmatprep.subr.mxu0 %v866
    %971 = vmatpush1.msra.mxu0 %v865
    %972 = vmatprep.subr.mxu0 %v862
    %973 = vmatpush1.msra.mxu0 %v861
    %974 = vmatprep.subr.mxu0 %v858
    %975 = vmatpush1.msra.mxu0 %v857
    %976 = vmatprep.subr.mxu0 %v854
    %977 = vmatpush1.msra.mxu0 %v853
    %978 = vmatprep.subr.mxu0 0.0
    %979 = vmatpush2.msra.mxu0 0.0
    %980 = vmatprep.subr.mxu0 0.0
    %981 = vmatpush2.msra.mxu0 0.0
    %982 = vmatprep.subr.mxu0 0.0
    %983 = vmatpush2.msra.mxu0 0.0
    %984 = vmatprep.subr.mxu0 0.0
    %985 = vmatpush2.msra.mxu0 0.0
    %986 = vmatprep.subr.mxu0 0.0
    %987 = vmatpush2.msra.mxu0 0.0
    %988 = vmatprep.subr.mxu0 0.0
    %989 = vmatpush2.msra.mxu0 0.0
    %990 = vmatprep.subr.mxu0 0.0
    %991 = vmatpush2.msra.mxu0 0.0
    %992 = vmatprep.subr.mxu0 0.0
    %993 = vmatpush2.msra.mxu0 0.0
    %994 = vmatprep.subr.mxu0 0.0
    %995 = vmatpush2.msra.mxu0 0.0
    %996 = vmatprep.subr.mxu0 0.0
    %997 = vmatpush2.msra.mxu0 0.0
    %998 = vmatprep.subr.mxu0 0.0
    %999 = vmatpush2.msra.mxu0 0.0
    %1000 = vmatprep.subr.mxu0 0.0
    %1001 = vmatpush2.msra.mxu0 0.0
    %1002 = vmatprep.subr.mxu0 0.0
    %1003 = vmatpush2.msra.mxu0 0.0
    %1004 = vmatprep.subr.mxu0 0.0
    %1005 = vmatpush2.msra.mxu0 0.0
    %1006 = vmatprep.subr.mxu0 0.0
    %1007 = vmatpush2.msra.mxu0 0.0
    %1008 = vmatprep.subr.mxu0 0.0
    %1009 = vmatpush2.msra.mxu0 0.0
    %1010 = vmatprep.mubr.f32.mxu0 0.0
    %1011 = vmatmul.mubr.f32.gmra.mxu0 %v944
    %v1012 = vpop.f32.mrf.mxu0
    %v1013 = vadd.f32 0.0, %v1012
    %v1014 = vpop.f32.mrf.mxu0
    %v1015 = vadd.f32 0.0, %v1014
    %1016 = vdwg.mxu0
    %1017 = vmatprep.subr.mxu0 %v916
    %1018 = vmatpush1.msra.mxu0 %v915
    %1019 = vmatprep.subr.mxu0 %v912
    %1020 = vmatpush1.msra.mxu0 %v911
    %1021 = vmatprep.subr.mxu0 %v908
    %1022 = vmatpush1.msra.mxu0 %v907
    %1023 = vmatprep.subr.mxu0 %v904
    %1024 = vmatpush1.msra.mxu0 %v903
    %1025 = vmatprep.subr.mxu0 %v900
    %1026 = vmatpush1.msra.mxu0 %v899
    %1027 = vmatprep.subr.mxu0 %v896
    %1028 = vmatpush1.msra.mxu0 %v895
    %1029 = vmatprep.subr.mxu0 %v892
    %1030 = vmatpush1.msra.mxu0 %v891
    %1031 = vmatprep.subr.mxu0 %v888
    %1032 = vmatpush1.msra.mxu0 %v887
    %1033 = vmatprep.subr.mxu0 %v884
    %1034 = vmatpush1.msra.mxu0 %v883
    %1035 = vmatprep.subr.mxu0 %v880
    %1036 = vmatpush1.msra.mxu0 %v879
    %1037 = vmatprep.subr.mxu0 %v876
    %1038 = vmatpush1.msra.mxu0 %v875
    %1039 = vmatprep.subr.mxu0 %v872
    %1040 = vmatpush1.msra.mxu0 %v871
    %1041 = vmatprep.subr.mxu0 %v868
    %1042 = vmatpush1.msra.mxu0 %v867
    %1043 = vmatprep.subr.mxu0 %v864
    %1044 = vmatpush1.msra.mxu0 %v863
    %1045 = vmatprep.subr.mxu0 %v860
    %1046 = vmatpush1.msra.mxu0 %v859
    %1047 = vmatprep.subr.mxu0 %v856
    %1048 = vmatpush1.msra.mxu0 %v855
    %1049 = vmatprep.subr.mxu0 0.0
    %1050 = vmatpush2.msra.mxu0 0.0
    %1051 = vmatprep.subr.mxu0 0.0
    %1052 = vmatpush2.msra.mxu0 0.0
    %1053 = vmatprep.subr.mxu0 0.0
    %1054 = vmatpush2.msra.mxu0 0.0
    %1055 = vmatprep.subr.mxu0 0.0
    %1056 = vmatpush2.msra.mxu0 0.0
    %1057 = vmatprep.subr.mxu0 0.0
    %1058 = vmatpush2.msra.mxu0 0.0
    %1059 = vmatprep.subr.mxu0 0.0
    %1060 = vmatpush2.msra.mxu0 0.0
    %1061 = vmatprep.subr.mxu0 0.0
    %1062 = vmatpush2.msra.mxu0 0.0
    %1063 = vmatprep.subr.mxu0 0.0
    %1064 = vmatpush2.msra.mxu0 0.0
    %1065 = vmatprep.subr.mxu0 0.0
    %1066 = vmatpush2.msra.mxu0 0.0
    %1067 = vmatprep.subr.mxu0 0.0
    %1068 = vmatpush2.msra.mxu0 0.0
    %1069 = vmatprep.subr.mxu0 0.0
    %1070 = vmatpush2.msra.mxu0 0.0
    %1071 = vmatprep.subr.mxu0 0.0
    %1072 = vmatpush2.msra.mxu0 0.0
    %1073 = vmatprep.subr.mxu0 0.0
    %1074 = vmatpush2.msra.mxu0 0.0
    %1075 = vmatprep.subr.mxu0 0.0
    %1076 = vmatpush2.msra.mxu0 0.0
    %1077 = vmatprep.subr.mxu0 0.0
    %1078 = vmatpush2.msra.mxu0 0.0
    %1079 = vmatprep.subr.mxu0 0.0
    %1080 = vmatpush2.msra.mxu0 0.0
    %1081 = vmatprep.mubr.f32.mxu0 0.0
    %1082 = vmatmul.mubr.f32.gmra.mxu0 %v944
    %v1083 = vpop.f32.mrf.mxu0
    %v1084 = vadd.f32 0.0, %v1083
    %v1085 = vpop.f32.mrf.mxu0
    %v1086 = vadd.f32 0.0, %v1085
    %1087 = vdwg.mxu0
    %v1092 = vcombine.low %v1013, %v1015
    %v1093 = vcombine.low %v1084, %v1086
    %v1095 = vunpack.c.l.s4 1966171168
    %v1096 = vunpack.c.0.s8 %v1095
    %v1097 = vlaneseq
    %v1098 = vshrl.u32 %v1097, 7
    %v1099 = vsub.s32 %v1096, %v1098
    %v1100 = vrot.slane %v1092, %v1099
    %v1102 = vunpack.c.l.s4 1966171168
    %v1103 = vunpack.c.0.s8 %v1102
    %v1104 = vlaneseq
    %v1105 = vshrl.u32 %v1104, 7
    %v1106 = vsub.s32 %v1103, %v1105
    %v1107 = vrot.slane %v1093, %v1106
    %v1108 = vcombine.low %v1100, %v1107
    %v1109 = vcombine.high %v1100, %v1107
    %v1111 = vunpack.c.l.s4 1966171168
    %v1112 = vunpack.c.0.s8 %v1111
    %v1113 = vlaneseq
    %v1114 = vshrl.u32 %v1113, 7
    %v1115 = vsub.s32 %v1112, %v1114
    %v1116 = vrot.slane %v1108, %v1115
    %v1118 = vunpack.c.l.s4 1966171168
    %v1119 = vunpack.c.0.s8 %v1118
    %v1120 = vlaneseq
    %v1121 = vshrl.u32 %v1120, 7
    %v1122 = vsub.s32 %v1119, %v1121
    %v1123 = vrot.slane %v1109, %v1122
    %v1124 = vcombine.high %v1116, %v1116
    %v1125 = vcombine.high %v1123, %v1123
    %v1130 = vadd.f32 %v846, %v1116
    %v1131 = vadd.f32 %v848, %v1123
    %v1132 = vadd.f32 %v850, %v1124
    %v1133 = vadd.f32 %v852, %v1125
    %v1134 = vxor.u32 %v1130, 2147483648
    %v1135 = vxor.u32 %v1131, 2147483648
    %v1136 = vxor.u32 %v1132, 2147483648
    %v1137 = vxor.u32 %v1133, 2147483648
    %v1138 = vmul.f32 %v1134, 1.442695
    %v1139 = vpow.pop %v1138
    %v1140 = vmul.f32 %v1135, 1.442695
    %v1141 = vpow.pop %v1140
    %v1142 = vmul.f32 %v1136, 1.442695
    %v1143 = vpow.pop %v1142
    %v1144 = vmul.f32 %v1137, 1.442695
    %v1145 = vpow.pop %v1144
    %v1146 = vadd.f32 %v1139, 1.0
    %v1147 = vadd.f32 %v1141, 1.0
    %v1148 = vadd.f32 %v1143, 1.0
    %v1149 = vadd.f32 %v1145, 1.0
    %v1150 = vrcp.pop %v1146
    %v1151 = vmul.f32 1.0, %v1150
    %v1152 = vrcp.pop %v1147
    %v1153 = vmul.f32 1.0, %v1152
    %v1154 = vrcp.pop %v1148
    %v1155 = vmul.f32 1.0, %v1154
    %v1156 = vrcp.pop %v1149
    %v1157 = vmul.f32 1.0, %v1156
    %v1162 = vrot.slane %v1130, 1
    %v1163 = vrot.slane %v1131, 1
    %v1164 = vrot.slane %v1132, 1
    %v1165 = vrot.slane %v1133, 1
    %v1170 = vxor.u32 %v1162, 2147483648
    %v1171 = vxor.u32 %v1163, 2147483648
    %v1172 = vxor.u32 %v1164, 2147483648
    %v1173 = vxor.u32 %v1165, 2147483648
    %v1174 = vmul.f32 %v1170, 1.442695
    %v1175 = vpow.pop %v1174
    %v1176 = vmul.f32 %v1171, 1.442695
    %v1177 = vpow.pop %v1176
    %v1178 = vmul.f32 %v1172, 1.442695
    %v1179 = vpow.pop %v1178
    %v1180 = vmul.f32 %v1173, 1.442695
    %v1181 = vpow.pop %v1180
    %v1182 = vadd.f32 %v1175, 1.0
    %v1183 = vadd.f32 %v1177, 1.0
    %v1184 = vadd.f32 %v1179, 1.0
    %v1185 = vadd.f32 %v1181, 1.0
    %v1186 = vrcp.pop %v1182
    %v1187 = vmul.f32 1.0, %v1186
    %v1188 = vrcp.pop %v1183
    %v1189 = vmul.f32 1.0, %v1188
    %v1190 = vrcp.pop %v1184
    %v1191 = vmul.f32 1.0, %v1190
    %v1192 = vrcp.pop %v1185
    %v1193 = vmul.f32 1.0, %v1192
    %v1194 = vrot.slane %v1130, 2
    %v1195 = vrot.slane %v1131, 2
    %v1196 = vrot.slane %v1132, 2
    %v1197 = vrot.slane %v1133, 2
    %v1202 = vtanh.pop %v1194
    %v1203 = vtanh.pop %v1195
    %v1204 = vtanh.pop %v1196
    %v1205 = vtanh.pop %v1197
    %v1206 = vrot.slane %v1130, 3
    %v1207 = vrot.slane %v1131, 3
    %v1208 = vrot.slane %v1132, 3
    %v1209 = vrot.slane %v1133, 3
    %v1214 = vxor.u32 %v1206, 2147483648
    %v1215 = vxor.u32 %v1207, 2147483648
    %v1216 = vxor.u32 %v1208, 2147483648
    %v1217 = vxor.u32 %v1209, 2147483648
    %v1218 = vmul.f32 %v1214, 1.442695
    %v1219 = vpow.pop %v1218
    %v1220 = vmul.f32 %v1215, 1.442695
    %v1221 = vpow.pop %v1220
    %v1222 = vmul.f32 %v1216, 1.442695
    %v1223 = vpow.pop %v1222
    %v1224 = vmul.f32 %v1217, 1.442695
    %v1225 = vpow.pop %v1224
    %v1226 = vadd.f32 %v1219, 1.0
    %v1227 = vadd.f32 %v1221, 1.0
    %v1228 = vadd.f32 %v1223, 1.0
    %v1229 = vadd.f32 %v1225, 1.0
    %v1230 = vrcp.pop %v1226
    %v1231 = vmul.f32 1.0, %v1230
    %v1232 = vrcp.pop %v1227
    %v1233 = vmul.f32 1.0, %v1232
    %v1234 = vrcp.pop %v1228
    %v1235 = vmul.f32 1.0, %v1234
    %v1236 = vrcp.pop %v1229
    %v1237 = vmul.f32 1.0, %v1236
    %v1238 = vmul.f32 %v1187, %v829
    %v1239 = vmul.f32 %v1189, %v830
    %v1240 = vmul.f32 %v1191, %v831
    %v1241 = vmul.f32 %v1193, %v832
    %v1242 = vmul.f32 %v1151, %v1202
    %v1243 = vmul.f32 %v1153, %v1203
    %v1244 = vmul.f32 %v1155, %v1204
    %v1245 = vmul.f32 %v1157, %v1205
    %v1246 = vadd.f32 %v1238, %v1242
    %v1247 = vadd.f32 %v1239, %v1243
    %v1248 = vadd.f32 %v1240, %v1244
    %v1249 = vadd.f32 %v1241, %v1245
    %v1250 = vtanh.pop %v1246
    %v1251 = vtanh.pop %v1247
    %v1252 = vtanh.pop %v1248
    %v1253 = vtanh.pop %v1249
    %v1254 = vmul.f32 %v1231, %v1250
    %v1255 = vmul.f32 %v1233, %v1251
    %v1256 = vmul.f32 %v1235, %v1252
    %v1257 = vmul.f32 %v1237, %v1253
    %1258 = vst.msk [vmem:[#allocation7 + $0x2] sm:$0x1] %vm423, %v1254
    %1259 = vst.msk [vmem:[#allocation7 + $0xa] sm:$0x1] %vm423, %v1255
    %1260 = vst.msk [vmem:[#allocation7 + $0x12] sm:$0x1] %vm423, %v1256
    %1261 = vst.msk [vmem:[#allocation7 + $0x1a] sm:$0x1] %vm423, %v1257
    %s1262 = scalar_lea.vmem [#allocation2], 3
    %v1263 = vld [vmem:[%s1262] ss:$8 sm:$0xf]
    %s1264 = scalar_lea.vmem [#allocation2], 35
    %v1265 = vld [vmem:[%s1264] ss:$8 sm:$0xf]
    %s1266 = scalar_lea.vmem [#allocation2], 67
    %v1267 = vld [vmem:[%s1266] ss:$8 sm:$0xf]
    %s1268 = scalar_lea.vmem [#allocation2], 99
    %v1269 = vld [vmem:[%s1268] ss:$8 sm:$0xf]
    %v1270 = vld [vmem:[#allocation5] sm:$0xff]
    %v1271 = vld [vmem:[#allocation5 + $0x8] sm:$0xff]
    %v1272 = vld [vmem:[#allocation5 + $0x10] sm:$0xff]
    %v1273 = vld [vmem:[#allocation5 + $0x18] sm:$0xff]
    %v1274 = vld [vmem:[#allocation5 + $0x20] sm:$0xff]
    %v1275 = vld [vmem:[#allocation5 + $0x28] sm:$0xff]
    %v1276 = vld [vmem:[#allocation5 + $0x30] sm:$0xff]
    %v1277 = vld [vmem:[#allocation5 + $0x38] sm:$0xff]
    %v1278 = vld [vmem:[#allocation5 + $0x40] sm:$0xff]
    %v1279 = vld [vmem:[#allocation5 + $0x48] sm:$0xff]
    %v1280 = vld [vmem:[#allocation5 + $0x50] sm:$0xff]
    %v1281 = vld [vmem:[#allocation5 + $0x58] sm:$0xff]
    %v1282 = vld [vmem:[#allocation5 + $0x60] sm:$0xff]
    %v1283 = vld [vmem:[#allocation5 + $0x68] sm:$0xff]
    %v1284 = vld [vmem:[#allocation5 + $0x70] sm:$0xff]
    %v1285 = vld [vmem:[#allocation5 + $0x78] sm:$0xff]
    %v1286 = vld [vmem:[#allocation5 + $0x80] sm:$0xff]
    %v1287 = vld [vmem:[#allocation5 + $0x88] sm:$0xff]
    %v1288 = vld [vmem:[#allocation5 + $0x90] sm:$0xff]
    %v1289 = vld [vmem:[#allocation5 + $0x98] sm:$0xff]
    %v1290 = vld [vmem:[#allocation5 + $0xa0] sm:$0xff]
    %v1291 = vld [vmem:[#allocation5 + $0xa8] sm:$0xff]
    %v1292 = vld [vmem:[#allocation5 + $0xb0] sm:$0xff]
    %v1293 = vld [vmem:[#allocation5 + $0xb8] sm:$0xff]
    %v1294 = vld [vmem:[#allocation5 + $0xc0] sm:$0xff]
    %v1295 = vld [vmem:[#allocation5 + $0xc8] sm:$0xff]
    %v1296 = vld [vmem:[#allocation5 + $0xd0] sm:$0xff]
    %v1297 = vld [vmem:[#allocation5 + $0xd8] sm:$0xff]
    %v1298 = vld [vmem:[#allocation5 + $0xe0] sm:$0xff]
    %v1299 = vld [vmem:[#allocation5 + $0xe8] sm:$0xff]
    %v1300 = vld [vmem:[#allocation5 + $0xf0] sm:$0xff]
    %v1301 = vld [vmem:[#allocation5 + $0xf8] sm:$0xff]
    %v1302 = vld [vmem:[#allocation5 + $0x100] sm:$0xff]
    %v1303 = vld [vmem:[#allocation5 + $0x108] sm:$0xff]
    %v1304 = vld [vmem:[#allocation5 + $0x110] sm:$0xff]
    %v1305 = vld [vmem:[#allocation5 + $0x118] sm:$0xff]
    %v1306 = vld [vmem:[#allocation5 + $0x120] sm:$0xff]
    %v1307 = vld [vmem:[#allocation5 + $0x128] sm:$0xff]
    %v1308 = vld [vmem:[#allocation5 + $0x130] sm:$0xff]
    %v1309 = vld [vmem:[#allocation5 + $0x138] sm:$0xff]
    %v1310 = vld [vmem:[#allocation5 + $0x140] sm:$0xff]
    %v1311 = vld [vmem:[#allocation5 + $0x148] sm:$0xff]
    %v1312 = vld [vmem:[#allocation5 + $0x150] sm:$0xff]
    %v1313 = vld [vmem:[#allocation5 + $0x158] sm:$0xff]
    %v1314 = vld [vmem:[#allocation5 + $0x160] sm:$0xff]
    %v1315 = vld [vmem:[#allocation5 + $0x168] sm:$0xff]
    %v1316 = vld [vmem:[#allocation5 + $0x170] sm:$0xff]
    %v1317 = vld [vmem:[#allocation5 + $0x178] sm:$0xff]
    %v1318 = vld [vmem:[#allocation5 + $0x180] sm:$0xff]
    %v1319 = vld [vmem:[#allocation5 + $0x188] sm:$0xff]
    %v1320 = vld [vmem:[#allocation5 + $0x190] sm:$0xff]
    %v1321 = vld [vmem:[#allocation5 + $0x198] sm:$0xff]
    %v1322 = vld [vmem:[#allocation5 + $0x1a0] sm:$0xff]
    %v1323 = vld [vmem:[#allocation5 + $0x1a8] sm:$0xff]
    %v1324 = vld [vmem:[#allocation5 + $0x1b0] sm:$0xff]
    %v1325 = vld [vmem:[#allocation5 + $0x1b8] sm:$0xff]
    %v1326 = vld [vmem:[#allocation5 + $0x1c0] sm:$0xff]
    %v1327 = vld [vmem:[#allocation5 + $0x1c8] sm:$0xff]
    %v1328 = vld [vmem:[#allocation5 + $0x1d0] sm:$0xff]
    %v1329 = vld [vmem:[#allocation5 + $0x1d8] sm:$0xff]
    %v1330 = vld [vmem:[#allocation5 + $0x1e0] sm:$0xff]
    %v1331 = vld [vmem:[#allocation5 + $0x1e8] sm:$0xff]
    %v1332 = vld [vmem:[#allocation5 + $0x1f0] sm:$0xff]
    %v1333 = vld [vmem:[#allocation5 + $0x1f8] sm:$0xff]
    %v1338 = vcombine.low %v1254, %v1255
    %v1339 = vcombine.low %v1256, %v1257
    %v1341 = vunpack.c.l.s4 1966171168
    %v1342 = vunpack.c.0.s8 %v1341
    %v1343 = vlaneseq
    %v1344 = vshrl.u32 %v1343, 7
    %v1345 = vsub.s32 %v1342, %v1344
    %v1346 = vrot.slane %v1338, %v1345
    %v1348 = vunpack.c.l.s4 1966171168
    %v1349 = vunpack.c.0.s8 %v1348
    %v1350 = vlaneseq
    %v1351 = vshrl.u32 %v1350, 7
    %v1352 = vsub.s32 %v1349, %v1351
    %v1353 = vrot.slane %v1339, %v1352
    %v1354 = vcombine.low %v1346, %v1353
    %v1356 = vunpack.c.l.s4 1966171168
    %v1357 = vunpack.c.0.s8 %v1356
    %v1358 = vlaneseq
    %v1359 = vshrl.u32 %v1358, 7
    %v1360 = vsub.s32 %v1357, %v1359
    %v1361 = vrot.slane %v1354, %v1360
    %1363 = vmatprep.subr.mxu0 %v1331
    %1364 = vmatpush1.msra.mxu0 %v1330
    %1365 = vmatprep.subr.mxu0 %v1327
    %1366 = vmatpush1.msra.mxu0 %v1326
    %1367 = vmatprep.subr.mxu0 %v1323
    %1368 = vmatpush1.msra.mxu0 %v1322
    %1369 = vmatprep.subr.mxu0 %v1319
    %1370 = vmatpush1.msra.mxu0 %v1318
    %1371 = vmatprep.subr.mxu0 %v1315
    %1372 = vmatpush1.msra.mxu0 %v1314
    %1373 = vmatprep.subr.mxu0 %v1311
    %1374 = vmatpush1.msra.mxu0 %v1310
    %1375 = vmatprep.subr.mxu0 %v1307
    %1376 = vmatpush1.msra.mxu0 %v1306
    %1377 = vmatprep.subr.mxu0 %v1303
    %1378 = vmatpush1.msra.mxu0 %v1302
    %1379 = vmatprep.subr.mxu0 %v1299
    %1380 = vmatpush1.msra.mxu0 %v1298
    %1381 = vmatprep.subr.mxu0 %v1295
    %1382 = vmatpush1.msra.mxu0 %v1294
    %1383 = vmatprep.subr.mxu0 %v1291
    %1384 = vmatpush1.msra.mxu0 %v1290
    %1385 = vmatprep.subr.mxu0 %v1287
    %1386 = vmatpush1.msra.mxu0 %v1286
    %1387 = vmatprep.subr.mxu0 %v1283
    %1388 = vmatpush1.msra.mxu0 %v1282
    %1389 = vmatprep.subr.mxu0 %v1279
    %1390 = vmatpush1.msra.mxu0 %v1278
    %1391 = vmatprep.subr.mxu0 %v1275
    %1392 = vmatpush1.msra.mxu0 %v1274
    %1393 = vmatprep.subr.mxu0 %v1271
    %1394 = vmatpush1.msra.mxu0 %v1270
    %1395 = vmatprep.subr.mxu0 0.0
    %1396 = vmatpush2.msra.mxu0 0.0
    %1397 = vmatprep.subr.mxu0 0.0
    %1398 = vmatpush2.msra.mxu0 0.0
    %1399 = vmatprep.subr.mxu0 0.0
    %1400 = vmatpush2.msra.mxu0 0.0
    %1401 = vmatprep.subr.mxu0 0.0
    %1402 = vmatpush2.msra.mxu0 0.0
    %1403 = vmatprep.subr.mxu0 0.0
    %1404 = vmatpush2.msra.mxu0 0.0
    %1405 = vmatprep.subr.mxu0 0.0
    %1406 = vmatpush2.msra.mxu0 0.0
    %1407 = vmatprep.subr.mxu0 0.0
    %1408 = vmatpush2.msra.mxu0 0.0
    %1409 = vmatprep.subr.mxu0 0.0
    %1410 = vmatpush2.msra.mxu0 0.0
    %1411 = vmatprep.subr.mxu0 0.0
    %1412 = vmatpush2.msra.mxu0 0.0
    %1413 = vmatprep.subr.mxu0 0.0
    %1414 = vmatpush2.msra.mxu0 0.0
    %1415 = vmatprep.subr.mxu0 0.0
    %1416 = vmatpush2.msra.mxu0 0.0
    %1417 = vmatprep.subr.mxu0 0.0
    %1418 = vmatpush2.msra.mxu0 0.0
    %1419 = vmatprep.subr.mxu0 0.0
    %1420 = vmatpush2.msra.mxu0 0.0
    %1421 = vmatprep.subr.mxu0 0.0
    %1422 = vmatpush2.msra.mxu0 0.0
    %1423 = vmatprep.subr.mxu0 0.0
    %1424 = vmatpush2.msra.mxu0 0.0
    %1425 = vmatprep.subr.mxu0 0.0
    %1426 = vmatpush2.msra.mxu0 0.0
    %1427 = vmatprep.mubr.f32.mxu0 0.0
    %1428 = vmatmul.mubr.f32.gmra.mxu0 %v1361
    %v1429 = vpop.f32.mrf.mxu0
    %v1430 = vadd.f32 0.0, %v1429
    %v1431 = vpop.f32.mrf.mxu0
    %v1432 = vadd.f32 0.0, %v1431
    %1433 = vdwg.mxu0
    %1434 = vmatprep.subr.mxu0 %v1333
    %1435 = vmatpush1.msra.mxu0 %v1332
    %1436 = vmatprep.subr.mxu0 %v1329
    %1437 = vmatpush1.msra.mxu0 %v1328
    %1438 = vmatprep.subr.mxu0 %v1325
    %1439 = vmatpush1.msra.mxu0 %v1324
    %1440 = vmatprep.subr.mxu0 %v1321
    %1441 = vmatpush1.msra.mxu0 %v1320
    %1442 = vmatprep.subr.mxu0 %v1317
    %1443 = vmatpush1.msra.mxu0 %v1316
    %1444 = vmatprep.subr.mxu0 %v1313
    %1445 = vmatpush1.msra.mxu0 %v1312
    %1446 = vmatprep.subr.mxu0 %v1309
    %1447 = vmatpush1.msra.mxu0 %v1308
    %1448 = vmatprep.subr.mxu0 %v1305
    %1449 = vmatpush1.msra.mxu0 %v1304
    %1450 = vmatprep.subr.mxu0 %v1301
    %1451 = vmatpush1.msra.mxu0 %v1300
    %1452 = vmatprep.subr.mxu0 %v1297
    %1453 = vmatpush1.msra.mxu0 %v1296
    %1454 = vmatprep.subr.mxu0 %v1293
    %1455 = vmatpush1.msra.mxu0 %v1292
    %1456 = vmatprep.subr.mxu0 %v1289
    %1457 = vmatpush1.msra.mxu0 %v1288
    %1458 = vmatprep.subr.mxu0 %v1285
    %1459 = vmatpush1.msra.mxu0 %v1284
    %1460 = vmatprep.subr.mxu0 %v1281
    %1461 = vmatpush1.msra.mxu0 %v1280
    %1462 = vmatprep.subr.mxu0 %v1277
    %1463 = vmatpush1.msra.mxu0 %v1276
    %1464 = vmatprep.subr.mxu0 %v1273
    %1465 = vmatpush1.msra.mxu0 %v1272
    %1466 = vmatprep.subr.mxu0 0.0
    %1467 = vmatpush2.msra.mxu0 0.0
    %1468 = vmatprep.subr.mxu0 0.0
    %1469 = vmatpush2.msra.mxu0 0.0
    %1470 = vmatprep.subr.mxu0 0.0
    %1471 = vmatpush2.msra.mxu0 0.0
    %1472 = vmatprep.subr.mxu0 0.0
    %1473 = vmatpush2.msra.mxu0 0.0
    %1474 = vmatprep.subr.mxu0 0.0
    %1475 = vmatpush2.msra.mxu0 0.0
    %1476 = vmatprep.subr.mxu0 0.0
    %1477 = vmatpush2.msra.mxu0 0.0
    %1478 = vmatprep.subr.mxu0 0.0
    %1479 = vmatpush2.msra.mxu0 0.0
    %1480 = vmatprep.subr.mxu0 0.0
    %1481 = vmatpush2.msra.mxu0 0.0
    %1482 = vmatprep.subr.mxu0 0.0
    %1483 = vmatpush2.msra.mxu0 0.0
    %1484 = vmatprep.subr.mxu0 0.0
    %1485 = vmatpush2.msra.mxu0 0.0
    %1486 = vmatprep.subr.mxu0 0.0
    %1487 = vmatpush2.msra.mxu0 0.0
    %1488 = vmatprep.subr.mxu0 0.0
    %1489 = vmatpush2.msra.mxu0 0.0
    %1490 = vmatprep.subr.mxu0 0.0
    %1491 = vmatpush2.msra.mxu0 0.0
    %1492 = vmatprep.subr.mxu0 0.0
    %1493 = vmatpush2.msra.mxu0 0.0
    %1494 = vmatprep.subr.mxu0 0.0
    %1495 = vmatpush2.msra.mxu0 0.0
    %1496 = vmatprep.subr.mxu0 0.0
    %1497 = vmatpush2.msra.mxu0 0.0
    %1498 = vmatprep.mubr.f32.mxu0 0.0
    %1499 = vmatmul.mubr.f32.gmra.mxu0 %v1361
    %v1500 = vpop.f32.mrf.mxu0
    %v1501 = vadd.f32 0.0, %v1500
    %v1502 = vpop.f32.mrf.mxu0
    %v1503 = vadd.f32 0.0, %v1502
    %1504 = vdwg.mxu0
    %v1509 = vcombine.low %v1430, %v1432
    %v1510 = vcombine.low %v1501, %v1503
    %v1512 = vunpack.c.l.s4 1966171168
    %v1513 = vunpack.c.0.s8 %v1512
    %v1514 = vlaneseq
    %v1515 = vshrl.u32 %v1514, 7
    %v1516 = vsub.s32 %v1513, %v1515
    %v1517 = vrot.slane %v1509, %v1516
    %v1519 = vunpack.c.l.s4 1966171168
    %v1520 = vunpack.c.0.s8 %v1519
    %v1521 = vlaneseq
    %v1522 = vshrl.u32 %v1521, 7
    %v1523 = vsub.s32 %v1520, %v1522
    %v1524 = vrot.slane %v1510, %v1523
    %v1525 = vcombine.low %v1517, %v1524
    %v1526 = vcombine.high %v1517, %v1524
    %v1528 = vunpack.c.l.s4 1966171168
    %v1529 = vunpack.c.0.s8 %v1528
    %v1530 = vlaneseq
    %v1531 = vshrl.u32 %v1530, 7
    %v1532 = vsub.s32 %v1529, %v1531
    %v1533 = vrot.slane %v1525, %v1532
    %v1535 = vunpack.c.l.s4 1966171168
    %v1536 = vunpack.c.0.s8 %v1535
    %v1537 = vlaneseq
    %v1538 = vshrl.u32 %v1537, 7
    %v1539 = vsub.s32 %v1536, %v1538
    %v1540 = vrot.slane %v1526, %v1539
    %v1541 = vcombine.high %v1533, %v1533
    %v1542 = vcombine.high %v1540, %v1540
    %v1547 = vadd.f32 %v1263, %v1533
    %v1548 = vadd.f32 %v1265, %v1540
    %v1549 = vadd.f32 %v1267, %v1541
    %v1550 = vadd.f32 %v1269, %v1542
    %v1551 = vxor.u32 %v1547, 2147483648
    %v1552 = vxor.u32 %v1548, 2147483648
    %v1553 = vxor.u32 %v1549, 2147483648
    %v1554 = vxor.u32 %v1550, 2147483648
    %v1555 = vmul.f32 %v1551, 1.442695
    %v1556 = vpow.pop %v1555
    %v1557 = vmul.f32 %v1552, 1.442695
    %v1558 = vpow.pop %v1557
    %v1559 = vmul.f32 %v1553, 1.442695
    %v1560 = vpow.pop %v1559
    %v1561 = vmul.f32 %v1554, 1.442695
    %v1562 = vpow.pop %v1561
    %v1563 = vadd.f32 %v1556, 1.0
    %v1564 = vadd.f32 %v1558, 1.0
    %v1565 = vadd.f32 %v1560, 1.0
    %v1566 = vadd.f32 %v1562, 1.0
    %v1567 = vrcp.pop %v1563
    %v1568 = vmul.f32 1.0, %v1567
    %v1569 = vrcp.pop %v1564
    %v1570 = vmul.f32 1.0, %v1569
    %v1571 = vrcp.pop %v1565
    %v1572 = vmul.f32 1.0, %v1571
    %v1573 = vrcp.pop %v1566
    %v1574 = vmul.f32 1.0, %v1573
    %v1579 = vrot.slane %v1547, 1
    %v1580 = vrot.slane %v1548, 1
    %v1581 = vrot.slane %v1549, 1
    %v1582 = vrot.slane %v1550, 1
    %v1587 = vxor.u32 %v1579, 2147483648
    %v1588 = vxor.u32 %v1580, 2147483648
    %v1589 = vxor.u32 %v1581, 2147483648
    %v1590 = vxor.u32 %v1582, 2147483648
    %v1591 = vmul.f32 %v1587, 1.442695
    %v1592 = vpow.pop %v1591
    %v1593 = vmul.f32 %v1588, 1.442695
    %v1594 = vpow.pop %v1593
    %v1595 = vmul.f32 %v1589, 1.442695
    %v1596 = vpow.pop %v1595
    %v1597 = vmul.f32 %v1590, 1.442695
    %v1598 = vpow.pop %v1597
    %v1599 = vadd.f32 %v1592, 1.0
    %v1600 = vadd.f32 %v1594, 1.0
    %v1601 = vadd.f32 %v1596, 1.0
    %v1602 = vadd.f32 %v1598, 1.0
    %v1603 = vrcp.pop %v1599
    %v1604 = vmul.f32 1.0, %v1603
    %v1605 = vrcp.pop %v1600
    %v1606 = vmul.f32 1.0, %v1605
    %v1607 = vrcp.pop %v1601
    %v1608 = vmul.f32 1.0, %v1607
    %v1609 = vrcp.pop %v1602
    %v1610 = vmul.f32 1.0, %v1609
    %v1611 = vrot.slane %v1547, 2
    %v1612 = vrot.slane %v1548, 2
    %v1613 = vrot.slane %v1549, 2
    %v1614 = vrot.slane %v1550, 2
    %v1619 = vtanh.pop %v1611
    %v1620 = vtanh.pop %v1612
    %v1621 = vtanh.pop %v1613
    %v1622 = vtanh.pop %v1614
    %v1623 = vrot.slane %v1547, 3
    %v1624 = vrot.slane %v1548, 3
    %v1625 = vrot.slane %v1549, 3
    %v1626 = vrot.slane %v1550, 3
    %v1631 = vxor.u32 %v1623, 2147483648
    %v1632 = vxor.u32 %v1624, 2147483648
    %v1633 = vxor.u32 %v1625, 2147483648
    %v1634 = vxor.u32 %v1626, 2147483648
    %v1635 = vmul.f32 %v1631, 1.442695
    %v1636 = vpow.pop %v1635
    %v1637 = vmul.f32 %v1632, 1.442695
    %v1638 = vpow.pop %v1637
    %v1639 = vmul.f32 %v1633, 1.442695
    %v1640 = vpow.pop %v1639
    %v1641 = vmul.f32 %v1634, 1.442695
    %v1642 = vpow.pop %v1641
    %v1643 = vadd.f32 %v1636, 1.0
    %v1644 = vadd.f32 %v1638, 1.0
    %v1645 = vadd.f32 %v1640, 1.0
    %v1646 = vadd.f32 %v1642, 1.0
    %v1647 = vrcp.pop %v1643
    %v1648 = vmul.f32 1.0, %v1647
    %v1649 = vrcp.pop %v1644
    %v1650 = vmul.f32 1.0, %v1649
    %v1651 = vrcp.pop %v1645
    %v1652 = vmul.f32 1.0, %v1651
    %v1653 = vrcp.pop %v1646
    %v1654 = vmul.f32 1.0, %v1653
    %v1655 = vmul.f32 %v1604, %v1246
    %v1656 = vmul.f32 %v1606, %v1247
    %v1657 = vmul.f32 %v1608, %v1248
    %v1658 = vmul.f32 %v1610, %v1249
    %v1659 = vmul.f32 %v1568, %v1619
    %v1660 = vmul.f32 %v1570, %v1620
    %v1661 = vmul.f32 %v1572, %v1621
    %v1662 = vmul.f32 %v1574, %v1622
    %v1663 = vadd.f32 %v1655, %v1659
    %v1664 = vadd.f32 %v1656, %v1660
    %v1665 = vadd.f32 %v1657, %v1661
    %v1666 = vadd.f32 %v1658, %v1662
    %v1667 = vtanh.pop %v1663
    %v1668 = vtanh.pop %v1664
    %v1669 = vtanh.pop %v1665
    %v1670 = vtanh.pop %v1666
    %v1671 = vmul.f32 %v1648, %v1667
    %v1672 = vmul.f32 %v1650, %v1668
    %v1673 = vmul.f32 %v1652, %v1669
    %v1674 = vmul.f32 %v1654, %v1670
    %1675 = vst.msk [vmem:[#allocation7 + $0x3] sm:$0x1] %vm423, %v1671
    %1676 = vst.msk [vmem:[#allocation7 + $0xb] sm:$0x1] %vm423, %v1672
    %1677 = vst.msk [vmem:[#allocation7 + $0x13] sm:$0x1] %vm423, %v1673
    %1678 = vst.msk [vmem:[#allocation7 + $0x1b] sm:$0x1] %vm423, %v1674
    %s1679 = scalar_lea.vmem [#allocation2], 4
    %v1680 = vld [vmem:[%s1679] ss:$8 sm:$0xf]
    %s1681 = scalar_lea.vmem [#allocation2], 36
    %v1682 = vld [vmem:[%s1681] ss:$8 sm:$0xf]
    %s1683 = scalar_lea.vmem [#allocation2], 68
    %v1684 = vld [vmem:[%s1683] ss:$8 sm:$0xf]
    %s1685 = scalar_lea.vmem [#allocation2], 100
    %v1686 = vld [vmem:[%s1685] ss:$8 sm:$0xf]
    %v1687 = vld [vmem:[#allocation5] sm:$0xff]
    %v1688 = vld [vmem:[#allocation5 + $0x8] sm:$0xff]
    %v1689 = vld [vmem:[#allocation5 + $0x10] sm:$0xff]
    %v1690 = vld [vmem:[#allocation5 + $0x18] sm:$0xff]
    %v1691 = vld [vmem:[#allocation5 + $0x20] sm:$0xff]
    %v1692 = vld [vmem:[#allocation5 + $0x28] sm:$0xff]
    %v1693 = vld [vmem:[#allocation5 + $0x30] sm:$0xff]
    %v1694 = vld [vmem:[#allocation5 + $0x38] sm:$0xff]
    %v1695 = vld [vmem:[#allocation5 + $0x40] sm:$0xff]
    %v1696 = vld [vmem:[#allocation5 + $0x48] sm:$0xff]
    %v1697 = vld [vmem:[#allocation5 + $0x50] sm:$0xff]
    %v1698 = vld [vmem:[#allocation5 + $0x58] sm:$0xff]
    %v1699 = vld [vmem:[#allocation5 + $0x60] sm:$0xff]
    %v1700 = vld [vmem:[#allocation5 + $0x68] sm:$0xff]
    %v1701 = vld [vmem:[#allocation5 + $0x70] sm:$0xff]
    %v1702 = vld [vmem:[#allocation5 + $0x78] sm:$0xff]
    %v1703 = vld [vmem:[#allocation5 + $0x80] sm:$0xff]
    %v1704 = vld [vmem:[#allocation5 + $0x88] sm:$0xff]
    %v1705 = vld [vmem:[#allocation5 + $0x90] sm:$0xff]
    %v1706 = vld [vmem:[#allocation5 + $0x98] sm:$0xff]
    %v1707 = vld [vmem:[#allocation5 + $0xa0] sm:$0xff]
    %v1708 = vld [vmem:[#allocation5 + $0xa8] sm:$0xff]
    %v1709 = vld [vmem:[#allocation5 + $0xb0] sm:$0xff]
    %v1710 = vld [vmem:[#allocation5 + $0xb8] sm:$0xff]
    %v1711 = vld [vmem:[#allocation5 + $0xc0] sm:$0xff]
    %v1712 = vld [vmem:[#allocation5 + $0xc8] sm:$0xff]
    %v1713 = vld [vmem:[#allocation5 + $0xd0] sm:$0xff]
    %v1714 = vld [vmem:[#allocation5 + $0xd8] sm:$0xff]
    %v1715 = vld [vmem:[#allocation5 + $0xe0] sm:$0xff]
    %v1716 = vld [vmem:[#allocation5 + $0xe8] sm:$0xff]
    %v1717 = vld [vmem:[#allocation5 + $0xf0] sm:$0xff]
    %v1718 = vld [vmem:[#allocation5 + $0xf8] sm:$0xff]
    %v1719 = vld [vmem:[#allocation5 + $0x100] sm:$0xff]
    %v1720 = vld [vmem:[#allocation5 + $0x108] sm:$0xff]
    %v1721 = vld [vmem:[#allocation5 + $0x110] sm:$0xff]
    %v1722 = vld [vmem:[#allocation5 + $0x118] sm:$0xff]
    %v1723 = vld [vmem:[#allocation5 + $0x120] sm:$0xff]
    %v1724 = vld [vmem:[#allocation5 + $0x128] sm:$0xff]
    %v1725 = vld [vmem:[#allocation5 + $0x130] sm:$0xff]
    %v1726 = vld [vmem:[#allocation5 + $0x138] sm:$0xff]
    %v1727 = vld [vmem:[#allocation5 + $0x140] sm:$0xff]
    %v1728 = vld [vmem:[#allocation5 + $0x148] sm:$0xff]
    %v1729 = vld [vmem:[#allocation5 + $0x150] sm:$0xff]
    %v1730 = vld [vmem:[#allocation5 + $0x158] sm:$0xff]
    %v1731 = vld [vmem:[#allocation5 + $0x160] sm:$0xff]
    %v1732 = vld [vmem:[#allocation5 + $0x168] sm:$0xff]
    %v1733 = vld [vmem:[#allocation5 + $0x170] sm:$0xff]
    %v1734 = vld [vmem:[#allocation5 + $0x178] sm:$0xff]
    %v1735 = vld [vmem:[#allocation5 + $0x180] sm:$0xff]
    %v1736 = vld [vmem:[#allocation5 + $0x188] sm:$0xff]
    %v1737 = vld [vmem:[#allocation5 + $0x190] sm:$0xff]
    %v1738 = vld [vmem:[#allocation5 + $0x198] sm:$0xff]
    %v1739 = vld [vmem:[#allocation5 + $0x1a0] sm:$0xff]
    %v1740 = vld [vmem:[#allocation5 + $0x1a8] sm:$0xff]
    %v1741 = vld [vmem:[#allocation5 + $0x1b0] sm:$0xff]
    %v1742 = vld [vmem:[#allocation5 + $0x1b8] sm:$0xff]
    %v1743 = vld [vmem:[#allocation5 + $0x1c0] sm:$0xff]
    %v1744 = vld [vmem:[#allocation5 + $0x1c8] sm:$0xff]
    %v1745 = vld [vmem:[#allocation5 + $0x1d0] sm:$0xff]
    %v1746 = vld [vmem:[#allocation5 + $0x1d8] sm:$0xff]
    %v1747 = vld [vmem:[#allocation5 + $0x1e0] sm:$0xff]
    %v1748 = vld [vmem:[#allocation5 + $0x1e8] sm:$0xff]
    %v1749 = vld [vmem:[#allocation5 + $0x1f0] sm:$0xff]
    %v1750 = vld [vmem:[#allocation5 + $0x1f8] sm:$0xff]
    %v1755 = vcombine.low %v1671, %v1672
    %v1756 = vcombine.low %v1673, %v1674
    %v1758 = vunpack.c.l.s4 1966171168
    %v1759 = vunpack.c.0.s8 %v1758
    %v1760 = vlaneseq
    %v1761 = vshrl.u32 %v1760, 7
    %v1762 = vsub.s32 %v1759, %v1761
    %v1763 = vrot.slane %v1755, %v1762
    %v1765 = vunpack.c.l.s4 1966171168
    %v1766 = vunpack.c.0.s8 %v1765
    %v1767 = vlaneseq
    %v1768 = vshrl.u32 %v1767, 7
    %v1769 = vsub.s32 %v1766, %v1768
    %v1770 = vrot.slane %v1756, %v1769
    %v1771 = vcombine.low %v1763, %v1770
    %v1773 = vunpack.c.l.s4 1966171168
    %v1774 = vunpack.c.0.s8 %v1773
    %v1775 = vlaneseq
    %v1776 = vshrl.u32 %v1775, 7
    %v1777 = vsub.s32 %v1774, %v1776
    %v1778 = vrot.slane %v1771, %v1777
    %1780 = vmatprep.subr.mxu0 %v1748
    %1781 = vmatpush1.msra.mxu0 %v1747
    %1782 = vmatprep.subr.mxu0 %v1744
    %1783 = vmatpush1.msra.mxu0 %v1743
    %1784 = vmatprep.subr.mxu0 %v1740
    %1785 = vmatpush1.msra.mxu0 %v1739
    %1786 = vmatprep.subr.mxu0 %v1736
    %1787 = vmatpush1.msra.mxu0 %v1735
    %1788 = vmatprep.subr.mxu0 %v1732
    %1789 = vmatpush1.msra.mxu0 %v1731
    %1790 = vmatprep.subr.mxu0 %v1728
    %1791 = vmatpush1.msra.mxu0 %v1727
    %1792 = vmatprep.subr.mxu0 %v1724
    %1793 = vmatpush1.msra.mxu0 %v1723
    %1794 = vmatprep.subr.mxu0 %v1720
    %1795 = vmatpush1.msra.mxu0 %v1719
    %1796 = vmatprep.subr.mxu0 %v1716
    %1797 = vmatpush1.msra.mxu0 %v1715
    %1798 = vmatprep.subr.mxu0 %v1712
    %1799 = vmatpush1.msra.mxu0 %v1711
    %1800 = vmatprep.subr.mxu0 %v1708
    %1801 = vmatpush1.msra.mxu0 %v1707
    %1802 = vmatprep.subr.mxu0 %v1704
    %1803 = vmatpush1.msra.mxu0 %v1703
    %1804 = vmatprep.subr.mxu0 %v1700
    %1805 = vmatpush1.msra.mxu0 %v1699
    %1806 = vmatprep.subr.mxu0 %v1696
    %1807 = vmatpush1.msra.mxu0 %v1695
    %1808 = vmatprep.subr.mxu0 %v1692
    %1809 = vmatpush1.msra.mxu0 %v1691
    %1810 = vmatprep.subr.mxu0 %v1688
    %1811 = vmatpush1.msra.mxu0 %v1687
    %1812 = vmatprep.subr.mxu0 0.0
    %1813 = vmatpush2.msra.mxu0 0.0
    %1814 = vmatprep.subr.mxu0 0.0
    %1815 = vmatpush2.msra.mxu0 0.0
    %1816 = vmatprep.subr.mxu0 0.0
    %1817 = vmatpush2.msra.mxu0 0.0
    %1818 = vmatprep.subr.mxu0 0.0
    %1819 = vmatpush2.msra.mxu0 0.0
    %1820 = vmatprep.subr.mxu0 0.0
    %1821 = vmatpush2.msra.mxu0 0.0
    %1822 = vmatprep.subr.mxu0 0.0
    %1823 = vmatpush2.msra.mxu0 0.0
    %1824 = vmatprep.subr.mxu0 0.0
    %1825 = vmatpush2.msra.mxu0 0.0
    %1826 = vmatprep.subr.mxu0 0.0
    %1827 = vmatpush2.msra.mxu0 0.0
    %1828 = vmatprep.subr.mxu0 0.0
    %1829 = vmatpush2.msra.mxu0 0.0
    %1830 = vmatprep.subr.mxu0 0.0
    %1831 = vmatpush2.msra.mxu0 0.0
    %1832 = vmatprep.subr.mxu0 0.0
    %1833 = vmatpush2.msra.mxu0 0.0
    %1834 = vmatprep.subr.mxu0 0.0
    %1835 = vmatpush2.msra.mxu0 0.0
    %1836 = vmatprep.subr.mxu0 0.0
    %1837 = vmatpush2.msra.mxu0 0.0
    %1838 = vmatprep.subr.mxu0 0.0
    %1839 = vmatpush2.msra.mxu0 0.0
    %1840 = vmatprep.subr.mxu0 0.0
    %1841 = vmatpush2.msra.mxu0 0.0
    %1842 = vmatprep.subr.mxu0 0.0
    %1843 = vmatpush2.msra.mxu0 0.0
    %1844 = vmatprep.mubr.f32.mxu0 0.0
    %1845 = vmatmul.mubr.f32.gmra.mxu0 %v1778
    %v1846 = vpop.f32.mrf.mxu0
    %v1847 = vadd.f32 0.0, %v1846
    %v1848 = vpop.f32.mrf.mxu0
    %v1849 = vadd.f32 0.0, %v1848
    %1850 = vdwg.mxu0
    %1851 = vmatprep.subr.mxu0 %v1750
    %1852 = vmatpush1.msra.mxu0 %v1749
    %1853 = vmatprep.subr.mxu0 %v1746
    %1854 = vmatpush1.msra.mxu0 %v1745
    %1855 = vmatprep.subr.mxu0 %v1742
    %1856 = vmatpush1.msra.mxu0 %v1741
    %1857 = vmatprep.subr.mxu0 %v1738
    %1858 = vmatpush1.msra.mxu0 %v1737
    %1859 = vmatprep.subr.mxu0 %v1734
    %1860 = vmatpush1.msra.mxu0 %v1733
    %1861 = vmatprep.subr.mxu0 %v1730
    %1862 = vmatpush1.msra.mxu0 %v1729
    %1863 = vmatprep.subr.mxu0 %v1726
    %1864 = vmatpush1.msra.mxu0 %v1725
    %1865 = vmatprep.subr.mxu0 %v1722
    %1866 = vmatpush1.msra.mxu0 %v1721
    %1867 = vmatprep.subr.mxu0 %v1718
    %1868 = vmatpush1.msra.mxu0 %v1717
    %1869 = vmatprep.subr.mxu0 %v1714
    %1870 = vmatpush1.msra.mxu0 %v1713
    %1871 = vmatprep.subr.mxu0 %v1710
    %1872 = vmatpush1.msra.mxu0 %v1709
    %1873 = vmatprep.subr.mxu0 %v1706
    %1874 = vmatpush1.msra.mxu0 %v1705
    %1875 = vmatprep.subr.mxu0 %v1702
    %1876 = vmatpush1.msra.mxu0 %v1701
    %1877 = vmatprep.subr.mxu0 %v1698
    %1878 = vmatpush1.msra.mxu0 %v1697
    %1879 = vmatprep.subr.mxu0 %v1694
    %1880 = vmatpush1.msra.mxu0 %v1693
    %1881 = vmatprep.subr.mxu0 %v1690
    %1882 = vmatpush1.msra.mxu0 %v1689
    %1883 = vmatprep.subr.mxu0 0.0
    %1884 = vmatpush2.msra.mxu0 0.0
    %1885 = vmatprep.subr.mxu0 0.0
    %1886 = vmatpush2.msra.mxu0 0.0
    %1887 = vmatprep.subr.mxu0 0.0
    %1888 = vmatpush2.msra.mxu0 0.0
    %1889 = vmatprep.subr.mxu0 0.0
    %1890 = vmatpush2.msra.mxu0 0.0
    %1891 = vmatprep.subr.mxu0 0.0
    %1892 = vmatpush2.msra.mxu0 0.0
    %1893 = vmatprep.subr.mxu0 0.0
    %1894 = vmatpush2.msra.mxu0 0.0
    %1895 = vmatprep.subr.mxu0 0.0
    %1896 = vmatpush2.msra.mxu0 0.0
    %1897 = vmatprep.subr.mxu0 0.0
    %1898 = vmatpush2.msra.mxu0 0.0
    %1899 = vmatprep.subr.mxu0 0.0
    %1900 = vmatpush2.msra.mxu0 0.0
    %1901 = vmatprep.subr.mxu0 0.0
    %1902 = vmatpush2.msra.mxu0 0.0
    %1903 = vmatprep.subr.mxu0 0.0
    %1904 = vmatpush2.msra.mxu0 0.0
    %1905 = vmatprep.subr.mxu0 0.0
    %1906 = vmatpush2.msra.mxu0 0.0
    %1907 = vmatprep.subr.mxu0 0.0
    %1908 = vmatpush2.msra.mxu0 0.0
    %1909 = vmatprep.subr.mxu0 0.0
    %1910 = vmatpush2.msra.mxu0 0.0
    %1911 = vmatprep.subr.mxu0 0.0
    %1912 = vmatpush2.msra.mxu0 0.0
    %1913 = vmatprep.subr.mxu0 0.0
    %1914 = vmatpush2.msra.mxu0 0.0
    %1915 = vmatprep.mubr.f32.mxu0 0.0
    %1916 = vmatmul.mubr.f32.gmra.mxu0 %v1778
    %v1917 = vpop.f32.mrf.mxu0
    %v1918 = vadd.f32 0.0, %v1917
    %v1919 = vpop.f32.mrf.mxu0
    %v1920 = vadd.f32 0.0, %v1919
    %1921 = vdwg.mxu0
    %v1926 = vcombine.low %v1847, %v1849
    %v1927 = vcombine.low %v1918, %v1920
    %v1929 = vunpack.c.l.s4 1966171168
    %v1930 = vunpack.c.0.s8 %v1929
    %v1931 = vlaneseq
    %v1932 = vshrl.u32 %v1931, 7
    %v1933 = vsub.s32 %v1930, %v1932
    %v1934 = vrot.slane %v1926, %v1933
    %v1936 = vunpack.c.l.s4 1966171168
    %v1937 = vunpack.c.0.s8 %v1936
    %v1938 = vlaneseq
    %v1939 = vshrl.u32 %v1938, 7
    %v1940 = vsub.s32 %v1937, %v1939
    %v1941 = vrot.slane %v1927, %v1940
    %v1942 = vcombine.low %v1934, %v1941
    %v1943 = vcombine.high %v1934, %v1941
    %v1945 = vunpack.c.l.s4 1966171168
    %v1946 = vunpack.c.0.s8 %v1945
    %v1947 = vlaneseq
    %v1948 = vshrl.u32 %v1947, 7
    %v1949 = vsub.s32 %v1946, %v1948
    %v1950 = vrot.slane %v1942, %v1949
    %v1952 = vunpack.c.l.s4 1966171168
    %v1953 = vunpack.c.0.s8 %v1952
    %v1954 = vlaneseq
    %v1955 = vshrl.u32 %v1954, 7
    %v1956 = vsub.s32 %v1953, %v1955
    %v1957 = vrot.slane %v1943, %v1956
    %v1958 = vcombine.high %v1950, %v1950
    %v1959 = vcombine.high %v1957, %v1957
    %v1964 = vadd.f32 %v1680, %v1950
    %v1965 = vadd.f32 %v1682, %v1957
    %v1966 = vadd.f32 %v1684, %v1958
    %v1967 = vadd.f32 %v1686, %v1959
    %v1968 = vxor.u32 %v1964, 2147483648
    %v1969 = vxor.u32 %v1965, 2147483648
    %v1970 = vxor.u32 %v1966, 2147483648
    %v1971 = vxor.u32 %v1967, 2147483648
    %v1972 = vmul.f32 %v1968, 1.442695
    %v1973 = vpow.pop %v1972
    %v1974 = vmul.f32 %v1969, 1.442695
    %v1975 = vpow.pop %v1974
    %v1976 = vmul.f32 %v1970, 1.442695
    %v1977 = vpow.pop %v1976
    %v1978 = vmul.f32 %v1971, 1.442695
    %v1979 = vpow.pop %v1978
    %v1980 = vadd.f32 %v1973, 1.0
    %v1981 = vadd.f32 %v1975, 1.0
    %v1982 = vadd.f32 %v1977, 1.0
    %v1983 = vadd.f32 %v1979, 1.0
    %v1984 = vrcp.pop %v1980
    %v1985 = vmul.f32 1.0, %v1984
    %v1986 = vrcp.pop %v1981
    %v1987 = vmul.f32 1.0, %v1986
    %v1988 = vrcp.pop %v1982
    %v1989 = vmul.f32 1.0, %v1988
    %v1990 = vrcp.pop %v1983
    %v1991 = vmul.f32 1.0, %v1990
    %v1996 = vrot.slane %v1964, 1
    %v1997 = vrot.slane %v1965, 1
    %v1998 = vrot.slane %v1966, 1
    %v1999 = vrot.slane %v1967, 1
    %v2004 = vxor.u32 %v1996, 2147483648
    %v2005 = vxor.u32 %v1997, 2147483648
    %v2006 = vxor.u32 %v1998, 2147483648
    %v2007 = vxor.u32 %v1999, 2147483648
    %v2008 = vmul.f32 %v2004, 1.442695
    %v2009 = vpow.pop %v2008
    %v2010 = vmul.f32 %v2005, 1.442695
    %v2011 = vpow.pop %v2010
    %v2012 = vmul.f32 %v2006, 1.442695
    %v2013 = vpow.pop %v2012
    %v2014 = vmul.f32 %v2007, 1.442695
    %v2015 = vpow.pop %v2014
    %v2016 = vadd.f32 %v2009, 1.0
    %v2017 = vadd.f32 %v2011, 1.0
    %v2018 = vadd.f32 %v2013, 1.0
    %v2019 = vadd.f32 %v2015, 1.0
    %v2020 = vrcp.pop %v2016
    %v2021 = vmul.f32 1.0, %v2020
    %v2022 = vrcp.pop %v2017
    %v2023 = vmul.f32 1.0, %v2022
    %v2024 = vrcp.pop %v2018
    %v2025 = vmul.f32 1.0, %v2024
    %v2026 = vrcp.pop %v2019
    %v2027 = vmul.f32 1.0, %v2026
    %v2028 = vrot.slane %v1964, 2
    %v2029 = vrot.slane %v1965, 2
    %v2030 = vrot.slane %v1966, 2
    %v2031 = vrot.slane %v1967, 2
    %v2036 = vtanh.pop %v2028
    %v2037 = vtanh.pop %v2029
    %v2038 = vtanh.pop %v2030
    %v2039 = vtanh.pop %v2031
    %v2040 = vrot.slane %v1964, 3
    %v2041 = vrot.slane %v1965, 3
    %v2042 = vrot.slane %v1966, 3
    %v2043 = vrot.slane %v1967, 3
    %v2048 = vxor.u32 %v2040, 2147483648
    %v2049 = vxor.u32 %v2041, 2147483648
    %v2050 = vxor.u32 %v2042, 2147483648
    %v2051 = vxor.u32 %v2043, 2147483648
    %v2052 = vmul.f32 %v2048, 1.442695
    %v2053 = vpow.pop %v2052
    %v2054 = vmul.f32 %v2049, 1.442695
    %v2055 = vpow.pop %v2054
    %v2056 = vmul.f32 %v2050, 1.442695
    %v2057 = vpow.pop %v2056
    %v2058 = vmul.f32 %v2051, 1.442695
    %v2059 = vpow.pop %v2058
    %v2060 = vadd.f32 %v2053, 1.0
    %v2061 = vadd.f32 %v2055, 1.0
    %v2062 = vadd.f32 %v2057, 1.0
    %v2063 = vadd.f32 %v2059, 1.0
    %v2064 = vrcp.pop %v2060
    %v2065 = vmul.f32 1.0, %v2064
    %v2066 = vrcp.pop %v2061
    %v2067 = vmul.f32 1.0, %v2066
    %v2068 = vrcp.pop %v2062
    %v2069 = vmul.f32 1.0, %v2068
    %v2070 = vrcp.pop %v2063
    %v2071 = vmul.f32 1.0, %v2070
    %v2072 = vmul.f32 %v2021, %v1663
    %v2073 = vmul.f32 %v2023, %v1664
    %v2074 = vmul.f32 %v2025, %v1665
    %v2075 = vmul.f32 %v2027, %v1666
    %v2076 = vmul.f32 %v1985, %v2036
    %v2077 = vmul.f32 %v1987, %v2037
    %v2078 = vmul.f32 %v1989, %v2038
    %v2079 = vmul.f32 %v1991, %v2039
    %v2080 = vadd.f32 %v2072, %v2076
    %v2081 = vadd.f32 %v2073, %v2077
    %v2082 = vadd.f32 %v2074, %v2078
    %v2083 = vadd.f32 %v2075, %v2079
    %v2084 = vtanh.pop %v2080
    %v2085 = vtanh.pop %v2081
    %v2086 = vtanh.pop %v2082
    %v2087 = vtanh.pop %v2083
    %v2088 = vmul.f32 %v2065, %v2084
    %v2089 = vmul.f32 %v2067, %v2085
    %v2090 = vmul.f32 %v2069, %v2086
    %v2091 = vmul.f32 %v2071, %v2087
    %2092 = vst.msk [vmem:[#allocation7 + $0x4] sm:$0x1] %vm423, %v2088
    %2093 = vst.msk [vmem:[#allocation7 + $0xc] sm:$0x1] %vm423, %v2089
    %2094 = vst.msk [vmem:[#allocation7 + $0x14] sm:$0x1] %vm423, %v2090
    %2095 = vst.msk [vmem:[#allocation7 + $0x1c] sm:$0x1] %vm423, %v2091
    %s2096 = scalar_lea.vmem [#allocation2], 5
    %v2097 = vld [vmem:[%s2096] ss:$8 sm:$0xf]
    %s2098 = scalar_lea.vmem [#allocation2], 37
    %v2099 = vld [vmem:[%s2098] ss:$8 sm:$0xf]
    %s2100 = scalar_lea.vmem [#allocation2], 69
    %v2101 = vld [vmem:[%s2100] ss:$8 sm:$0xf]
    %s2102 = scalar_lea.vmem [#allocation2], 101
    %v2103 = vld [vmem:[%s2102] ss:$8 sm:$0xf]
    %v2104 = vld [vmem:[#allocation5] sm:$0xff]
    %v2105 = vld [vmem:[#allocation5 + $0x8] sm:$0xff]
    %v2106 = vld [vmem:[#allocation5 + $0x10] sm:$0xff]
    %v2107 = vld [vmem:[#allocation5 + $0x18] sm:$0xff]
    %v2108 = vld [vmem:[#allocation5 + $0x20] sm:$0xff]
    %v2109 = vld [vmem:[#allocation5 + $0x28] sm:$0xff]
    %v2110 = vld [vmem:[#allocation5 + $0x30] sm:$0xff]
    %v2111 = vld [vmem:[#allocation5 + $0x38] sm:$0xff]
    %v2112 = vld [vmem:[#allocation5 + $0x40] sm:$0xff]
    %v2113 = vld [vmem:[#allocation5 + $0x48] sm:$0xff]
    %v2114 = vld [vmem:[#allocation5 + $0x50] sm:$0xff]
    %v2115 = vld [vmem:[#allocation5 + $0x58] sm:$0xff]
    %v2116 = vld [vmem:[#allocation5 + $0x60] sm:$0xff]
    %v2117 = vld [vmem:[#allocation5 + $0x68] sm:$0xff]
    %v2118 = vld [vmem:[#allocation5 + $0x70] sm:$0xff]
    %v2119 = vld [vmem:[#allocation5 + $0x78] sm:$0xff]
    %v2120 = vld [vmem:[#allocation5 + $0x80] sm:$0xff]
    %v2121 = vld [vmem:[#allocation5 + $0x88] sm:$0xff]
    %v2122 = vld [vmem:[#allocation5 + $0x90] sm:$0xff]
    %v2123 = vld [vmem:[#allocation5 + $0x98] sm:$0xff]
    %v2124 = vld [vmem:[#allocation5 + $0xa0] sm:$0xff]
    %v2125 = vld [vmem:[#allocation5 + $0xa8] sm:$0xff]
    %v2126 = vld [vmem:[#allocation5 + $0xb0] sm:$0xff]
    %v2127 = vld [vmem:[#allocation5 + $0xb8] sm:$0xff]
    %v2128 = vld [vmem:[#allocation5 + $0xc0] sm:$0xff]
    %v2129 = vld [vmem:[#allocation5 + $0xc8] sm:$0xff]
    %v2130 = vld [vmem:[#allocation5 + $0xd0] sm:$0xff]
    %v2131 = vld [vmem:[#allocation5 + $0xd8] sm:$0xff]
    %v2132 = vld [vmem:[#allocation5 + $0xe0] sm:$0xff]
    %v2133 = vld [vmem:[#allocation5 + $0xe8] sm:$0xff]
    %v2134 = vld [vmem:[#allocation5 + $0xf0] sm:$0xff]
    %v2135 = vld [vmem:[#allocation5 + $0xf8] sm:$0xff]
    %v2136 = vld [vmem:[#allocation5 + $0x100] sm:$0xff]
    %v2137 = vld [vmem:[#allocation5 + $0x108] sm:$0xff]
    %v2138 = vld [vmem:[#allocation5 + $0x110] sm:$0xff]
    %v2139 = vld [vmem:[#allocation5 + $0x118] sm:$0xff]
    %v2140 = vld [vmem:[#allocation5 + $0x120] sm:$0xff]
    %v2141 = vld [vmem:[#allocation5 + $0x128] sm:$0xff]
    %v2142 = vld [vmem:[#allocation5 + $0x130] sm:$0xff]
    %v2143 = vld [vmem:[#allocation5 + $0x138] sm:$0xff]
    %v2144 = vld [vmem:[#allocation5 + $0x140] sm:$0xff]
    %v2145 = vld [vmem:[#allocation5 + $0x148] sm:$0xff]
    %v2146 = vld [vmem:[#allocation5 + $0x150] sm:$0xff]
    %v2147 = vld [vmem:[#allocation5 + $0x158] sm:$0xff]
    %v2148 = vld [vmem:[#allocation5 + $0x160] sm:$0xff]
    %v2149 = vld [vmem:[#allocation5 + $0x168] sm:$0xff]
    %v2150 = vld [vmem:[#allocation5 + $0x170] sm:$0xff]
    %v2151 = vld [vmem:[#allocation5 + $0x178] sm:$0xff]
    %v2152 = vld [vmem:[#allocation5 + $0x180] sm:$0xff]
    %v2153 = vld [vmem:[#allocation5 + $0x188] sm:$0xff]
    %v2154 = vld [vmem:[#allocation5 + $0x190] sm:$0xff]
    %v2155 = vld [vmem:[#allocation5 + $0x198] sm:$0xff]
    %v2156 = vld [vmem:[#allocation5 + $0x1a0] sm:$0xff]
    %v2157 = vld [vmem:[#allocation5 + $0x1a8] sm:$0xff]
    %v2158 = vld [vmem:[#allocation5 + $0x1b0] sm:$0xff]
    %v2159 = vld [vmem:[#allocation5 + $0x1b8] sm:$0xff]
    %v2160 = vld [vmem:[#allocation5 + $0x1c0] sm:$0xff]
    %v2161 = vld [vmem:[#allocation5 + $0x1c8] sm:$0xff]
    %v2162 = vld [vmem:[#allocation5 + $0x1d0] sm:$0xff]
    %v2163 = vld [vmem:[#allocation5 + $0x1d8] sm:$0xff]
    %v2164 = vld [vmem:[#allocation5 + $0x1e0] sm:$0xff]
    %v2165 = vld [vmem:[#allocation5 + $0x1e8] sm:$0xff]
    %v2166 = vld [vmem:[#allocation5 + $0x1f0] sm:$0xff]
    %v2167 = vld [vmem:[#allocation5 + $0x1f8] sm:$0xff]
    %v2172 = vcombine.low %v2088, %v2089
    %v2173 = vcombine.low %v2090, %v2091
    %v2175 = vunpack.c.l.s4 1966171168
    %v2176 = vunpack.c.0.s8 %v2175
    %v2177 = vlaneseq
    %v2178 = vshrl.u32 %v2177, 7
    %v2179 = vsub.s32 %v2176, %v2178
    %v2180 = vrot.slane %v2172, %v2179
    %v2182 = vunpack.c.l.s4 1966171168
    %v2183 = vunpack.c.0.s8 %v2182
    %v2184 = vlaneseq
    %v2185 = vshrl.u32 %v2184, 7
    %v2186 = vsub.s32 %v2183, %v2185
    %v2187 = vrot.slane %v2173, %v2186
    %v2188 = vcombine.low %v2180, %v2187
    %v2190 = vunpack.c.l.s4 1966171168
    %v2191 = vunpack.c.0.s8 %v2190
    %v2192 = vlaneseq
    %v2193 = vshrl.u32 %v2192, 7
    %v2194 = vsub.s32 %v2191, %v2193
    %v2195 = vrot.slane %v2188, %v2194
    %2197 = vmatprep.subr.mxu0 %v2165
    %2198 = vmatpush1.msra.mxu0 %v2164
    %2199 = vmatprep.subr.mxu0 %v2161
    %2200 = vmatpush1.msra.mxu0 %v2160
    %2201 = vmatprep.subr.mxu0 %v2157
    %2202 = vmatpush1.msra.mxu0 %v2156
    %2203 = vmatprep.subr.mxu0 %v2153
    %2204 = vmatpush1.msra.mxu0 %v2152
    %2205 = vmatprep.subr.mxu0 %v2149
    %2206 = vmatpush1.msra.mxu0 %v2148
    %2207 = vmatprep.subr.mxu0 %v2145
    %2208 = vmatpush1.msra.mxu0 %v2144
    %2209 = vmatprep.subr.mxu0 %v2141
    %2210 = vmatpush1.msra.mxu0 %v2140
    %2211 = vmatprep.subr.mxu0 %v2137
    %2212 = vmatpush1.msra.mxu0 %v2136
    %2213 = vmatprep.subr.mxu0 %v2133
    %2214 = vmatpush1.msra.mxu0 %v2132
    %2215 = vmatprep.subr.mxu0 %v2129
    %2216 = vmatpush1.msra.mxu0 %v2128
    %2217 = vmatprep.subr.mxu0 %v2125
    %2218 = vmatpush1.msra.mxu0 %v2124
    %2219 = vmatprep.subr.mxu0 %v2121
    %2220 = vmatpush1.msra.mxu0 %v2120
    %2221 = vmatprep.subr.mxu0 %v2117
    %2222 = vmatpush1.msra.mxu0 %v2116
    %2223 = vmatprep.subr.mxu0 %v2113
    %2224 = vmatpush1.msra.mxu0 %v2112
    %2225 = vmatprep.subr.mxu0 %v2109
    %2226 = vmatpush1.msra.mxu0 %v2108
    %2227 = vmatprep.subr.mxu0 %v2105
    %2228 = vmatpush1.msra.mxu0 %v2104
    %2229 = vmatprep.subr.mxu0 0.0
    %2230 = vmatpush2.msra.mxu0 0.0
    %2231 = vmatprep.subr.mxu0 0.0
    %2232 = vmatpush2.msra.mxu0 0.0
    %2233 = vmatprep.subr.mxu0 0.0
    %2234 = vmatpush2.msra.mxu0 0.0
    %2235 = vmatprep.subr.mxu0 0.0
    %2236 = vmatpush2.msra.mxu0 0.0
    %2237 = vmatprep.subr.mxu0 0.0
    %2238 = vmatpush2.msra.mxu0 0.0
    %2239 = vmatprep.subr.mxu0 0.0
    %2240 = vmatpush2.msra.mxu0 0.0
    %2241 = vmatprep.subr.mxu0 0.0
    %2242 = vmatpush2.msra.mxu0 0.0
    %2243 = vmatprep.subr.mxu0 0.0
    %2244 = vmatpush2.msra.mxu0 0.0
    %2245 = vmatprep.subr.mxu0 0.0
    %2246 = vmatpush2.msra.mxu0 0.0
    %2247 = vmatprep.subr.mxu0 0.0
    %2248 = vmatpush2.msra.mxu0 0.0
    %2249 = vmatprep.subr.mxu0 0.0
    %2250 = vmatpush2.msra.mxu0 0.0
    %2251 = vmatprep.subr.mxu0 0.0
    %2252 = vmatpush2.msra.mxu0 0.0
    %2253 = vmatprep.subr.mxu0 0.0
    %2254 = vmatpush2.msra.mxu0 0.0
    %2255 = vmatprep.subr.mxu0 0.0
    %2256 = vmatpush2.msra.mxu0 0.0
    %2257 = vmatprep.subr.mxu0 0.0
    %2258 = vmatpush2.msra.mxu0 0.0
    %2259 = vmatprep.subr.mxu0 0.0
    %2260 = vmatpush2.msra.mxu0 0.0
    %2261 = vmatprep.mubr.f32.mxu0 0.0
    %2262 = vmatmul.mubr.f32.gmra.mxu0 %v2195
    %v2263 = vpop.f32.mrf.mxu0
    %v2264 = vadd.f32 0.0, %v2263
    %v2265 = vpop.f32.mrf.mxu0
    %v2266 = vadd.f32 0.0, %v2265
    %2267 = vdwg.mxu0
    %2268 = vmatprep.subr.mxu0 %v2167
    %2269 = vmatpush1.msra.mxu0 %v2166
    %2270 = vmatprep.subr.mxu0 %v2163
    %2271 = vmatpush1.msra.mxu0 %v2162
    %2272 = vmatprep.subr.mxu0 %v2159
    %2273 = vmatpush1.msra.mxu0 %v2158
    %2274 = vmatprep.subr.mxu0 %v2155
    %2275 = vmatpush1.msra.mxu0 %v2154
    %2276 = vmatprep.subr.mxu0 %v2151
    %2277 = vmatpush1.msra.mxu0 %v2150
    %2278 = vmatprep.subr.mxu0 %v2147
    %2279 = vmatpush1.msra.mxu0 %v2146
    %2280 = vmatprep.subr.mxu0 %v2143
    %2281 = vmatpush1.msra.mxu0 %v2142
    %2282 = vmatprep.subr.mxu0 %v2139
    %2283 = vmatpush1.msra.mxu0 %v2138
    %2284 = vmatprep.subr.mxu0 %v2135
    %2285 = vmatpush1.msra.mxu0 %v2134
    %2286 = vmatprep.subr.mxu0 %v2131
    %2287 = vmatpush1.msra.mxu0 %v2130
    %2288 = vmatprep.subr.mxu0 %v2127
    %2289 = vmatpush1.msra.mxu0 %v2126
    %2290 = vmatprep.subr.mxu0 %v2123
    %2291 = vmatpush1.msra.mxu0 %v2122
    %2292 = vmatprep.subr.mxu0 %v2119
    %2293 = vmatpush1.msra.mxu0 %v2118
    %2294 = vmatprep.subr.mxu0 %v2115
    %2295 = vmatpush1.msra.mxu0 %v2114
    %2296 = vmatprep.subr.mxu0 %v2111
    %2297 = vmatpush1.msra.mxu0 %v2110
    %2298 = vmatprep.subr.mxu0 %v2107
    %2299 = vmatpush1.msra.mxu0 %v2106
    %2300 = vmatprep.subr.mxu0 0.0
    %2301 = vmatpush2.msra.mxu0 0.0
    %2302 = vmatprep.subr.mxu0 0.0
    %2303 = vmatpush2.msra.mxu0 0.0
    %2304 = vmatprep.subr.mxu0 0.0
    %2305 = vmatpush2.msra.mxu0 0.0
    %2306 = vmatprep.subr.mxu0 0.0
    %2307 = vmatpush2.msra.mxu0 0.0
    %2308 = vmatprep.subr.mxu0 0.0
    %2309 = vmatpush2.msra.mxu0 0.0
    %2310 = vmatprep.subr.mxu0 0.0
    %2311 = vmatpush2.msra.mxu0 0.0
    %2312 = vmatprep.subr.mxu0 0.0
    %2313 = vmatpush2.msra.mxu0 0.0
    %2314 = vmatprep.subr.mxu0 0.0
    %2315 = vmatpush2.msra.mxu0 0.0
    %2316 = vmatprep.subr.mxu0 0.0
    %2317 = vmatpush2.msra.mxu0 0.0
    %2318 = vmatprep.subr.mxu0 0.0
    %2319 = vmatpush2.msra.mxu0 0.0
    %2320 = vmatprep.subr.mxu0 0.0
    %2321 = vmatpush2.msra.mxu0 0.0
    %2322 = vmatprep.subr.mxu0 0.0
    %2323 = vmatpush2.msra.mxu0 0.0
    %2324 = vmatprep.subr.mxu0 0.0
    %2325 = vmatpush2.msra.mxu0 0.0
    %2326 = vmatprep.subr.mxu0 0.0
    %2327 = vmatpush2.msra.mxu0 0.0
    %2328 = vmatprep.subr.mxu0 0.0
    %2329 = vmatpush2.msra.mxu0 0.0
    %2330 = vmatprep.subr.mxu0 0.0
    %2331 = vmatpush2.msra.mxu0 0.0
    %2332 = vmatprep.mubr.f32.mxu0 0.0
    %2333 = vmatmul.mubr.f32.gmra.mxu0 %v2195
    %v2334 = vpop.f32.mrf.mxu0
    %v2335 = vadd.f32 0.0, %v2334
    %v2336 = vpop.f32.mrf.mxu0
    %v2337 = vadd.f32 0.0, %v2336
    %2338 = vdwg.mxu0
    %v2343 = vcombine.low %v2264, %v2266
    %v2344 = vcombine.low %v2335, %v2337
    %v2346 = vunpack.c.l.s4 1966171168
    %v2347 = vunpack.c.0.s8 %v2346
    %v2348 = vlaneseq
    %v2349 = vshrl.u32 %v2348, 7
    %v2350 = vsub.s32 %v2347, %v2349
    %v2351 = vrot.slane %v2343, %v2350
    %v2353 = vunpack.c.l.s4 1966171168
    %v2354 = vunpack.c.0.s8 %v2353
    %v2355 = vlaneseq
    %v2356 = vshrl.u32 %v2355, 7
    %v2357 = vsub.s32 %v2354, %v2356
    %v2358 = vrot.slane %v2344, %v2357
    %v2359 = vcombine.low %v2351, %v2358
    %v2360 = vcombine.high %v2351, %v2358
    %v2362 = vunpack.c.l.s4 1966171168
    %v2363 = vunpack.c.0.s8 %v2362
    %v2364 = vlaneseq
    %v2365 = vshrl.u32 %v2364, 7
    %v2366 = vsub.s32 %v2363, %v2365
    %v2367 = vrot.slane %v2359, %v2366
    %v2369 = vunpack.c.l.s4 1966171168
    %v2370 = vunpack.c.0.s8 %v2369
    %v2371 = vlaneseq
    %v2372 = vshrl.u32 %v2371, 7
    %v2373 = vsub.s32 %v2370, %v2372
    %v2374 = vrot.slane %v2360, %v2373
    %v2375 = vcombine.high %v2367, %v2367
    %v2376 = vcombine.high %v2374, %v2374
    %v2381 = vadd.f32 %v2097, %v2367
    %v2382 = vadd.f32 %v2099, %v2374
    %v2383 = vadd.f32 %v2101, %v2375
    %v2384 = vadd.f32 %v2103, %v2376
    %v2385 = vxor.u32 %v2381, 2147483648
    %v2386 = vxor.u32 %v2382, 2147483648
    %v2387 = vxor.u32 %v2383, 2147483648
    %v2388 = vxor.u32 %v2384, 2147483648
    %v2389 = vmul.f32 %v2385, 1.442695
    %v2390 = vpow.pop %v2389
    %v2391 = vmul.f32 %v2386, 1.442695
    %v2392 = vpow.pop %v2391
    %v2393 = vmul.f32 %v2387, 1.442695
    %v2394 = vpow.pop %v2393
    %v2395 = vmul.f32 %v2388, 1.442695
    %v2396 = vpow.pop %v2395
    %v2397 = vadd.f32 %v2390, 1.0
    %v2398 = vadd.f32 %v2392, 1.0
    %v2399 = vadd.f32 %v2394, 1.0
    %v2400 = vadd.f32 %v2396, 1.0
    %v2401 = vrcp.pop %v2397
    %v2402 = vmul.f32 1.0, %v2401
    %v2403 = vrcp.pop %v2398
    %v2404 = vmul.f32 1.0, %v2403
    %v2405 = vrcp.pop %v2399
    %v2406 = vmul.f32 1.0, %v2405
    %v2407 = vrcp.pop %v2400
    %v2408 = vmul.f32 1.0, %v2407
    %v2413 = vrot.slane %v2381, 1
    %v2414 = vrot.slane %v2382, 1
    %v2415 = vrot.slane %v2383, 1
    %v2416 = vrot.slane %v2384, 1
    %v2421 = vxor.u32 %v2413, 2147483648
    %v2422 = vxor.u32 %v2414, 2147483648
    %v2423 = vxor.u32 %v2415, 2147483648
    %v2424 = vxor.u32 %v2416, 2147483648
    %v2425 = vmul.f32 %v2421, 1.442695
    %v2426 = vpow.pop %v2425
    %v2427 = vmul.f32 %v2422, 1.442695
    %v2428 = vpow.pop %v2427
    %v2429 = vmul.f32 %v2423, 1.442695
    %v2430 = vpow.pop %v2429
    %v2431 = vmul.f32 %v2424, 1.442695
    %v2432 = vpow.pop %v2431
    %v2433 = vadd.f32 %v2426, 1.0
    %v2434 = vadd.f32 %v2428, 1.0
    %v2435 = vadd.f32 %v2430, 1.0
    %v2436 = vadd.f32 %v2432, 1.0
    %v2437 = vrcp.pop %v2433
    %v2438 = vmul.f32 1.0, %v2437
    %v2439 = vrcp.pop %v2434
    %v2440 = vmul.f32 1.0, %v2439
    %v2441 = vrcp.pop %v2435
    %v2442 = vmul.f32 1.0, %v2441
    %v2443 = vrcp.pop %v2436
    %v2444 = vmul.f32 1.0, %v2443
    %v2445 = vrot.slane %v2381, 2
    %v2446 = vrot.slane %v2382, 2
    %v2447 = vrot.slane %v2383, 2
    %v2448 = vrot.slane %v2384, 2
    %v2453 = vtanh.pop %v2445
    %v2454 = vtanh.pop %v2446
    %v2455 = vtanh.pop %v2447
    %v2456 = vtanh.pop %v2448
    %v2457 = vrot.slane %v2381, 3
    %v2458 = vrot.slane %v2382, 3
    %v2459 = vrot.slane %v2383, 3
    %v2460 = vrot.slane %v2384, 3
    %v2465 = vxor.u32 %v2457, 2147483648
    %v2466 = vxor.u32 %v2458, 2147483648
    %v2467 = vxor.u32 %v2459, 2147483648
    %v2468 = vxor.u32 %v2460, 2147483648
    %v2469 = vmul.f32 %v2465, 1.442695
    %v2470 = vpow.pop %v2469
    %v2471 = vmul.f32 %v2466, 1.442695
    %v2472 = vpow.pop %v2471
    %v2473 = vmul.f32 %v2467, 1.442695
    %v2474 = vpow.pop %v2473
    %v2475 = vmul.f32 %v2468, 1.442695
    %v2476 = vpow.pop %v2475
    %v2477 = vadd.f32 %v2470, 1.0
    %v2478 = vadd.f32 %v2472, 1.0
    %v2479 = vadd.f32 %v2474, 1.0
    %v2480 = vadd.f32 %v2476, 1.0
    %v2481 = vrcp.pop %v2477
    %v2482 = vmul.f32 1.0, %v2481
    %v2483 = vrcp.pop %v2478
    %v2484 = vmul.f32 1.0, %v2483
    %v2485 = vrcp.pop %v2479
    %v2486 = vmul.f32 1.0, %v2485
    %v2487 = vrcp.pop %v2480
    %v2488 = vmul.f32 1.0, %v2487
    %v2489 = vmul.f32 %v2438, %v2080
    %v2490 = vmul.f32 %v2440, %v2081
    %v2491 = vmul.f32 %v2442, %v2082
    %v2492 = vmul.f32 %v2444, %v2083
    %v2493 = vmul.f32 %v2402, %v2453
    %v2494 = vmul.f32 %v2404, %v2454
    %v2495 = vmul.f32 %v2406, %v2455
    %v2496 = vmul.f32 %v2408, %v2456
    %v2497 = vadd.f32 %v2489, %v2493
    %v2498 = vadd.f32 %v2490, %v2494
    %v2499 = vadd.f32 %v2491, %v2495
    %v2500 = vadd.f32 %v2492, %v2496
    %v2501 = vtanh.pop %v2497
    %v2502 = vtanh.pop %v2498
    %v2503 = vtanh.pop %v2499
    %v2504 = vtanh.pop %v2500
    %v2505 = vmul.f32 %v2482, %v2501
    %v2506 = vmul.f32 %v2484, %v2502
    %v2507 = vmul.f32 %v2486, %v2503
    %v2508 = vmul.f32 %v2488, %v2504
    %2509 = vst.msk [vmem:[#allocation7 + $0x5] sm:$0x1] %vm423, %v2505
    %2510 = vst.msk [vmem:[#allocation7 + $0xd] sm:$0x1] %vm423, %v2506
    %2511 = vst.msk [vmem:[#allocation7 + $0x15] sm:$0x1] %vm423, %v2507
    %2512 = vst.msk [vmem:[#allocation7 + $0x1d] sm:$0x1] %vm423, %v2508
    %s2513 = scalar_lea.vmem [#allocation2], 6
    %v2514 = vld [vmem:[%s2513] ss:$8 sm:$0xf]
    %s2515 = scalar_lea.vmem [#allocation2], 38
    %v2516 = vld [vmem:[%s2515] ss:$8 sm:$0xf]
    %s2517 = scalar_lea.vmem [#allocation2], 70
    %v2518 = vld [vmem:[%s2517] ss:$8 sm:$0xf]
    %s2519 = scalar_lea.vmem [#allocation2], 102
    %v2520 = vld [vmem:[%s2519] ss:$8 sm:$0xf]
    %v2521 = vld [vmem:[#allocation5] sm:$0xff]
    %v2522 = vld [vmem:[#allocation5 + $0x8] sm:$0xff]
    %v2523 = vld [vmem:[#allocation5 + $0x10] sm:$0xff]
    %v2524 = vld [vmem:[#allocation5 + $0x18] sm:$0xff]
    %v2525 = vld [vmem:[#allocation5 + $0x20] sm:$0xff]
    %v2526 = vld [vmem:[#allocation5 + $0x28] sm:$0xff]
    %v2527 = vld [vmem:[#allocation5 + $0x30] sm:$0xff]
    %v2528 = vld [vmem:[#allocation5 + $0x38] sm:$0xff]
    %v2529 = vld [vmem:[#allocation5 + $0x40] sm:$0xff]
    %v2530 = vld [vmem:[#allocation5 + $0x48] sm:$0xff]
    %v2531 = vld [vmem:[#allocation5 + $0x50] sm:$0xff]
    %v2532 = vld [vmem:[#allocation5 + $0x58] sm:$0xff]
    %v2533 = vld [vmem:[#allocation5 + $0x60] sm:$0xff]
    %v2534 = vld [vmem:[#allocation5 + $0x68] sm:$0xff]
    %v2535 = vld [vmem:[#allocation5 + $0x70] sm:$0xff]
    %v2536 = vld [vmem:[#allocation5 + $0x78] sm:$0xff]
    %v2537 = vld [vmem:[#allocation5 + $0x80] sm:$0xff]
    %v2538 = vld [vmem:[#allocation5 + $0x88] sm:$0xff]
    %v2539 = vld [vmem:[#allocation5 + $0x90] sm:$0xff]
    %v2540 = vld [vmem:[#allocation5 + $0x98] sm:$0xff]
    %v2541 = vld [vmem:[#allocation5 + $0xa0] sm:$0xff]
    %v2542 = vld [vmem:[#allocation5 + $0xa8] sm:$0xff]
    %v2543 = vld [vmem:[#allocation5 + $0xb0] sm:$0xff]
    %v2544 = vld [vmem:[#allocation5 + $0xb8] sm:$0xff]
    %v2545 = vld [vmem:[#allocation5 + $0xc0] sm:$0xff]
    %v2546 = vld [vmem:[#allocation5 + $0xc8] sm:$0xff]
    %v2547 = vld [vmem:[#allocation5 + $0xd0] sm:$0xff]
    %v2548 = vld [vmem:[#allocation5 + $0xd8] sm:$0xff]
    %v2549 = vld [vmem:[#allocation5 + $0xe0] sm:$0xff]
    %v2550 = vld [vmem:[#allocation5 + $0xe8] sm:$0xff]
    %v2551 = vld [vmem:[#allocation5 + $0xf0] sm:$0xff]
    %v2552 = vld [vmem:[#allocation5 + $0xf8] sm:$0xff]
    %v2553 = vld [vmem:[#allocation5 + $0x100] sm:$0xff]
    %v2554 = vld [vmem:[#allocation5 + $0x108] sm:$0xff]
    %v2555 = vld [vmem:[#allocation5 + $0x110] sm:$0xff]
    %v2556 = vld [vmem:[#allocation5 + $0x118] sm:$0xff]
    %v2557 = vld [vmem:[#allocation5 + $0x120] sm:$0xff]
    %v2558 = vld [vmem:[#allocation5 + $0x128] sm:$0xff]
    %v2559 = vld [vmem:[#allocation5 + $0x130] sm:$0xff]
    %v2560 = vld [vmem:[#allocation5 + $0x138] sm:$0xff]
    %v2561 = vld [vmem:[#allocation5 + $0x140] sm:$0xff]
    %v2562 = vld [vmem:[#allocation5 + $0x148] sm:$0xff]
    %v2563 = vld [vmem:[#allocation5 + $0x150] sm:$0xff]
    %v2564 = vld [vmem:[#allocation5 + $0x158] sm:$0xff]
    %v2565 = vld [vmem:[#allocation5 + $0x160] sm:$0xff]
    %v2566 = vld [vmem:[#allocation5 + $0x168] sm:$0xff]
    %v2567 = vld [vmem:[#allocation5 + $0x170] sm:$0xff]
    %v2568 = vld [vmem:[#allocation5 + $0x178] sm:$0xff]
    %v2569 = vld [vmem:[#allocation5 + $0x180] sm:$0xff]
    %v2570 = vld [vmem:[#allocation5 + $0x188] sm:$0xff]
    %v2571 = vld [vmem:[#allocation5 + $0x190] sm:$0xff]
    %v2572 = vld [vmem:[#allocation5 + $0x198] sm:$0xff]
    %v2573 = vld [vmem:[#allocation5 + $0x1a0] sm:$0xff]
    %v2574 = vld [vmem:[#allocation5 + $0x1a8] sm:$0xff]
    %v2575 = vld [vmem:[#allocation5 + $0x1b0] sm:$0xff]
    %v2576 = vld [vmem:[#allocation5 + $0x1b8] sm:$0xff]
    %v2577 = vld [vmem:[#allocation5 + $0x1c0] sm:$0xff]
    %v2578 = vld [vmem:[#allocation5 + $0x1c8] sm:$0xff]
    %v2579 = vld [vmem:[#allocation5 + $0x1d0] sm:$0xff]
    %v2580 = vld [vmem:[#allocation5 + $0x1d8] sm:$0xff]
    %v2581 = vld [vmem:[#allocation5 + $0x1e0] sm:$0xff]
    %v2582 = vld [vmem:[#allocation5 + $0x1e8] sm:$0xff]
    %v2583 = vld [vmem:[#allocation5 + $0x1f0] sm:$0xff]
    %v2584 = vld [vmem:[#allocation5 + $0x1f8] sm:$0xff]
    %v2589 = vcombine.low %v2505, %v2506
    %v2590 = vcombine.low %v2507, %v2508
    %v2592 = vunpack.c.l.s4 1966171168
    %v2593 = vunpack.c.0.s8 %v2592
    %v2594 = vlaneseq
    %v2595 = vshrl.u32 %v2594, 7
    %v2596 = vsub.s32 %v2593, %v2595
    %v2597 = vrot.slane %v2589, %v2596
    %v2599 = vunpack.c.l.s4 1966171168
    %v2600 = vunpack.c.0.s8 %v2599
    %v2601 = vlaneseq
    %v2602 = vshrl.u32 %v2601, 7
    %v2603 = vsub.s32 %v2600, %v2602
    %v2604 = vrot.slane %v2590, %v2603
    %v2605 = vcombine.low %v2597, %v2604
    %v2607 = vunpack.c.l.s4 1966171168
    %v2608 = vunpack.c.0.s8 %v2607
    %v2609 = vlaneseq
    %v2610 = vshrl.u32 %v2609, 7
    %v2611 = vsub.s32 %v2608, %v2610
    %v2612 = vrot.slane %v2605, %v2611
    %2614 = vmatprep.subr.mxu0 %v2582
    %2615 = vmatpush1.msra.mxu0 %v2581
    %2616 = vmatprep.subr.mxu0 %v2578
    %2617 = vmatpush1.msra.mxu0 %v2577
    %2618 = vmatprep.subr.mxu0 %v2574
    %2619 = vmatpush1.msra.mxu0 %v2573
    %2620 = vmatprep.subr.mxu0 %v2570
    %2621 = vmatpush1.msra.mxu0 %v2569
    %2622 = vmatprep.subr.mxu0 %v2566
    %2623 = vmatpush1.msra.mxu0 %v2565
    %2624 = vmatprep.subr.mxu0 %v2562
    %2625 = vmatpush1.msra.mxu0 %v2561
    %2626 = vmatprep.subr.mxu0 %v2558
    %2627 = vmatpush1.msra.mxu0 %v2557
    %2628 = vmatprep.subr.mxu0 %v2554
    %2629 = vmatpush1.msra.mxu0 %v2553
    %2630 = vmatprep.subr.mxu0 %v2550
    %2631 = vmatpush1.msra.mxu0 %v2549
    %2632 = vmatprep.subr.mxu0 %v2546
    %2633 = vmatpush1.msra.mxu0 %v2545
    %2634 = vmatprep.subr.mxu0 %v2542
    %2635 = vmatpush1.msra.mxu0 %v2541
    %2636 = vmatprep.subr.mxu0 %v2538
    %2637 = vmatpush1.msra.mxu0 %v2537
    %2638 = vmatprep.subr.mxu0 %v2534
    %2639 = vmatpush1.msra.mxu0 %v2533
    %2640 = vmatprep.subr.mxu0 %v2530
    %2641 = vmatpush1.msra.mxu0 %v2529
    %2642 = vmatprep.subr.mxu0 %v2526
    %2643 = vmatpush1.msra.mxu0 %v2525
    %2644 = vmatprep.subr.mxu0 %v2522
    %2645 = vmatpush1.msra.mxu0 %v2521
    %2646 = vmatprep.subr.mxu0 0.0
    %2647 = vmatpush2.msra.mxu0 0.0
    %2648 = vmatprep.subr.mxu0 0.0
    %2649 = vmatpush2.msra.mxu0 0.0
    %2650 = vmatprep.subr.mxu0 0.0
    %2651 = vmatpush2.msra.mxu0 0.0
    %2652 = vmatprep.subr.mxu0 0.0
    %2653 = vmatpush2.msra.mxu0 0.0
    %2654 = vmatprep.subr.mxu0 0.0
    %2655 = vmatpush2.msra.mxu0 0.0
    %2656 = vmatprep.subr.mxu0 0.0
    %2657 = vmatpush2.msra.mxu0 0.0
    %2658 = vmatprep.subr.mxu0 0.0
    %2659 = vmatpush2.msra.mxu0 0.0
    %2660 = vmatprep.subr.mxu0 0.0
    %2661 = vmatpush2.msra.mxu0 0.0
    %2662 = vmatprep.subr.mxu0 0.0
    %2663 = vmatpush2.msra.mxu0 0.0
    %2664 = vmatprep.subr.mxu0 0.0
    %2665 = vmatpush2.msra.mxu0 0.0
    %2666 = vmatprep.subr.mxu0 0.0
    %2667 = vmatpush2.msra.mxu0 0.0
    %2668 = vmatprep.subr.mxu0 0.0
    %2669 = vmatpush2.msra.mxu0 0.0
    %2670 = vmatprep.subr.mxu0 0.0
    %2671 = vmatpush2.msra.mxu0 0.0
    %2672 = vmatprep.subr.mxu0 0.0
    %2673 = vmatpush2.msra.mxu0 0.0
    %2674 = vmatprep.subr.mxu0 0.0
    %2675 = vmatpush2.msra.mxu0 0.0
    %2676 = vmatprep.subr.mxu0 0.0
    %2677 = vmatpush2.msra.mxu0 0.0
    %2678 = vmatprep.mubr.f32.mxu0 0.0
    %2679 = vmatmul.mubr.f32.gmra.mxu0 %v2612
    %v2680 = vpop.f32.mrf.mxu0
    %v2681 = vadd.f32 0.0, %v2680
    %v2682 = vpop.f32.mrf.mxu0
    %v2683 = vadd.f32 0.0, %v2682
    %2684 = vdwg.mxu0
    %2685 = vmatprep.subr.mxu0 %v2584
    %2686 = vmatpush1.msra.mxu0 %v2583
    %2687 = vmatprep.subr.mxu0 %v2580
    %2688 = vmatpush1.msra.mxu0 %v2579
    %2689 = vmatprep.subr.mxu0 %v2576
    %2690 = vmatpush1.msra.mxu0 %v2575
    %2691 = vmatprep.subr.mxu0 %v2572
    %2692 = vmatpush1.msra.mxu0 %v2571
    %2693 = vmatprep.subr.mxu0 %v2568
    %2694 = vmatpush1.msra.mxu0 %v2567
    %2695 = vmatprep.subr.mxu0 %v2564
    %2696 = vmatpush1.msra.mxu0 %v2563
    %2697 = vmatprep.subr.mxu0 %v2560
    %2698 = vmatpush1.msra.mxu0 %v2559
    %2699 = vmatprep.subr.mxu0 %v2556
    %2700 = vmatpush1.msra.mxu0 %v2555
    %2701 = vmatprep.subr.mxu0 %v2552
    %2702 = vmatpush1.msra.mxu0 %v2551
    %2703 = vmatprep.subr.mxu0 %v2548
    %2704 = vmatpush1.msra.mxu0 %v2547
    %2705 = vmatprep.subr.mxu0 %v2544
    %2706 = vmatpush1.msra.mxu0 %v2543
    %2707 = vmatprep.subr.mxu0 %v2540
    %2708 = vmatpush1.msra.mxu0 %v2539
    %2709 = vmatprep.subr.mxu0 %v2536
    %2710 = vmatpush1.msra.mxu0 %v2535
    %2711 = vmatprep.subr.mxu0 %v2532
    %2712 = vmatpush1.msra.mxu0 %v2531
    %2713 = vmatprep.subr.mxu0 %v2528
    %2714 = vmatpush1.msra.mxu0 %v2527
    %2715 = vmatprep.subr.mxu0 %v2524
    %2716 = vmatpush1.msra.mxu0 %v2523
    %2717 = vmatprep.subr.mxu0 0.0
    %2718 = vmatpush2.msra.mxu0 0.0
    %2719 = vmatprep.subr.mxu0 0.0
    %2720 = vmatpush2.msra.mxu0 0.0
    %2721 = vmatprep.subr.mxu0 0.0
    %2722 = vmatpush2.msra.mxu0 0.0
    %2723 = vmatprep.subr.mxu0 0.0
    %2724 = vmatpush2.msra.mxu0 0.0
    %2725 = vmatprep.subr.mxu0 0.0
    %2726 = vmatpush2.msra.mxu0 0.0
    %2727 = vmatprep.subr.mxu0 0.0
    %2728 = vmatpush2.msra.mxu0 0.0
    %2729 = vmatprep.subr.mxu0 0.0
    %2730 = vmatpush2.msra.mxu0 0.0
    %2731 = vmatprep.subr.mxu0 0.0
    %2732 = vmatpush2.msra.mxu0 0.0
    %2733 = vmatprep.subr.mxu0 0.0
    %2734 = vmatpush2.msra.mxu0 0.0
    %2735 = vmatprep.subr.mxu0 0.0
    %2736 = vmatpush2.msra.mxu0 0.0
    %2737 = vmatprep.subr.mxu0 0.0
    %2738 = vmatpush2.msra.mxu0 0.0
    %2739 = vmatprep.subr.mxu0 0.0
    %2740 = vmatpush2.msra.mxu0 0.0
    %2741 = vmatprep.subr.mxu0 0.0
    %2742 = vmatpush2.msra.mxu0 0.0
    %2743 = vmatprep.subr.mxu0 0.0
    %2744 = vmatpush2.msra.mxu0 0.0
    %2745 = vmatprep.subr.mxu0 0.0
    %2746 = vmatpush2.msra.mxu0 0.0
    %2747 = vmatprep.subr.mxu0 0.0
    %2748 = vmatpush2.msra.mxu0 0.0
    %2749 = vmatprep.mubr.f32.mxu0 0.0
    %2750 = vmatmul.mubr.f32.gmra.mxu0 %v2612
    %v2751 = vpop.f32.mrf.mxu0
    %v2752 = vadd.f32 0.0, %v2751
    %v2753 = vpop.f32.mrf.mxu0
    %v2754 = vadd.f32 0.0, %v2753
    %2755 = vdwg.mxu0
    %v2760 = vcombine.low %v2681, %v2683
    %v2761 = vcombine.low %v2752, %v2754
    %v2763 = vunpack.c.l.s4 1966171168
    %v2764 = vunpack.c.0.s8 %v2763
    %v2765 = vlaneseq
    %v2766 = vshrl.u32 %v2765, 7
    %v2767 = vsub.s32 %v2764, %v2766
    %v2768 = vrot.slane %v2760, %v2767
    %v2770 = vunpack.c.l.s4 1966171168
    %v2771 = vunpack.c.0.s8 %v2770
    %v2772 = vlaneseq
    %v2773 = vshrl.u32 %v2772, 7
    %v2774 = vsub.s32 %v2771, %v2773
    %v2775 = vrot.slane %v2761, %v2774
    %v2776 = vcombine.low %v2768, %v2775
    %v2777 = vcombine.high %v2768, %v2775
    %v2779 = vunpack.c.l.s4 1966171168
    %v2780 = vunpack.c.0.s8 %v2779
    %v2781 = vlaneseq
    %v2782 = vshrl.u32 %v2781, 7
    %v2783 = vsub.s32 %v2780, %v2782
    %v2784 = vrot.slane %v2776, %v2783
    %v2786 = vunpack.c.l.s4 1966171168
    %v2787 = vunpack.c.0.s8 %v2786
    %v2788 = vlaneseq
    %v2789 = vshrl.u32 %v2788, 7
    %v2790 = vsub.s32 %v2787, %v2789
    %v2791 = vrot.slane %v2777, %v2790
    %v2792 = vcombine.high %v2784, %v2784
    %v2793 = vcombine.high %v2791, %v2791
    %v2798 = vadd.f32 %v2514, %v2784
    %v2799 = vadd.f32 %v2516, %v2791
    %v2800 = vadd.f32 %v2518, %v2792
    %v2801 = vadd.f32 %v2520, %v2793
    %v2802 = vxor.u32 %v2798, 2147483648
    %v2803 = vxor.u32 %v2799, 2147483648
    %v2804 = vxor.u32 %v2800, 2147483648
    %v2805 = vxor.u32 %v2801, 2147483648
    %v2806 = vmul.f32 %v2802, 1.442695
    %v2807 = vpow.pop %v2806
    %v2808 = vmul.f32 %v2803, 1.442695
    %v2809 = vpow.pop %v2808
    %v2810 = vmul.f32 %v2804, 1.442695
    %v2811 = vpow.pop %v2810
    %v2812 = vmul.f32 %v2805, 1.442695
    %v2813 = vpow.pop %v2812
    %v2814 = vadd.f32 %v2807, 1.0
    %v2815 = vadd.f32 %v2809, 1.0
    %v2816 = vadd.f32 %v2811, 1.0
    %v2817 = vadd.f32 %v2813, 1.0
    %v2818 = vrcp.pop %v2814
    %v2819 = vmul.f32 1.0, %v2818
    %v2820 = vrcp.pop %v2815
    %v2821 = vmul.f32 1.0, %v2820
    %v2822 = vrcp.pop %v2816
    %v2823 = vmul.f32 1.0, %v2822
    %v2824 = vrcp.pop %v2817
    %v2825 = vmul.f32 1.0, %v2824
    %v2830 = vrot.slane %v2798, 1
    %v2831 = vrot.slane %v2799, 1
    %v2832 = vrot.slane %v2800, 1
    %v2833 = vrot.slane %v2801, 1
    %v2838 = vxor.u32 %v2830, 2147483648
    %v2839 = vxor.u32 %v2831, 2147483648
    %v2840 = vxor.u32 %v2832, 2147483648
    %v2841 = vxor.u32 %v2833, 2147483648
    %v2842 = vmul.f32 %v2838, 1.442695
    %v2843 = vpow.pop %v2842
    %v2844 = vmul.f32 %v2839, 1.442695
    %v2845 = vpow.pop %v2844
    %v2846 = vmul.f32 %v2840, 1.442695
    %v2847 = vpow.pop %v2846
    %v2848 = vmul.f32 %v2841, 1.442695
    %v2849 = vpow.pop %v2848
    %v2850 = vadd.f32 %v2843, 1.0
    %v2851 = vadd.f32 %v2845, 1.0
    %v2852 = vadd.f32 %v2847, 1.0
    %v2853 = vadd.f32 %v2849, 1.0
    %v2854 = vrcp.pop %v2850
    %v2855 = vmul.f32 1.0, %v2854
    %v2856 = vrcp.pop %v2851
    %v2857 = vmul.f32 1.0, %v2856
    %v2858 = vrcp.pop %v2852
    %v2859 = vmul.f32 1.0, %v2858
    %v2860 = vrcp.pop %v2853
    %v2861 = vmul.f32 1.0, %v2860
    %v2862 = vrot.slane %v2798, 2
    %v2863 = vrot.slane %v2799, 2
    %v2864 = vrot.slane %v2800, 2
    %v2865 = vrot.slane %v2801, 2
    %v2870 = vtanh.pop %v2862
    %v2871 = vtanh.pop %v2863
    %v2872 = vtanh.pop %v2864
    %v2873 = vtanh.pop %v2865
    %v2874 = vrot.slane %v2798, 3
    %v2875 = vrot.slane %v2799, 3
    %v2876 = vrot.slane %v2800, 3
    %v2877 = vrot.slane %v2801, 3
    %v2882 = vxor.u32 %v2874, 2147483648
    %v2883 = vxor.u32 %v2875, 2147483648
    %v2884 = vxor.u32 %v2876, 2147483648
    %v2885 = vxor.u32 %v2877, 2147483648
    %v2886 = vmul.f32 %v2882, 1.442695
    %v2887 = vpow.pop %v2886
    %v2888 = vmul.f32 %v2883, 1.442695
    %v2889 = vpow.pop %v2888
    %v2890 = vmul.f32 %v2884, 1.442695
    %v2891 = vpow.pop %v2890
    %v2892 = vmul.f32 %v2885, 1.442695
    %v2893 = vpow.pop %v2892
    %v2894 = vadd.f32 %v2887, 1.0
    %v2895 = vadd.f32 %v2889, 1.0
    %v2896 = vadd.f32 %v2891, 1.0
    %v2897 = vadd.f32 %v2893, 1.0
    %v2898 = vrcp.pop %v2894
    %v2899 = vmul.f32 1.0, %v2898
    %v2900 = vrcp.pop %v2895
    %v2901 = vmul.f32 1.0, %v2900
    %v2902 = vrcp.pop %v2896
    %v2903 = vmul.f32 1.0, %v2902
    %v2904 = vrcp.pop %v2897
    %v2905 = vmul.f32 1.0, %v2904
    %v2906 = vmul.f32 %v2855, %v2497
    %v2907 = vmul.f32 %v2857, %v2498
    %v2908 = vmul.f32 %v2859, %v2499
    %v2909 = vmul.f32 %v2861, %v2500
    %v2910 = vmul.f32 %v2819, %v2870
    %v2911 = vmul.f32 %v2821, %v2871
    %v2912 = vmul.f32 %v2823, %v2872
    %v2913 = vmul.f32 %v2825, %v2873
    %v2914 = vadd.f32 %v2906, %v2910
    %v2915 = vadd.f32 %v2907, %v2911
    %v2916 = vadd.f32 %v2908, %v2912
    %v2917 = vadd.f32 %v2909, %v2913
    %v2918 = vtanh.pop %v2914
    %v2919 = vtanh.pop %v2915
    %v2920 = vtanh.pop %v2916
    %v2921 = vtanh.pop %v2917
    %v2922 = vmul.f32 %v2899, %v2918
    %v2923 = vmul.f32 %v2901, %v2919
    %v2924 = vmul.f32 %v2903, %v2920
    %v2925 = vmul.f32 %v2905, %v2921
    %2926 = vst.msk [vmem:[#allocation7 + $0x6] sm:$0x1] %vm423, %v2922
    %2927 = vst.msk [vmem:[#allocation7 + $0xe] sm:$0x1] %vm423, %v2923
    %2928 = vst.msk [vmem:[#allocation7 + $0x16] sm:$0x1] %vm423, %v2924
    %2929 = vst.msk [vmem:[#allocation7 + $0x1e] sm:$0x1] %vm423, %v2925
    %s2930 = scalar_lea.vmem [#allocation2], 7
    %v2931 = vld [vmem:[%s2930] ss:$8 sm:$0xf]
    %s2932 = scalar_lea.vmem [#allocation2], 39
    %v2933 = vld [vmem:[%s2932] ss:$8 sm:$0xf]
    %s2934 = scalar_lea.vmem [#allocation2], 71
    %v2935 = vld [vmem:[%s2934] ss:$8 sm:$0xf]
    %s2936 = scalar_lea.vmem [#allocation2], 103
    %v2937 = vld [vmem:[%s2936] ss:$8 sm:$0xf]
    %v2938 = vld [vmem:[#allocation5] sm:$0xff]
    %v2939 = vld [vmem:[#allocation5 + $0x8] sm:$0xff]
    %v2940 = vld [vmem:[#allocation5 + $0x10] sm:$0xff]
    %v2941 = vld [vmem:[#allocation5 + $0x18] sm:$0xff]
    %v2942 = vld [vmem:[#allocation5 + $0x20] sm:$0xff]
    %v2943 = vld [vmem:[#allocation5 + $0x28] sm:$0xff]
    %v2944 = vld [vmem:[#allocation5 + $0x30] sm:$0xff]
    %v2945 = vld [vmem:[#allocation5 + $0x38] sm:$0xff]
    %v2946 = vld [vmem:[#allocation5 + $0x40] sm:$0xff]
    %v2947 = vld [vmem:[#allocation5 + $0x48] sm:$0xff]
    %v2948 = vld [vmem:[#allocation5 + $0x50] sm:$0xff]
    %v2949 = vld [vmem:[#allocation5 + $0x58] sm:$0xff]
    %v2950 = vld [vmem:[#allocation5 + $0x60] sm:$0xff]
    %v2951 = vld [vmem:[#allocation5 + $0x68] sm:$0xff]
    %v2952 = vld [vmem:[#allocation5 + $0x70] sm:$0xff]
    %v2953 = vld [vmem:[#allocation5 + $0x78] sm:$0xff]
    %v2954 = vld [vmem:[#allocation5 + $0x80] sm:$0xff]
    %v2955 = vld [vmem:[#allocation5 + $0x88] sm:$0xff]
    %v2956 = vld [vmem:[#allocation5 + $0x90] sm:$0xff]
    %v2957 = vld [vmem:[#allocation5 + $0x98] sm:$0xff]
    %v2958 = vld [vmem:[#allocation5 + $0xa0] sm:$0xff]
    %v2959 = vld [vmem:[#allocation5 + $0xa8] sm:$0xff]
    %v2960 = vld [vmem:[#allocation5 + $0xb0] sm:$0xff]
    %v2961 = vld [vmem:[#allocation5 + $0xb8] sm:$0xff]
    %v2962 = vld [vmem:[#allocation5 + $0xc0] sm:$0xff]
    %v2963 = vld [vmem:[#allocation5 + $0xc8] sm:$0xff]
    %v2964 = vld [vmem:[#allocation5 + $0xd0] sm:$0xff]
    %v2965 = vld [vmem:[#allocation5 + $0xd8] sm:$0xff]
    %v2966 = vld [vmem:[#allocation5 + $0xe0] sm:$0xff]
    %v2967 = vld [vmem:[#allocation5 + $0xe8] sm:$0xff]
    %v2968 = vld [vmem:[#allocation5 + $0xf0] sm:$0xff]
    %v2969 = vld [vmem:[#allocation5 + $0xf8] sm:$0xff]
    %v2970 = vld [vmem:[#allocation5 + $0x100] sm:$0xff]
    %v2971 = vld [vmem:[#allocation5 + $0x108] sm:$0xff]
    %v2972 = vld [vmem:[#allocation5 + $0x110] sm:$0xff]
    %v2973 = vld [vmem:[#allocation5 + $0x118] sm:$0xff]
    %v2974 = vld [vmem:[#allocation5 + $0x120] sm:$0xff]
    %v2975 = vld [vmem:[#allocation5 + $0x128] sm:$0xff]
    %v2976 = vld [vmem:[#allocation5 + $0x130] sm:$0xff]
    %v2977 = vld [vmem:[#allocation5 + $0x138] sm:$0xff]
    %v2978 = vld [vmem:[#allocation5 + $0x140] sm:$0xff]
    %v2979 = vld [vmem:[#allocation5 + $0x148] sm:$0xff]
    %v2980 = vld [vmem:[#allocation5 + $0x150] sm:$0xff]
    %v2981 = vld [vmem:[#allocation5 + $0x158] sm:$0xff]
    %v2982 = vld [vmem:[#allocation5 + $0x160] sm:$0xff]
    %v2983 = vld [vmem:[#allocation5 + $0x168] sm:$0xff]
    %v2984 = vld [vmem:[#allocation5 + $0x170] sm:$0xff]
    %v2985 = vld [vmem:[#allocation5 + $0x178] sm:$0xff]
    %v2986 = vld [vmem:[#allocation5 + $0x180] sm:$0xff]
    %v2987 = vld [vmem:[#allocation5 + $0x188] sm:$0xff]
    %v2988 = vld [vmem:[#allocation5 + $0x190] sm:$0xff]
    %v2989 = vld [vmem:[#allocation5 + $0x198] sm:$0xff]
    %v2990 = vld [vmem:[#allocation5 + $0x1a0] sm:$0xff]
    %v2991 = vld [vmem:[#allocation5 + $0x1a8] sm:$0xff]
    %v2992 = vld [vmem:[#allocation5 + $0x1b0] sm:$0xff]
    %v2993 = vld [vmem:[#allocation5 + $0x1b8] sm:$0xff]
    %v2994 = vld [vmem:[#allocation5 + $0x1c0] sm:$0xff]
    %v2995 = vld [vmem:[#allocation5 + $0x1c8] sm:$0xff]
    %v2996 = vld [vmem:[#allocation5 + $0x1d0] sm:$0xff]
    %v2997 = vld [vmem:[#allocation5 + $0x1d8] sm:$0xff]
    %v2998 = vld [vmem:[#allocation5 + $0x1e0] sm:$0xff]
    %v2999 = vld [vmem:[#allocation5 + $0x1e8] sm:$0xff]
    %v3000 = vld [vmem:[#allocation5 + $0x1f0] sm:$0xff]
    %v3001 = vld [vmem:[#allocation5 + $0x1f8] sm:$0xff]
    %v3006 = vcombine.low %v2922, %v2923
    %v3007 = vcombine.low %v2924, %v2925
    %v3009 = vunpack.c.l.s4 1966171168
    %v3010 = vunpack.c.0.s8 %v3009
    %v3011 = vlaneseq
    %v3012 = vshrl.u32 %v3011, 7
    %v3013 = vsub.s32 %v3010, %v3012
    %v3014 = vrot.slane %v3006, %v3013
    %v3016 = vunpack.c.l.s4 1966171168
    %v3017 = vunpack.c.0.s8 %v3016
    %v3018 = vlaneseq
    %v3019 = vshrl.u32 %v3018, 7
    %v3020 = vsub.s32 %v3017, %v3019
    %v3021 = vrot.slane %v3007, %v3020
    %v3022 = vcombine.low %v3014, %v3021
    %v3024 = vunpack.c.l.s4 1966171168
    %v3025 = vunpack.c.0.s8 %v3024
    %v3026 = vlaneseq
    %v3027 = vshrl.u32 %v3026, 7
    %v3028 = vsub.s32 %v3025, %v3027
    %v3029 = vrot.slane %v3022, %v3028
    %3031 = vmatprep.subr.mxu0 %v2999
    %3032 = vmatpush1.msra.mxu0 %v2998
    %3033 = vmatprep.subr.mxu0 %v2995
    %3034 = vmatpush1.msra.mxu0 %v2994
    %3035 = vmatprep.subr.mxu0 %v2991
    %3036 = vmatpush1.msra.mxu0 %v2990
    %3037 = vmatprep.subr.mxu0 %v2987
    %3038 = vmatpush1.msra.mxu0 %v2986
    %3039 = vmatprep.subr.mxu0 %v2983
    %3040 = vmatpush1.msra.mxu0 %v2982
    %3041 = vmatprep.subr.mxu0 %v2979
    %3042 = vmatpush1.msra.mxu0 %v2978
    %3043 = vmatprep.subr.mxu0 %v2975
    %3044 = vmatpush1.msra.mxu0 %v2974
    %3045 = vmatprep.subr.mxu0 %v2971
    %3046 = vmatpush1.msra.mxu0 %v2970
    %3047 = vmatprep.subr.mxu0 %v2967
    %3048 = vmatpush1.msra.mxu0 %v2966
    %3049 = vmatprep.subr.mxu0 %v2963
    %3050 = vmatpush1.msra.mxu0 %v2962
    %3051 = vmatprep.subr.mxu0 %v2959
    %3052 = vmatpush1.msra.mxu0 %v2958
    %3053 = vmatprep.subr.mxu0 %v2955
    %3054 = vmatpush1.msra.mxu0 %v2954
    %3055 = vmatprep.subr.mxu0 %v2951
    %3056 = vmatpush1.msra.mxu0 %v2950
    %3057 = vmatprep.subr.mxu0 %v2947
    %3058 = vmatpush1.msra.mxu0 %v2946
    %3059 = vmatprep.subr.mxu0 %v2943
    %3060 = vmatpush1.msra.mxu0 %v2942
    %3061 = vmatprep.subr.mxu0 %v2939
    %3062 = vmatpush1.msra.mxu0 %v2938
    %3063 = vmatprep.subr.mxu0 0.0
    %3064 = vmatpush2.msra.mxu0 0.0
    %3065 = vmatprep.subr.mxu0 0.0
    %3066 = vmatpush2.msra.mxu0 0.0
    %3067 = vmatprep.subr.mxu0 0.0
    %3068 = vmatpush2.msra.mxu0 0.0
    %3069 = vmatprep.subr.mxu0 0.0
    %3070 = vmatpush2.msra.mxu0 0.0
    %3071 = vmatprep.subr.mxu0 0.0
    %3072 = vmatpush2.msra.mxu0 0.0
    %3073 = vmatprep.subr.mxu0 0.0
    %3074 = vmatpush2.msra.mxu0 0.0
    %3075 = vmatprep.subr.mxu0 0.0
    %3076 = vmatpush2.msra.mxu0 0.0
    %3077 = vmatprep.subr.mxu0 0.0
    %3078 = vmatpush2.msra.mxu0 0.0
    %3079 = vmatprep.subr.mxu0 0.0
    %3080 = vmatpush2.msra.mxu0 0.0
    %3081 = vmatprep.subr.mxu0 0.0
    %3082 = vmatpush2.msra.mxu0 0.0
    %3083 = vmatprep.subr.mxu0 0.0
    %3084 = vmatpush2.msra.mxu0 0.0
    %3085 = vmatprep.subr.mxu0 0.0
    %3086 = vmatpush2.msra.mxu0 0.0
    %3087 = vmatprep.subr.mxu0 0.0
    %3088 = vmatpush2.msra.mxu0 0.0
    %3089 = vmatprep.subr.mxu0 0.0
    %3090 = vmatpush2.msra.mxu0 0.0
    %3091 = vmatprep.subr.mxu0 0.0
    %3092 = vmatpush2.msra.mxu0 0.0
    %3093 = vmatprep.subr.mxu0 0.0
    %3094 = vmatpush2.msra.mxu0 0.0
    %3095 = vmatprep.mubr.f32.mxu0 0.0
    %3096 = vmatmul.mubr.f32.gmra.mxu0 %v3029
    %v3097 = vpop.f32.mrf.mxu0
    %v3098 = vadd.f32 0.0, %v3097
    %v3099 = vpop.f32.mrf.mxu0
    %v3100 = vadd.f32 0.0, %v3099
    %3101 = vdwg.mxu0
    %3102 = vmatprep.subr.mxu0 %v3001
    %3103 = vmatpush1.msra.mxu0 %v3000
    %3104 = vmatprep.subr.mxu0 %v2997
    %3105 = vmatpush1.msra.mxu0 %v2996
    %3106 = vmatprep.subr.mxu0 %v2993
    %3107 = vmatpush1.msra.mxu0 %v2992
    %3108 = vmatprep.subr.mxu0 %v2989
    %3109 = vmatpush1.msra.mxu0 %v2988
    %3110 = vmatprep.subr.mxu0 %v2985
    %3111 = vmatpush1.msra.mxu0 %v2984
    %3112 = vmatprep.subr.mxu0 %v2981
    %3113 = vmatpush1.msra.mxu0 %v2980
    %3114 = vmatprep.subr.mxu0 %v2977
    %3115 = vmatpush1.msra.mxu0 %v2976
    %3116 = vmatprep.subr.mxu0 %v2973
    %3117 = vmatpush1.msra.mxu0 %v2972
    %3118 = vmatprep.subr.mxu0 %v2969
    %3119 = vmatpush1.msra.mxu0 %v2968
    %3120 = vmatprep.subr.mxu0 %v2965
    %3121 = vmatpush1.msra.mxu0 %v2964
    %3122 = vmatprep.subr.mxu0 %v2961
    %3123 = vmatpush1.msra.mxu0 %v2960
    %3124 = vmatprep.subr.mxu0 %v2957
    %3125 = vmatpush1.msra.mxu0 %v2956
    %3126 = vmatprep.subr.mxu0 %v2953
    %3127 = vmatpush1.msra.mxu0 %v2952
    %3128 = vmatprep.subr.mxu0 %v2949
    %3129 = vmatpush1.msra.mxu0 %v2948
    %3130 = vmatprep.subr.mxu0 %v2945
    %3131 = vmatpush1.msra.mxu0 %v2944
    %3132 = vmatprep.subr.mxu0 %v2941
    %3133 = vmatpush1.msra.mxu0 %v2940
    %3134 = vmatprep.subr.mxu0 0.0
    %3135 = vmatpush2.msra.mxu0 0.0
    %3136 = vmatprep.subr.mxu0 0.0
    %3137 = vmatpush2.msra.mxu0 0.0
    %3138 = vmatprep.subr.mxu0 0.0
    %3139 = vmatpush2.msra.mxu0 0.0
    %3140 = vmatprep.subr.mxu0 0.0
    %3141 = vmatpush2.msra.mxu0 0.0
    %3142 = vmatprep.subr.mxu0 0.0
    %3143 = vmatpush2.msra.mxu0 0.0
    %3144 = vmatprep.subr.mxu0 0.0
    %3145 = vmatpush2.msra.mxu0 0.0
    %3146 = vmatprep.subr.mxu0 0.0
    %3147 = vmatpush2.msra.mxu0 0.0
    %3148 = vmatprep.subr.mxu0 0.0
    %3149 = vmatpush2.msra.mxu0 0.0
    %3150 = vmatprep.subr.mxu0 0.0
    %3151 = vmatpush2.msra.mxu0 0.0
    %3152 = vmatprep.subr.mxu0 0.0
    %3153 = vmatpush2.msra.mxu0 0.0
    %3154 = vmatprep.subr.mxu0 0.0
    %3155 = vmatpush2.msra.mxu0 0.0
    %3156 = vmatprep.subr.mxu0 0.0
    %3157 = vmatpush2.msra.mxu0 0.0
    %3158 = vmatprep.subr.mxu0 0.0
    %3159 = vmatpush2.msra.mxu0 0.0
    %3160 = vmatprep.subr.mxu0 0.0
    %3161 = vmatpush2.msra.mxu0 0.0
    %3162 = vmatprep.subr.mxu0 0.0
    %3163 = vmatpush2.msra.mxu0 0.0
    %3164 = vmatprep.subr.mxu0 0.0
    %3165 = vmatpush2.msra.mxu0 0.0
    %3166 = vmatprep.mubr.f32.mxu0 0.0
    %3167 = vmatmul.mubr.f32.gmra.mxu0 %v3029
    %v3168 = vpop.f32.mrf.mxu0
    %v3169 = vadd.f32 0.0, %v3168
    %v3170 = vpop.f32.mrf.mxu0
    %v3171 = vadd.f32 0.0, %v3170
    %3172 = vdwg.mxu0
    %v3177 = vcombine.low %v3098, %v3100
    %v3178 = vcombine.low %v3169, %v3171
    %v3180 = vunpack.c.l.s4 1966171168
    %v3181 = vunpack.c.0.s8 %v3180
    %v3182 = vlaneseq
    %v3183 = vshrl.u32 %v3182, 7
    %v3184 = vsub.s32 %v3181, %v3183
    %v3185 = vrot.slane %v3177, %v3184
    %v3187 = vunpack.c.l.s4 1966171168
    %v3188 = vunpack.c.0.s8 %v3187
    %v3189 = vlaneseq
    %v3190 = vshrl.u32 %v3189, 7
    %v3191 = vsub.s32 %v3188, %v3190
    %v3192 = vrot.slane %v3178, %v3191
    %v3193 = vcombine.low %v3185, %v3192
    %v3194 = vcombine.high %v3185, %v3192
    %v3196 = vunpack.c.l.s4 1966171168
    %v3197 = vunpack.c.0.s8 %v3196
    %v3198 = vlaneseq
    %v3199 = vshrl.u32 %v3198, 7
    %v3200 = vsub.s32 %v3197, %v3199
    %v3201 = vrot.slane %v3193, %v3200
    %v3203 = vunpack.c.l.s4 1966171168
    %v3204 = vunpack.c.0.s8 %v3203
    %v3205 = vlaneseq
    %v3206 = vshrl.u32 %v3205, 7
    %v3207 = vsub.s32 %v3204, %v3206
    %v3208 = vrot.slane %v3194, %v3207
    %v3209 = vcombine.high %v3201, %v3201
    %v3210 = vcombine.high %v3208, %v3208
    %v3215 = vadd.f32 %v2931, %v3201
    %v3216 = vadd.f32 %v2933, %v3208
    %v3217 = vadd.f32 %v2935, %v3209
    %v3218 = vadd.f32 %v2937, %v3210
    %v3219 = vxor.u32 %v3215, 2147483648
    %v3220 = vxor.u32 %v3216, 2147483648
    %v3221 = vxor.u32 %v3217, 2147483648
    %v3222 = vxor.u32 %v3218, 2147483648
    %v3223 = vmul.f32 %v3219, 1.442695
    %v3224 = vpow.pop %v3223
    %v3225 = vmul.f32 %v3220, 1.442695
    %v3226 = vpow.pop %v3225
    %v3227 = vmul.f32 %v3221, 1.442695
    %v3228 = vpow.pop %v3227
    %v3229 = vmul.f32 %v3222, 1.442695
    %v3230 = vpow.pop %v3229
    %v3231 = vadd.f32 %v3224, 1.0
    %v3232 = vadd.f32 %v3226, 1.0
    %v3233 = vadd.f32 %v3228, 1.0
    %v3234 = vadd.f32 %v3230, 1.0
    %v3235 = vrcp.pop %v3231
    %v3236 = vmul.f32 1.0, %v3235
    %v3237 = vrcp.pop %v3232
    %v3238 = vmul.f32 1.0, %v3237
    %v3239 = vrcp.pop %v3233
    %v3240 = vmul.f32 1.0, %v3239
    %v3241 = vrcp.pop %v3234
    %v3242 = vmul.f32 1.0, %v3241
    %v3247 = vrot.slane %v3215, 1
    %v3248 = vrot.slane %v3216, 1
    %v3249 = vrot.slane %v3217, 1
    %v3250 = vrot.slane %v3218, 1
    %v3255 = vxor.u32 %v3247, 2147483648
    %v3256 = vxor.u32 %v3248, 2147483648
    %v3257 = vxor.u32 %v3249, 2147483648
    %v3258 = vxor.u32 %v3250, 2147483648
    %v3259 = vmul.f32 %v3255, 1.442695
    %v3260 = vpow.pop %v3259
    %v3261 = vmul.f32 %v3256, 1.442695
    %v3262 = vpow.pop %v3261
    %v3263 = vmul.f32 %v3257, 1.442695
    %v3264 = vpow.pop %v3263
    %v3265 = vmul.f32 %v3258, 1.442695
    %v3266 = vpow.pop %v3265
    %v3267 = vadd.f32 %v3260, 1.0
    %v3268 = vadd.f32 %v3262, 1.0
    %v3269 = vadd.f32 %v3264, 1.0
    %v3270 = vadd.f32 %v3266, 1.0
    %v3271 = vrcp.pop %v3267
    %v3272 = vmul.f32 1.0, %v3271
    %v3273 = vrcp.pop %v3268
    %v3274 = vmul.f32 1.0, %v3273
    %v3275 = vrcp.pop %v3269
    %v3276 = vmul.f32 1.0, %v3275
    %v3277 = vrcp.pop %v3270
    %v3278 = vmul.f32 1.0, %v3277
    %v3279 = vrot.slane %v3215, 2
    %v3280 = vrot.slane %v3216, 2
    %v3281 = vrot.slane %v3217, 2
    %v3282 = vrot.slane %v3218, 2
    %v3287 = vtanh.pop %v3279
    %v3288 = vtanh.pop %v3280
    %v3289 = vtanh.pop %v3281
    %v3290 = vtanh.pop %v3282
    %v3291 = vrot.slane %v3215, 3
    %v3292 = vrot.slane %v3216, 3
    %v3293 = vrot.slane %v3217, 3
    %v3294 = vrot.slane %v3218, 3
    %v3299 = vxor.u32 %v3291, 2147483648
    %v3300 = vxor.u32 %v3292, 2147483648
    %v3301 = vxor.u32 %v3293, 2147483648
    %v3302 = vxor.u32 %v3294, 2147483648
    %v3303 = vmul.f32 %v3299, 1.442695
    %v3304 = vpow.pop %v3303
    %v3305 = vmul.f32 %v3300, 1.442695
    %v3306 = vpow.pop %v3305
    %v3307 = vmul.f32 %v3301, 1.442695
    %v3308 = vpow.pop %v3307
    %v3309 = vmul.f32 %v3302, 1.442695
    %v3310 = vpow.pop %v3309
    %v3311 = vadd.f32 %v3304, 1.0
    %v3312 = vadd.f32 %v3306, 1.0
    %v3313 = vadd.f32 %v3308, 1.0
    %v3314 = vadd.f32 %v3310, 1.0
    %v3315 = vrcp.pop %v3311
    %v3316 = vmul.f32 1.0, %v3315
    %v3317 = vrcp.pop %v3312
    %v3318 = vmul.f32 1.0, %v3317
    %v3319 = vrcp.pop %v3313
    %v3320 = vmul.f32 1.0, %v3319
    %v3321 = vrcp.pop %v3314
    %v3322 = vmul.f32 1.0, %v3321
    %v3323 = vmul.f32 %v3272, %v2914
    %v3324 = vmul.f32 %v3274, %v2915
    %v3325 = vmul.f32 %v3276, %v2916
    %v3326 = vmul.f32 %v3278, %v2917
    %v3327 = vmul.f32 %v3236, %v3287
    %v3328 = vmul.f32 %v3238, %v3288
    %v3329 = vmul.f32 %v3240, %v3289
    %v3330 = vmul.f32 %v3242, %v3290
    %v3331 = vadd.f32 %v3323, %v3327
    %v3332 = vadd.f32 %v3324, %v3328
    %v3333 = vadd.f32 %v3325, %v3329
    %v3334 = vadd.f32 %v3326, %v3330
    %v3335 = vtanh.pop %v3331
    %v3336 = vtanh.pop %v3332
    %v3337 = vtanh.pop %v3333
    %v3338 = vtanh.pop %v3334
    %v3339 = vmul.f32 %v3316, %v3335
    %v3340 = vmul.f32 %v3318, %v3336
    %v3341 = vmul.f32 %v3320, %v3337
    %v3342 = vmul.f32 %v3322, %v3338
    %3343 = vst.msk [vmem:[#allocation7 + $0x7] sm:$0x1] %vm423, %v3339
    %3344 = vst.msk [vmem:[#allocation7 + $0xf] sm:$0x1] %vm423, %v3340
    %3345 = vst.msk [vmem:[#allocation7 + $0x17] sm:$0x1] %vm423, %v3341
    %3346 = vst.msk [vmem:[#allocation7 + $0x1f] sm:$0x1] %vm423, %v3342
    // Predicated region
    $region18: #{tpu_custom_call.1} parent=1 // pred_check
      _
    $region19: #{tpu_custom_call.1} parent=1 // pred_check_branch
      %3348 = sbr.rel (0) target = $region21
    $region20: #{tpu_custom_call.1} parent=1 // pred_region
      %s3350 = ssub.s32 512, 512
      %3351 = vsyncadd [#allocation4], %s3350
      %s3352 = sshll.u32 [#allocation7], 4
      %s3353 = int_to_ptr.vmem [resolvable:$true] %s3352
      %3358 = dma.vmem_to_hbm [thread:$0]  %s3353, 512, %s2, [#allocation4], 128, 128, 8
    $region21: #{tpu_custom_call.1} parent=1 // pred_fallthru
      _
    // Predicated region
    $region22: #{tpu_custom_call.1} parent=1 // pred_check
      _
    $region23: #{tpu_custom_call.1} parent=1 // pred_check_branch
      %3360 = sbr.rel (0) target = $region25
    $region24: #{tpu_custom_call.1} parent=1 // pred_region
      %3361 = dma.done [#allocation4], 512
    $region25: #{tpu_custom_call.1} parent=1 // pred_fallthru
      _
    %3362 = vsyncpa [#allocation3], 1
    %3363 = vsyncpa [#allocation6], 1
    %3364 = vsyncpa [#allocation4], 1

</llo_original>
